<compile_context>
chip_gen: v6e
topology: v6e:2x2x1
jax: 0.10.0
libtpu: 0.0.40
codegen_flags: <defaults>
</compile_context>

<pallas_src>
import functools

import jax
import jax.numpy as jnp
from jax.experimental import pallas as pl
from jax.experimental.pallas import tpu as pltpu


_LN_EPS = 1e-5          # torch LayerNorm / TransformerEncoderLayer default
# approx=True routes 1/x to the EUP slot (nearly free) but softmax rows sum to
# 1 +/- ~1e-3; set False for bit-closer parity with the PyTorch reference.
_APPROX_RECIPROCAL = True


# ---------------------------------------------------------------------------
# In-kernel helpers (traced inline)
# ---------------------------------------------------------------------------
def _dot(a, b):
    """bf16 MXU matmul with f32 accumulation."""
    return jnp.dot(a.astype(jnp.bfloat16), b.astype(jnp.bfloat16),
                   preferred_element_type=jnp.float32)


def _dot_nt(a, b):
    """a @ b.T (bf16 operands, f32 accumulation) without materializing b.T."""
    return jax.lax.dot_general(
        a.astype(jnp.bfloat16), b.astype(jnp.bfloat16),
        (((1,), (1,)), ((), ())), preferred_element_type=jnp.float32)


def _layer_norm(z, gamma, beta):
    mu = jnp.mean(z, axis=-1, keepdims=True)
    d = z - mu
    var = jnp.mean(d * d, axis=-1, keepdims=True)
    return d * jax.lax.rsqrt(var + _LN_EPS) * gamma + beta


def _mha(qx, kvx, w_qkv, b_qkv, w_o, b_o, *, nheads, need_attn, self_attention):
    """Multi-head attention for one batch element.

    qx: (Lq, D) f32, kvx: (Lk, D) f32.
    w_qkv: (D, 3D) bf16 = [Wq (score scale pre-folded) | Wk | Wv] in x @ W layout.
    b_qkv: (1, 3D) f32.  w_o: (D, D) bf16.  b_o: (1, D) f32.
    Returns (out (Lq, D) f32, head-averaged attn (Lq, Lk) f32 or None).
    """
    d_model = qx.shape[-1]
    head_dim = d_model // nheads

    if self_attention:
        # Fused QKV: one MXU launch with a lane-dense 3D-wide result.
        proj = _dot(qx, w_qkv) + b_qkv
        qp = proj[:, :d_model]
        kp = proj[:, d_model:2 * d_model]
        vp = proj[:, 2 * d_model:]
    else:
        qp = _dot(qx, w_qkv[:, :d_model]) + b_qkv[:, :d_model]
        kv = _dot(kvx, w_qkv[:, d_model:]) + b_qkv[:, d_model:]
        kp, vp = kv[:, :d_model], kv[:, d_model:]

    head_outs = []
    attn_sum = (jnp.zeros((qx.shape[0], kvx.shape[0]), jnp.float32)
                if need_attn else None)

    # Static unroll over heads (the 1/sqrt(head_dim) scale is folded into Wq/bq).
    # TODO(synk): at production D keep head_dim lane-aligned (multiple of 128) or
    # move the head axis onto sublanes to avoid per-head lane-slice relayouts.
    for h in range(nheads):
        lo, hi = h * head_dim, (h + 1) * head_dim
        s = _dot_nt(qp[:, lo:hi], kp[:, lo:hi])                   # (Lq, Lk)
        s = s - jnp.max(s, axis=-1, keepdims=True)
        e = jnp.exp(s)
        p = e * pl.reciprocal(jnp.sum(e, axis=-1, keepdims=True),
                              approx=_APPROX_RECIPROCAL)
        head_outs.append(_dot(p, vp[:, lo:hi]))                   # (Lq, head_dim)
        if need_attn:
            attn_sum = attn_sum + p

    # Concatenate heads, then a single full-K output projection (replaces nheads
    # K=head_dim matmuls + a dependent add chain).
    out = _dot(jnp.concatenate(head_outs, axis=-1), w_o) + b_o
    if need_attn:
        return out, attn_sum * (1.0 / nheads)    # average_attn_weights=True
    return out, None


# ---------------------------------------------------------------------------
# Stage 1: batch-invariant learned-query preprocessing (runs exactly once)
# ---------------------------------------------------------------------------
def _query_prep_kernel(q_ref, wqkv_ref, bqkv_ref, wo_ref, bo_ref,
                       g_ref, beta_ref, q_out_ref, *, nheads):
    q0 = q_ref[0]                                            # (Q, D)
    sq, _ = _mha(q0, q0, wqkv_ref[...], bqkv_ref[...], wo_ref[...], bo_ref[...],
                 nheads=nheads, need_attn=False, self_attention=True)
    q_out_ref[0] = _layer_norm(q0 + sq, g_ref[...], beta_ref[...])   # norm_q


# ---------------------------------------------------------------------------
# Stage 2: fused BoQ block (one batch element per grid step)
# ---------------------------------------------------------------------------
def _boq_block_kernel(x_ref, q_ref,
                      enc_wqkv, enc_bqkv, enc_wo, enc_bo,
                      ffn_w1, ffn_b1, ffn_w2, ffn_b2,
                      cross_wqkv, cross_bqkv, cross_wo, cross_bo,
                      enc_ln_g, enc_ln_b, out_ln_g, out_ln_b,
                      x_out_ref, out_ref, attn_ref, *, nheads):
    x = x_ref[...]        # (N, D) f32 (batch dim squeezed by BlockSpec)
    q = q_ref[...]        # (Q, D) f32, pre-normalized queries (batch-invariant)

    # --- TransformerEncoderLayer (post-norm, ReLU, dropout=0) ----------------
    sa, _ = _mha(x, x, enc_wqkv[...], enc_bqkv[...], enc_wo[...], enc_bo[...],
                 nheads=nheads, need_attn=False, self_attention=True)
    x = _layer_norm(x + sa, enc_ln_g[0], enc_ln_b[0])                 # norm1
    # TODO(synk): for production N, tile the FFN and use a flash-style online
    # softmax for this self-attention so the working set fits v7x's 64 MiB VMEM.
    h = jnp.maximum(_dot(x, ffn_w1[...]) + ffn_b1[...], 0.0)
    ff = _dot(h, ffn_w2[...]) + ffn_b2[...]
    x = _layer_norm(x + ff, enc_ln_g[1], enc_ln_b[1])                 # norm2

    # --- cross-attention: queries attend over encoded features ---------------
    co, attn = _mha(q, x, cross_wqkv[...], cross_bqkv[...],
                    cross_wo[...], cross_bo[...],
                    nheads=nheads, need_attn=True, self_attention=False)
    out = _layer_norm(co, out_ln_g[...], out_ln_b[...])     # norm_out (no residual)

    x_out_ref[...] = x
    out_ref[...] = out
    attn_ref[...] = attn


# ---------------------------------------------------------------------------
# Wrapper
# ---------------------------------------------------------------------------
def boq_block_forward(x, params, nheads):
    B, N, D = x.shape
    Q = params["queries"].shape[1]
    d_ff = params["ffn_w1"].shape[1]

    # ---- Stage 1: hoisted query self-attention + norm_q (computed once) -----
    q_prepped = pl.pallas_call(
        functools.partial(_query_prep_kernel, nheads=nheads),
        out_shape=jax.ShapeDtypeStruct((1, Q, D), jnp.float32),
    )(params["queries"],
      params["selfq_wqkv"], params["selfq_bqkv"],
      params["selfq_wo"], params["selfq_bo"],
      params["normq_g"], params["normq_b"])

    # ---- Stage 2: fused per-batch block --------------------------------------
    def per_batch(l, d):
        # Leading batch dim squeezed out of the kernel refs.
        return pl.BlockSpec((pl.Squeezed(), l, d), lambda b: (b, 0, 0))

    def shared(shape):
        # Grid-invariant operands: constant block index -> fetched once.
        # TODO(synk): at production sizes add pipeline_mode=pl.Buffered(1) so
        # these constants are single-buffered (halves their VMEM footprint).
        return pl.BlockSpec(shape, lambda b: (0,) * len(shape))

    weight_bytes = sum(
        params[k].size * params[k].dtype.itemsize
        for k in ("enc_wqkv", "enc_bqkv", "enc_wo", "enc_bo",
                  "ffn_w1", "ffn_b1", "ffn_w2", "ffn_b2",
                  "cross_wqkv", "cross_bqkv", "cross_wo", "cross_bo",
                  "enc_ln_g", "enc_ln_b", "normo_g", "normo_b"))
    flops_per_b = (2 * N * D * 3 * D         # encoder fused QKV projection
                   + 4 * N * N * D           # encoder attention (QK^T + PV)
                   + 2 * N * D * D           # encoder output projection
                   + 4 * N * D * d_ff        # FFN
                   + 2 * Q * D * D           # cross Q projection
                   + 4 * N * D * D           # cross KV projection
                   + 4 * Q * N * D           # cross attention
                   + 2 * Q * D * D)          # cross output projection
    cost = pl.CostEstimate(
        flops=B * flops_per_b,
        transcendentals=B * nheads * (N * N + Q * N),
        bytes_accessed=weight_bytes
        + 4 * (2 * B * N * D + 2 * B * Q * D + B * Q * N),
    )

    x_enc, out, attn = pl.pallas_call(
        functools.partial(_boq_block_kernel, nheads=nheads),
        grid=(B,),
        in_specs=[
            per_batch(N, D),                                           # x
            pl.BlockSpec((pl.Squeezed(), Q, D), lambda b: (0, 0, 0)),  # prepped queries
            shared((D, 3 * D)), shared((1, 3 * D)),                    # encoder fused QKV
            shared((D, D)), shared((1, D)),                            # encoder W_o / b_o
            shared((D, d_ff)), shared((1, d_ff)),                      # FFN linear1
            shared((d_ff, D)), shared((1, D)),                         # FFN linear2
            shared((D, 3 * D)), shared((1, 3 * D)),                    # cross fused QKV
            shared((D, D)), shared((1, D)),                            # cross W_o / b_o
            shared((2, 1, D)), shared((2, 1, D)),                      # encoder LN g / b
            shared((1, D)), shared((1, D)),                            # norm_out g / b
        ],
        out_specs=(
            per_batch(N, D),          # encoded features
            per_batch(Q, D),          # BoQ output
            per_batch(Q, N),          # head-averaged cross-attention weights
        ),
        out_shape=(
            jax.ShapeDtypeStruct((B, N, D), jnp.float32),
            jax.ShapeDtypeStruct((B, Q, D), jnp.float32),
            jax.ShapeDtypeStruct((B, Q, N), jnp.float32),
        ),
        compiler_params=pltpu.CompilerParams(
            # v7x shards the batch axis across its 2 TensorCores; for small/odd B
            # add a second "parallel" axis (tiles of N or Q) to load-balance.
            dimension_semantics=("parallel",),
            # Above the 16/32 MiB scoped defaults, below v7x's 64 MiB physical.
            vmem_limit_bytes=48 * 1024 * 1024,
        ),
        cost_estimate=cost,
    )(
        x, q_prepped,
        params["enc_wqkv"], params["enc_bqkv"], params["enc_wo"], params["enc_bo"],
        params["ffn_w1"], params["ffn_b1"], params["ffn_w2"], params["ffn_b2"],
        params["cross_wqkv"], params["cross_bqkv"], params["cross_wo"], params["cross_bo"],
        params["enc_ln_g"], params["enc_ln_b"], params["normo_g"], params["normo_b"],
    )
    return x_enc, out, attn


# ---------------------------------------------------------------------------
# Parameter construction (deterministic, synthetic)
# ---------------------------------------------------------------------------
def _make_mha_params(key, d_model, nheads):
    kw, ko, kb = jax.random.split(key, 3)
    s = 0.05
    scale = (d_model // nheads) ** -0.5
    w_qkv = jax.random.normal(kw, (d_model, 3 * d_model), jnp.float32) * s
    w_o = jax.random.normal(ko, (d_model, d_model), jnp.float32) * s
    b_all = jax.random.normal(kb, (1, 4 * d_model), jnp.float32) * 0.02
    b_qkv, b_o = b_all[:, :3 * d_model], b_all[:, 3 * d_model:]
    # Fold the 1/sqrt(head_dim) attention score scale into Wq / bq so the kernel
    # never scales score tiles.
    w_qkv = w_qkv.at[:, :d_model].multiply(scale)
    b_qkv = b_qkv.at[:, :d_model].multiply(scale)
    # Matmul weights stored bf16 (MXU peak is bf16; halves weight VMEM); biases f32.
    return (w_qkv.astype(jnp.bfloat16), b_qkv,
            w_o.astype(jnp.bfloat16), b_o)


def make_boq_params(key, in_dim, num_queries, nheads):
    keys = jax.random.split(key, 6)
    d_ff = 4 * in_dim
    enc_wqkv, enc_bqkv, enc_wo, enc_bo = _make_mha_params(keys[0], in_dim, nheads)
    sq_wqkv, sq_bqkv, sq_wo, sq_bo = _make_mha_params(keys[1], in_dim, nheads)
    cr_wqkv, cr_bqkv, cr_wo, cr_bo = _make_mha_params(keys[2], in_dim, nheads)
    return {
        "queries": jax.random.normal(keys[3], (1, num_queries, in_dim), jnp.float32),
        "enc_wqkv": enc_wqkv, "enc_bqkv": enc_bqkv, "enc_wo": enc_wo, "enc_bo": enc_bo,
        "ffn_w1": (jax.random.normal(keys[4], (in_dim, d_ff), jnp.float32) * 0.05
                   ).astype(jnp.bfloat16),
        "ffn_b1": jnp.zeros((1, d_ff), jnp.float32),
        "ffn_w2": (jax.random.normal(keys[5], (d_ff, in_dim), jnp.float32) * 0.05
                   ).astype(jnp.bfloat16),
        "ffn_b2": jnp.zeros((1, in_dim), jnp.float32),
        "selfq_wqkv": sq_wqkv, "selfq_bqkv": sq_bqkv, "selfq_wo": sq_wo, "selfq_bo": sq_bo,
        "cross_wqkv": cr_wqkv, "cross_bqkv": cr_bqkv, "cross_wo": cr_wo, "cross_bo": cr_bo,
        # LayerNorms: [0]=encoder norm1, [1]=encoder norm2 (stacked); norm_q; norm_out.
        "enc_ln_g": jnp.ones((2, 1, in_dim), jnp.float32),
        "enc_ln_b": jnp.zeros((2, 1, in_dim), jnp.float32),
        "normq_g": jnp.ones((1, in_dim), jnp.float32),
        "normq_b": jnp.zeros((1, in_dim), jnp.float32),
        "normo_g": jnp.ones((1, in_dim), jnp.float32),
        "normo_b": jnp.zeros((1, in_dim), jnp.float32),
    }


# ---------------------------------------------------------------------------
# Main
# ---------------------------------------------------------------------------
if __name__ == "__main__":
    B, N, in_dim = 2, 16, 32            # batch, tokens, embedding dim (toy sizes)
    num_queries, nheads = 8, 8

    key = jax.random.PRNGKey(0)
    k_x, k_p = jax.random.split(key)
    x = jax.random.normal(k_x, (B, N, in_dim), jnp.float32)
    params = make_boq_params(k_p, in_dim, num_queries, nheads)

    fwd = jax.jit(functools.partial(boq_block_forward, nheads=nheads))
    x_enc, out, attn = fwd(x, params)
    jax.block_until_ready((x_enc, out, attn))

    assert x_enc.shape == (B, N, in_dim)
    assert out.shape == (B, num_queries, in_dim)
    assert attn.shape == (B, num_queries, N)
    assert bool(jnp.isfinite(x_enc).all()
                & jnp.isfinite(out).all()
                & jnp.isfinite(attn).all())
    print("KERNEL_OK")
</pallas_src>

<mosaic_0001>
module attributes {stable_mosaic.version = 11 : i64} {
  func.func @_query_prep_kernel(%arg0: memref<1x8x32xf32, #tpu.memory_space<vmem>>, %arg1: memref<32x96xbf16, #tpu.memory_space<vmem>>, %arg2: memref<1x96xf32, #tpu.memory_space<vmem>>, %arg3: memref<32x32xbf16, #tpu.memory_space<vmem>>, %arg4: memref<1x32xf32, #tpu.memory_space<vmem>>, %arg5: memref<1x32xf32, #tpu.memory_space<vmem>>, %arg6: memref<1x32xf32, #tpu.memory_space<vmem>>, %arg7: memref<1x8x32xf32, #tpu.memory_space<vmem>>) attributes {dimension_semantics = [], scalar_prefetch = 0 : i64, scratch_operands = 0 : i64, tpu.core_type = #tpu.core_type<tc>} {
    %c0 = arith.constant 0 : index
    %c0_0 = arith.constant 0 : index
    %c0_1 = arith.constant 0 : index
    %0 = vector.load %arg0[%c0, %c0_0, %c0_1] : memref<1x8x32xf32, #tpu.memory_space<vmem>>, vector<1x8x32xf32>
    %1 = vector.shape_cast %0 : vector<1x8x32xf32> to vector<8x32xf32>
    %c0_2 = arith.constant 0 : index
    %c0_3 = arith.constant 0 : index
    %2 = vector.load %arg1[%c0_2, %c0_3] : memref<32x96xbf16, #tpu.memory_space<vmem>>, vector<32x96xbf16>
    %c0_4 = arith.constant 0 : index
    %c0_5 = arith.constant 0 : index
    %3 = vector.load %arg2[%c0_4, %c0_5] : memref<1x96xf32, #tpu.memory_space<vmem>>, vector<1x96xf32>
    %c0_6 = arith.constant 0 : index
    %c0_7 = arith.constant 0 : index
    %4 = vector.load %arg3[%c0_6, %c0_7] : memref<32x32xbf16, #tpu.memory_space<vmem>>, vector<32x32xbf16>
    %c0_8 = arith.constant 0 : index
    %c0_9 = arith.constant 0 : index
    %5 = vector.load %arg4[%c0_8, %c0_9] : memref<1x32xf32, #tpu.memory_space<vmem>>, vector<1x32xf32>
    %6 = arith.truncf %1 : vector<8x32xf32> to vector<8x32xbf16>
    %cst = arith.constant dense<0.000000e+00> : vector<8x96xf32>
    %7 = tpu.matmul %6, %2, %cst {dimension_numbers = #tpu.dot_dimension_numbers<[1], [0], [0], [1], [0, 0, 1, 1], [], []>} : vector<8x32xbf16>, vector<32x96xbf16>, vector<8x96xf32> -> vector<8x96xf32>
    %8 = vector.broadcast %3 : vector<1x96xf32> to vector<8x96xf32>
    %9 = arith.addf %7, %8 : vector<8x96xf32>
    %10 = vector.extract_strided_slice %9 {offsets = [0, 0], sizes = [8, 32], strides = [1, 1]} : vector<8x96xf32> to vector<8x32xf32>
    %11 = vector.extract_strided_slice %9 {offsets = [0, 32], sizes = [8, 32], strides = [1, 1]} : vector<8x96xf32> to vector<8x32xf32>
    %12 = vector.extract_strided_slice %9 {offsets = [0, 64], sizes = [8, 32], strides = [1, 1]} : vector<8x96xf32> to vector<8x32xf32>
    %13 = vector.extract_strided_slice %10 {offsets = [0, 0], sizes = [8, 4], strides = [1, 1]} : vector<8x32xf32> to vector<8x4xf32>
    %14 = vector.extract_strided_slice %11 {offsets = [0, 0], sizes = [8, 4], strides = [1, 1]} : vector<8x32xf32> to vector<8x4xf32>
    %15 = arith.truncf %13 : vector<8x4xf32> to vector<8x4xbf16>
    %16 = arith.truncf %14 : vector<8x4xf32> to vector<8x4xbf16>
    %cst_10 = arith.constant dense<0.000000e+00> : vector<8x8xf32>
    %17 = tpu.matmul %15, %16, %cst_10 {dimension_numbers = #tpu.dot_dimension_numbers<[1], [1], [0], [0], [0, 0, 1, 0], [], []>} : vector<8x4xbf16>, vector<8x4xbf16>, vector<8x8xf32> -> vector<8x8xf32>
    %cst_11 = arith.constant dense<0xFF800000> : vector<8xf32>
    %18 = vector.multi_reduction <maximumf>, %17, %cst_11 [1] : vector<8x8xf32> to vector<8xf32>
    %19 = vector.shape_cast %18 : vector<8xf32> to vector<8x1xf32>
    %20 = vector.broadcast %19 : vector<8x1xf32> to vector<8x8xf32>
    %21 = arith.subf %17, %20 : vector<8x8xf32>
    %22 = math.exp %21 : vector<8x8xf32>
    %cst_12 = arith.constant dense<0.000000e+00> : vector<8xf32>
    %23 = vector.multi_reduction <add>, %22, %cst_12 [1] : vector<8x8xf32> to vector<8xf32>
    %24 = vector.shape_cast %23 : vector<8xf32> to vector<8x1xf32>
    %25 = tpu.reciprocal %24 {approx = true} : vector<8x1xf32> -> vector<8x1xf32>
    %26 = vector.broadcast %25 : vector<8x1xf32> to vector<8x8xf32>
    %27 = arith.mulf %22, %26 : vector<8x8xf32>
    %28 = vector.extract_strided_slice %12 {offsets = [0, 0], sizes = [8, 4], strides = [1, 1]} : vector<8x32xf32> to vector<8x4xf32>
    %29 = arith.truncf %27 : vector<8x8xf32> to vector<8x8xbf16>
    %30 = arith.truncf %28 : vector<8x4xf32> to vector<8x4xbf16>
    %cst_13 = arith.constant dense<0.000000e+00> : vector<8x4xf32>
    %31 = tpu.matmul %29, %30, %cst_13 {dimension_numbers = #tpu.dot_dimension_numbers<[1], [0], [0], [1], [0, 0, 1, 1], [], []>} : vector<8x8xbf16>, vector<8x4xbf16>, vector<8x4xf32> -> vector<8x4xf32>
    %32 = vector.extract_strided_slice %10 {offsets = [0, 4], sizes = [8, 4], strides = [1, 1]} : vector<8x32xf32> to vector<8x4xf32>
    %33 = vector.extract_strided_slice %11 {offsets = [0, 4], sizes = [8, 4], strides = [1, 1]} : vector<8x32xf32> to vector<8x4xf32>
    %34 = arith.truncf %32 : vector<8x4xf32> to vector<8x4xbf16>
    %35 = arith.truncf %33 : vector<8x4xf32> to vector<8x4xbf16>
    %cst_14 = arith.constant dense<0.000000e+00> : vector<8x8xf32>
    %36 = tpu.matmul %34, %35, %cst_14 {dimension_numbers = #tpu.dot_dimension_numbers<[1], [1], [0], [0], [0, 0, 1, 0], [], []>} : vector<8x4xbf16>, vector<8x4xbf16>, vector<8x8xf32> -> vector<8x8xf32>
    %cst_15 = arith.constant dense<0xFF800000> : vector<8xf32>
    %37 = vector.multi_reduction <maximumf>, %36, %cst_15 [1] : vector<8x8xf32> to vector<8xf32>
    %38 = vector.shape_cast %37 : vector<8xf32> to vector<8x1xf32>
    %39 = vector.broadcast %38 : vector<8x1xf32> to vector<8x8xf32>
    %40 = arith.subf %36, %39 : vector<8x8xf32>
    %41 = math.exp %40 : vector<8x8xf32>
    %cst_16 = arith.constant dense<0.000000e+00> : vector<8xf32>
    %42 = vector.multi_reduction <add>, %41, %cst_16 [1] : vector<8x8xf32> to vector<8xf32>
    %43 = vector.shape_cast %42 : vector<8xf32> to vector<8x1xf32>
    %44 = tpu.reciprocal %43 {approx = true} : vector<8x1xf32> -> vector<8x1xf32>
    %45 = vector.broadcast %44 : vector<8x1xf32> to vector<8x8xf32>
    %46 = arith.mulf %41, %45 : vector<8x8xf32>
    %47 = vector.extract_strided_slice %12 {offsets = [0, 4], sizes = [8, 4], strides = [1, 1]} : vector<8x32xf32> to vector<8x4xf32>
    %48 = arith.truncf %46 : vector<8x8xf32> to vector<8x8xbf16>
    %49 = arith.truncf %47 : vector<8x4xf32> to vector<8x4xbf16>
    %cst_17 = arith.constant dense<0.000000e+00> : vector<8x4xf32>
    %50 = tpu.matmul %48, %49, %cst_17 {dimension_numbers = #tpu.dot_dimension_numbers<[1], [0], [0], [1], [0, 0, 1, 1], [], []>} : vector<8x8xbf16>, vector<8x4xbf16>, vector<8x4xf32> -> vector<8x4xf32>
    %51 = vector.extract_strided_slice %10 {offsets = [0, 8], sizes = [8, 4], strides = [1, 1]} : vector<8x32xf32> to vector<8x4xf32>
    %52 = vector.extract_strided_slice %11 {offsets = [0, 8], sizes = [8, 4], strides = [1, 1]} : vector<8x32xf32> to vector<8x4xf32>
    %53 = arith.truncf %51 : vector<8x4xf32> to vector<8x4xbf16>
    %54 = arith.truncf %52 : vector<8x4xf32> to vector<8x4xbf16>
    %cst_18 = arith.constant dense<0.000000e+00> : vector<8x8xf32>
    %55 = tpu.matmul %53, %54, %cst_18 {dimension_numbers = #tpu.dot_dimension_numbers<[1], [1], [0], [0], [0, 0, 1, 0], [], []>} : vector<8x4xbf16>, vector<8x4xbf16>, vector<8x8xf32> -> vector<8x8xf32>
    %cst_19 = arith.constant dense<0xFF800000> : vector<8xf32>
    %56 = vector.multi_reduction <maximumf>, %55, %cst_19 [1] : vector<8x8xf32> to vector<8xf32>
    %57 = vector.shape_cast %56 : vector<8xf32> to vector<8x1xf32>
    %58 = vector.broadcast %57 : vector<8x1xf32> to vector<8x8xf32>
    %59 = arith.subf %55, %58 : vector<8x8xf32>
    %60 = math.exp %59 : vector<8x8xf32>
    %cst_20 = arith.constant dense<0.000000e+00> : vector<8xf32>
    %61 = vector.multi_reduction <add>, %60, %cst_20 [1] : vector<8x8xf32> to vector<8xf32>
    %62 = vector.shape_cast %61 : vector<8xf32> to vector<8x1xf32>
    %63 = tpu.reciprocal %62 {approx = true} : vector<8x1xf32> -> vector<8x1xf32>
    %64 = vector.broadcast %63 : vector<8x1xf32> to vector<8x8xf32>
    %65 = arith.mulf %60, %64 : vector<8x8xf32>
    %66 = vector.extract_strided_slice %12 {offsets = [0, 8], sizes = [8, 4], strides = [1, 1]} : vector<8x32xf32> to vector<8x4xf32>
    %67 = arith.truncf %65 : vector<8x8xf32> to vector<8x8xbf16>
    %68 = arith.truncf %66 : vector<8x4xf32> to vector<8x4xbf16>
    %cst_21 = arith.constant dense<0.000000e+00> : vector<8x4xf32>
    %69 = tpu.matmul %67, %68, %cst_21 {dimension_numbers = #tpu.dot_dimension_numbers<[1], [0], [0], [1], [0, 0, 1, 1], [], []>} : vector<8x8xbf16>, vector<8x4xbf16>, vector<8x4xf32> -> vector<8x4xf32>
    %70 = vector.extract_strided_slice %10 {offsets = [0, 12], sizes = [8, 4], strides = [1, 1]} : vector<8x32xf32> to vector<8x4xf32>
    %71 = vector.extract_strided_slice %11 {offsets = [0, 12], sizes = [8, 4], strides = [1, 1]} : vector<8x32xf32> to vector<8x4xf32>
    %72 = arith.truncf %70 : vector<8x4xf32> to vector<8x4xbf16>
    %73 = arith.truncf %71 : vector<8x4xf32> to vector<8x4xbf16>
    %cst_22 = arith.constant dense<0.000000e+00> : vector<8x8xf32>
    %74 = tpu.matmul %72, %73, %cst_22 {dimension_numbers = #tpu.dot_dimension_numbers<[1], [1], [0], [0], [0, 0, 1, 0], [], []>} : vector<8x4xbf16>, vector<8x4xbf16>, vector<8x8xf32> -> vector<8x8xf32>
    %cst_23 = arith.constant dense<0xFF800000> : vector<8xf32>
    %75 = vector.multi_reduction <maximumf>, %74, %cst_23 [1] : vector<8x8xf32> to vector<8xf32>
    %76 = vector.shape_cast %75 : vector<8xf32> to vector<8x1xf32>
    %77 = vector.broadcast %76 : vector<8x1xf32> to vector<8x8xf32>
    %78 = arith.subf %74, %77 : vector<8x8xf32>
    %79 = math.exp %78 : vector<8x8xf32>
    %cst_24 = arith.constant dense<0.000000e+00> : vector<8xf32>
    %80 = vector.multi_reduction <add>, %79, %cst_24 [1] : vector<8x8xf32> to vector<8xf32>
    %81 = vector.shape_cast %80 : vector<8xf32> to vector<8x1xf32>
    %82 = tpu.reciprocal %81 {approx = true} : vector<8x1xf32> -> vector<8x1xf32>
    %83 = vector.broadcast %82 : vector<8x1xf32> to vector<8x8xf32>
    %84 = arith.mulf %79, %83 : vector<8x8xf32>
    %85 = vector.extract_strided_slice %12 {offsets = [0, 12], sizes = [8, 4], strides = [1, 1]} : vector<8x32xf32> to vector<8x4xf32>
    %86 = arith.truncf %84 : vector<8x8xf32> to vector<8x8xbf16>
    %87 = arith.truncf %85 : vector<8x4xf32> to vector<8x4xbf16>
    %cst_25 = arith.constant dense<0.000000e+00> : vector<8x4xf32>
    %88 = tpu.matmul %86, %87, %cst_25 {dimension_numbers = #tpu.dot_dimension_numbers<[1], [0], [0], [1], [0, 0, 1, 1], [], []>} : vector<8x8xbf16>, vector<8x4xbf16>, vector<8x4xf32> -> vector<8x4xf32>
    %89 = vector.extract_strided_slice %10 {offsets = [0, 16], sizes = [8, 4], strides = [1, 1]} : vector<8x32xf32> to vector<8x4xf32>
    %90 = vector.extract_strided_slice %11 {offsets = [0, 16], sizes = [8, 4], strides = [1, 1]} : vector<8x32xf32> to vector<8x4xf32>
    %91 = arith.truncf %89 : vector<8x4xf32> to vector<8x4xbf16>
    %92 = arith.truncf %90 : vector<8x4xf32> to vector<8x4xbf16>
    %cst_26 = arith.constant dense<0.000000e+00> : vector<8x8xf32>
    %93 = tpu.matmul %91, %92, %cst_26 {dimension_numbers = #tpu.dot_dimension_numbers<[1], [1], [0], [0], [0, 0, 1, 0], [], []>} : vector<8x4xbf16>, vector<8x4xbf16>, vector<8x8xf32> -> vector<8x8xf32>
    %cst_27 = arith.constant dense<0xFF800000> : vector<8xf32>
    %94 = vector.multi_reduction <maximumf>, %93, %cst_27 [1] : vector<8x8xf32> to vector<8xf32>
    %95 = vector.shape_cast %94 : vector<8xf32> to vector<8x1xf32>
    %96 = vector.broadcast %95 : vector<8x1xf32> to vector<8x8xf32>
    %97 = arith.subf %93, %96 : vector<8x8xf32>
    %98 = math.exp %97 : vector<8x8xf32>
    %cst_28 = arith.constant dense<0.000000e+00> : vector<8xf32>
    %99 = vector.multi_reduction <add>, %98, %cst_28 [1] : vector<8x8xf32> to vector<8xf32>
    %100 = vector.shape_cast %99 : vector<8xf32> to vector<8x1xf32>
    %101 = tpu.reciprocal %100 {approx = true} : vector<8x1xf32> -> vector<8x1xf32>
    %102 = vector.broadcast %101 : vector<8x1xf32> to vector<8x8xf32>
    %103 = arith.mulf %98, %102 : vector<8x8xf32>
    %104 = vector.extract_strided_slice %12 {offsets = [0, 16], sizes = [8, 4], strides = [1, 1]} : vector<8x32xf32> to vector<8x4xf32>
    %105 = arith.truncf %103 : vector<8x8xf32> to vector<8x8xbf16>
    %106 = arith.truncf %104 : vector<8x4xf32> to vector<8x4xbf16>
    %cst_29 = arith.constant dense<0.000000e+00> : vector<8x4xf32>
    %107 = tpu.matmul %105, %106, %cst_29 {dimension_numbers = #tpu.dot_dimension_numbers<[1], [0], [0], [1], [0, 0, 1, 1], [], []>} : vector<8x8xbf16>, vector<8x4xbf16>, vector<8x4xf32> -> vector<8x4xf32>
    %108 = vector.extract_strided_slice %10 {offsets = [0, 20], sizes = [8, 4], strides = [1, 1]} : vector<8x32xf32> to vector<8x4xf32>
    %109 = vector.extract_strided_slice %11 {offsets = [0, 20], sizes = [8, 4], strides = [1, 1]} : vector<8x32xf32> to vector<8x4xf32>
    %110 = arith.truncf %108 : vector<8x4xf32> to vector<8x4xbf16>
    %111 = arith.truncf %109 : vector<8x4xf32> to vector<8x4xbf16>
    %cst_30 = arith.constant dense<0.000000e+00> : vector<8x8xf32>
    %112 = tpu.matmul %110, %111, %cst_30 {dimension_numbers = #tpu.dot_dimension_numbers<[1], [1], [0], [0], [0, 0, 1, 0], [], []>} : vector<8x4xbf16>, vector<8x4xbf16>, vector<8x8xf32> -> vector<8x8xf32>
    %cst_31 = arith.constant dense<0xFF800000> : vector<8xf32>
    %113 = vector.multi_reduction <maximumf>, %112, %cst_31 [1] : vector<8x8xf32> to vector<8xf32>
    %114 = vector.shape_cast %113 : vector<8xf32> to vector<8x1xf32>
    %115 = vector.broadcast %114 : vector<8x1xf32> to vector<8x8xf32>
    %116 = arith.subf %112, %115 : vector<8x8xf32>
    %117 = math.exp %116 : vector<8x8xf32>
    %cst_32 = arith.constant dense<0.000000e+00> : vector<8xf32>
    %118 = vector.multi_reduction <add>, %117, %cst_32 [1] : vector<8x8xf32> to vector<8xf32>
    %119 = vector.shape_cast %118 : vector<8xf32> to vector<8x1xf32>
    %120 = tpu.reciprocal %119 {approx = true} : vector<8x1xf32> -> vector<8x1xf32>
    %121 = vector.broadcast %120 : vector<8x1xf32> to vector<8x8xf32>
    %122 = arith.mulf %117, %121 : vector<8x8xf32>
    %123 = vector.extract_strided_slice %12 {offsets = [0, 20], sizes = [8, 4], strides = [1, 1]} : vector<8x32xf32> to vector<8x4xf32>
    %124 = arith.truncf %122 : vector<8x8xf32> to vector<8x8xbf16>
    %125 = arith.truncf %123 : vector<8x4xf32> to vector<8x4xbf16>
    %cst_33 = arith.constant dense<0.000000e+00> : vector<8x4xf32>
    %126 = tpu.matmul %124, %125, %cst_33 {dimension_numbers = #tpu.dot_dimension_numbers<[1], [0], [0], [1], [0, 0, 1, 1], [], []>} : vector<8x8xbf16>, vector<8x4xbf16>, vector<8x4xf32> -> vector<8x4xf32>
    %127 = vector.extract_strided_slice %10 {offsets = [0, 24], sizes = [8, 4], strides = [1, 1]} : vector<8x32xf32> to vector<8x4xf32>
    %128 = vector.extract_strided_slice %11 {offsets = [0, 24], sizes = [8, 4], strides = [1, 1]} : vector<8x32xf32> to vector<8x4xf32>
    %129 = arith.truncf %127 : vector<8x4xf32> to vector<8x4xbf16>
    %130 = arith.truncf %128 : vector<8x4xf32> to vector<8x4xbf16>
    %cst_34 = arith.constant dense<0.000000e+00> : vector<8x8xf32>
    %131 = tpu.matmul %129, %130, %cst_34 {dimension_numbers = #tpu.dot_dimension_numbers<[1], [1], [0], [0], [0, 0, 1, 0], [], []>} : vector<8x4xbf16>, vector<8x4xbf16>, vector<8x8xf32> -> vector<8x8xf32>
    %cst_35 = arith.constant dense<0xFF800000> : vector<8xf32>
    %132 = vector.multi_reduction <maximumf>, %131, %cst_35 [1] : vector<8x8xf32> to vector<8xf32>
    %133 = vector.shape_cast %132 : vector<8xf32> to vector<8x1xf32>
    %134 = vector.broadcast %133 : vector<8x1xf32> to vector<8x8xf32>
    %135 = arith.subf %131, %134 : vector<8x8xf32>
    %136 = math.exp %135 : vector<8x8xf32>
    %cst_36 = arith.constant dense<0.000000e+00> : vector<8xf32>
    %137 = vector.multi_reduction <add>, %136, %cst_36 [1] : vector<8x8xf32> to vector<8xf32>
    %138 = vector.shape_cast %137 : vector<8xf32> to vector<8x1xf32>
    %139 = tpu.reciprocal %138 {approx = true} : vector<8x1xf32> -> vector<8x1xf32>
    %140 = vector.broadcast %139 : vector<8x1xf32> to vector<8x8xf32>
    %141 = arith.mulf %136, %140 : vector<8x8xf32>
    %142 = vector.extract_strided_slice %12 {offsets = [0, 24], sizes = [8, 4], strides = [1, 1]} : vector<8x32xf32> to vector<8x4xf32>
    %143 = arith.truncf %141 : vector<8x8xf32> to vector<8x8xbf16>
    %144 = arith.truncf %142 : vector<8x4xf32> to vector<8x4xbf16>
    %cst_37 = arith.constant dense<0.000000e+00> : vector<8x4xf32>
    %145 = tpu.matmul %143, %144, %cst_37 {dimension_numbers = #tpu.dot_dimension_numbers<[1], [0], [0], [1], [0, 0, 1, 1], [], []>} : vector<8x8xbf16>, vector<8x4xbf16>, vector<8x4xf32> -> vector<8x4xf32>
    %146 = vector.extract_strided_slice %10 {offsets = [0, 28], sizes = [8, 4], strides = [1, 1]} : vector<8x32xf32> to vector<8x4xf32>
    %147 = vector.extract_strided_slice %11 {offsets = [0, 28], sizes = [8, 4], strides = [1, 1]} : vector<8x32xf32> to vector<8x4xf32>
    %148 = arith.truncf %146 : vector<8x4xf32> to vector<8x4xbf16>
    %149 = arith.truncf %147 : vector<8x4xf32> to vector<8x4xbf16>
    %cst_38 = arith.constant dense<0.000000e+00> : vector<8x8xf32>
    %150 = tpu.matmul %148, %149, %cst_38 {dimension_numbers = #tpu.dot_dimension_numbers<[1], [1], [0], [0], [0, 0, 1, 0], [], []>} : vector<8x4xbf16>, vector<8x4xbf16>, vector<8x8xf32> -> vector<8x8xf32>
    %cst_39 = arith.constant dense<0xFF800000> : vector<8xf32>
    %151 = vector.multi_reduction <maximumf>, %150, %cst_39 [1] : vector<8x8xf32> to vector<8xf32>
    %152 = vector.shape_cast %151 : vector<8xf32> to vector<8x1xf32>
    %153 = vector.broadcast %152 : vector<8x1xf32> to vector<8x8xf32>
    %154 = arith.subf %150, %153 : vector<8x8xf32>
    %155 = math.exp %154 : vector<8x8xf32>
    %cst_40 = arith.constant dense<0.000000e+00> : vector<8xf32>
    %156 = vector.multi_reduction <add>, %155, %cst_40 [1] : vector<8x8xf32> to vector<8xf32>
    %157 = vector.shape_cast %156 : vector<8xf32> to vector<8x1xf32>
    %158 = tpu.reciprocal %157 {approx = true} : vector<8x1xf32> -> vector<8x1xf32>
    %159 = vector.broadcast %158 : vector<8x1xf32> to vector<8x8xf32>
    %160 = arith.mulf %155, %159 : vector<8x8xf32>
    %161 = vector.extract_strided_slice %12 {offsets = [0, 28], sizes = [8, 4], strides = [1, 1]} : vector<8x32xf32> to vector<8x4xf32>
    %162 = arith.truncf %160 : vector<8x8xf32> to vector<8x8xbf16>
    %163 = arith.truncf %161 : vector<8x4xf32> to vector<8x4xbf16>
    %cst_41 = arith.constant dense<0.000000e+00> : vector<8x4xf32>
    %164 = tpu.matmul %162, %163, %cst_41 {dimension_numbers = #tpu.dot_dimension_numbers<[1], [0], [0], [1], [0, 0, 1, 1], [], []>} : vector<8x8xbf16>, vector<8x4xbf16>, vector<8x4xf32> -> vector<8x4xf32>
    %165 = tpu.concatenate %31, %50, %69, %88, %107, %126, %145, %164 in 1 : vector<8x4xf32>, vector<8x4xf32>, vector<8x4xf32>, vector<8x4xf32>, vector<8x4xf32>, vector<8x4xf32>, vector<8x4xf32>, vector<8x4xf32> -> vector<8x32xf32>
    %166 = arith.truncf %165 : vector<8x32xf32> to vector<8x32xbf16>
    %cst_42 = arith.constant dense<0.000000e+00> : vector<8x32xf32>
    %167 = tpu.matmul %166, %4, %cst_42 {dimension_numbers = #tpu.dot_dimension_numbers<[1], [0], [0], [1], [0, 0, 1, 1], [], []>} : vector<8x32xbf16>, vector<32x32xbf16>, vector<8x32xf32> -> vector<8x32xf32>
    %168 = vector.broadcast %5 : vector<1x32xf32> to vector<8x32xf32>
    %169 = arith.addf %167, %168 : vector<8x32xf32>
    %170 = arith.addf %1, %169 : vector<8x32xf32>
    %c0_43 = arith.constant 0 : index
    %c0_44 = arith.constant 0 : index
    %171 = vector.load %arg5[%c0_43, %c0_44] : memref<1x32xf32, #tpu.memory_space<vmem>>, vector<1x32xf32>
    %c0_45 = arith.constant 0 : index
    %c0_46 = arith.constant 0 : index
    %172 = vector.load %arg6[%c0_45, %c0_46] : memref<1x32xf32, #tpu.memory_space<vmem>>, vector<1x32xf32>
    %cst_47 = arith.constant dense<0.000000e+00> : vector<8xf32>
    %173 = vector.multi_reduction <add>, %170, %cst_47 [1] : vector<8x32xf32> to vector<8xf32>
    %174 = vector.shape_cast %173 : vector<8xf32> to vector<8x1xf32>
    %cst_48 = arith.constant 3.200000e+01 : f32
    %175 = vector.broadcast %cst_48 : f32 to vector<8x1xf32>
    %176 = arith.divf %174, %175 : vector<8x1xf32>
    %177 = vector.broadcast %176 : vector<8x1xf32> to vector<8x32xf32>
    %178 = arith.subf %170, %177 : vector<8x32xf32>
    %179 = arith.mulf %178, %178 : vector<8x32xf32>
    %cst_49 = arith.constant dense<0.000000e+00> : vector<8xf32>
    %180 = vector.multi_reduction <add>, %179, %cst_49 [1] : vector<8x32xf32> to vector<8xf32>
    %181 = vector.shape_cast %180 : vector<8xf32> to vector<8x1xf32>
    %cst_50 = arith.constant 3.200000e+01 : f32
    %182 = vector.broadcast %cst_50 : f32 to vector<8x1xf32>
    %183 = arith.divf %181, %182 : vector<8x1xf32>
    %cst_51 = arith.constant 9.99999974E-6 : f32
    %184 = vector.broadcast %cst_51 : f32 to vector<8x1xf32>
    %185 = arith.addf %183, %184 : vector<8x1xf32>
    %186 = math.rsqrt %185 : vector<8x1xf32>
    %187 = vector.broadcast %186 : vector<8x1xf32> to vector<8x32xf32>
    %188 = arith.mulf %178, %187 : vector<8x32xf32>
    %189 = vector.broadcast %171 : vector<1x32xf32> to vector<8x32xf32>
    %190 = arith.mulf %188, %189 : vector<8x32xf32>
    %191 = vector.broadcast %172 : vector<1x32xf32> to vector<8x32xf32>
    %192 = arith.addf %190, %191 : vector<8x32xf32>
    %c0_52 = arith.constant 0 : index
    %c0_53 = arith.constant 0 : index
    %c0_54 = arith.constant 0 : index
    %193 = vector.load %arg7[%c0_52, %c0_53, %c0_54] : memref<1x8x32xf32, #tpu.memory_space<vmem>>, vector<1x8x32xf32>
    %194 = vector.shape_cast %193 : vector<1x8x32xf32> to vector<8x32xf32>
    %195 = vector.shape_cast %192 : vector<8x32xf32> to vector<1x8x32xf32>
    tpu.vector_store %arg7[%c0_52, %c0_53, %c0_54], %195 {strides = array<i32>} : memref<1x8x32xf32, #tpu.memory_space<vmem>>, vector<1x8x32xf32>,
    return
  }
}

module attributes {stable_mosaic.version = 11 : i64} {
  func.func @_boq_block_kernel(%arg0: i32, %arg1: memref<1x16x32xf32, #tpu.memory_space<vmem>>, %arg2: memref<1x8x32xf32, #tpu.memory_space<vmem>>, %arg3: memref<32x96xbf16, #tpu.memory_space<vmem>>, %arg4: memref<1x96xf32, #tpu.memory_space<vmem>>, %arg5: memref<32x32xbf16, #tpu.memory_space<vmem>>, %arg6: memref<1x32xf32, #tpu.memory_space<vmem>>, %arg7: memref<32x128xbf16, #tpu.memory_space<vmem>>, %arg8: memref<1x128xf32, #tpu.memory_space<vmem>>, %arg9: memref<128x32xbf16, #tpu.memory_space<vmem>>, %arg10: memref<1x32xf32, #tpu.memory_space<vmem>>, %arg11: memref<32x96xbf16, #tpu.memory_space<vmem>>, %arg12: memref<1x96xf32, #tpu.memory_space<vmem>>, %arg13: memref<32x32xbf16, #tpu.memory_space<vmem>>, %arg14: memref<1x32xf32, #tpu.memory_space<vmem>>, %arg15: memref<2x1x32xf32, #tpu.memory_space<vmem>>, %arg16: memref<2x1x32xf32, #tpu.memory_space<vmem>>, %arg17: memref<1x32xf32, #tpu.memory_space<vmem>>, %arg18: memref<1x32xf32, #tpu.memory_space<vmem>>, %arg19: memref<1x16x32xf32, #tpu.memory_space<vmem>>, %arg20: memref<1x8x32xf32, #tpu.memory_space<vmem>>, %arg21: memref<1x8x16xf32, #tpu.memory_space<vmem>>) attributes {dimension_semantics = [#tpu.dimension_semantics<parallel>], iteration_bounds = array<i64: 2>, scalar_prefetch = 0 : i64, scratch_operands = 0 : i64, tpu.core_type = #tpu.core_type<tc>, window_params = [{transform_indices = @transform_0, window_bounds = array<i64: 1, 16, 32>}, {pipeline_mode = #tpu.pipeline_mode<synchronous>, transform_indices = @transform_1, window_bounds = array<i64: 1, 8, 32>}, {pipeline_mode = #tpu.pipeline_mode<synchronous>, transform_indices = @transform_2, window_bounds = array<i64: 32, 96>}, {pipeline_mode = #tpu.pipeline_mode<synchronous>, transform_indices = @transform_3, window_bounds = array<i64: 1, 96>}, {pipeline_mode = #tpu.pipeline_mode<synchronous>, transform_indices = @transform_4, window_bounds = array<i64: 32, 32>}, {pipeline_mode = #tpu.pipeline_mode<synchronous>, transform_indices = @transform_5, window_bounds = array<i64: 1, 32>}, {pipeline_mode = #tpu.pipeline_mode<synchronous>, transform_indices = @transform_6, window_bounds = array<i64: 32, 128>}, {pipeline_mode = #tpu.pipeline_mode<synchronous>, transform_indices = @transform_7, window_bounds = array<i64: 1, 128>}, {pipeline_mode = #tpu.pipeline_mode<synchronous>, transform_indices = @transform_8, window_bounds = array<i64: 128, 32>}, {pipeline_mode = #tpu.pipeline_mode<synchronous>, transform_indices = @transform_9, window_bounds = array<i64: 1, 32>}, {pipeline_mode = #tpu.pipeline_mode<synchronous>, transform_indices = @transform_10, window_bounds = array<i64: 32, 96>}, {pipeline_mode = #tpu.pipeline_mode<synchronous>, transform_indices = @transform_11, window_bounds = array<i64: 1, 96>}, {pipeline_mode = #tpu.pipeline_mode<synchronous>, transform_indices = @transform_12, window_bounds = array<i64: 32, 32>}, {pipeline_mode = #tpu.pipeline_mode<synchronous>, transform_indices = @transform_13, window_bounds = array<i64: 1, 32>}, {pipeline_mode = #tpu.pipeline_mode<synchronous>, transform_indices = @transform_14, window_bounds = array<i64: 2, 1, 32>}, {pipeline_mode = #tpu.pipeline_mode<synchronous>, transform_indices = @transform_15, window_bounds = array<i64: 2, 1, 32>}, {pipeline_mode = #tpu.pipeline_mode<synchronous>, transform_indices = @transform_16, window_bounds = array<i64: 1, 32>}, {pipeline_mode = #tpu.pipeline_mode<synchronous>, transform_indices = @transform_17, window_bounds = array<i64: 1, 32>}, {transform_indices = @transform_18, window_bounds = array<i64: 1, 16, 32>}, {transform_indices = @transform_19, window_bounds = array<i64: 1, 8, 32>}, {transform_indices = @transform_20, window_bounds = array<i64: 1, 8, 16>}]} {
    %c0 = arith.constant 0 : index
    %c0_0 = arith.constant 0 : index
    %c0_1 = arith.constant 0 : index
    %0 = vector.load %arg1[%c0, %c0_0, %c0_1] : memref<1x16x32xf32, #tpu.memory_space<vmem>>, vector<1x16x32xf32>
    %1 = vector.shape_cast %0 : vector<1x16x32xf32> to vector<16x32xf32>
    %c0_2 = arith.constant 0 : index
    %c0_3 = arith.constant 0 : index
    %c0_4 = arith.constant 0 : index
    %2 = vector.load %arg2[%c0_2, %c0_3, %c0_4] : memref<1x8x32xf32, #tpu.memory_space<vmem>>, vector<1x8x32xf32>
    %3 = vector.shape_cast %2 : vector<1x8x32xf32> to vector<8x32xf32>
    %c0_5 = arith.constant 0 : index
    %c0_6 = arith.constant 0 : index
    %4 = vector.load %arg3[%c0_5, %c0_6] : memref<32x96xbf16, #tpu.memory_space<vmem>>, vector<32x96xbf16>
    %c0_7 = arith.constant 0 : index
    %c0_8 = arith.constant 0 : index
    %5 = vector.load %arg4[%c0_7, %c0_8] : memref<1x96xf32, #tpu.memory_space<vmem>>, vector<1x96xf32>
    %c0_9 = arith.constant 0 : index
    %c0_10 = arith.constant 0 : index
    %6 = vector.load %arg5[%c0_9, %c0_10] : memref<32x32xbf16, #tpu.memory_space<vmem>>, vector<32x32xbf16>
    %c0_11 = arith.constant 0 : index
    %c0_12 = arith.constant 0 : index
    %7 = vector.load %arg6[%c0_11, %c0_12] : memref<1x32xf32, #tpu.memory_space<vmem>>, vector<1x32xf32>
    %8 = arith.truncf %1 : vector<16x32xf32> to vector<16x32xbf16>
    %cst = arith.constant dense<0.000000e+00> : vector<16x96xf32>
    %9 = tpu.matmul %8, %4, %cst {dimension_numbers = #tpu.dot_dimension_numbers<[1], [0], [0], [1], [0, 0, 1, 1], [], []>} : vector<16x32xbf16>, vector<32x96xbf16>, vector<16x96xf32> -> vector<16x96xf32>
    %10 = vector.broadcast %5 : vector<1x96xf32> to vector<16x96xf32>
    %11 = arith.addf %9, %10 : vector<16x96xf32>
    %12 = vector.extract_strided_slice %11 {offsets = [0, 0], sizes = [16, 32], strides = [1, 1]} : vector<16x96xf32> to vector<16x32xf32>
    %13 = vector.extract_strided_slice %11 {offsets = [0, 32], sizes = [16, 32], strides = [1, 1]} : vector<16x96xf32> to vector<16x32xf32>
    %14 = vector.extract_strided_slice %11 {offsets = [0, 64], sizes = [16, 32], strides = [1, 1]} : vector<16x96xf32> to vector<16x32xf32>
    %15 = vector.extract_strided_slice %12 {offsets = [0, 0], sizes = [16, 4], strides = [1, 1]} : vector<16x32xf32> to vector<16x4xf32>
    %16 = vector.extract_strided_slice %13 {offsets = [0, 0], sizes = [16, 4], strides = [1, 1]} : vector<16x32xf32> to vector<16x4xf32>
    %17 = arith.truncf %15 : vector<16x4xf32> to vector<16x4xbf16>
    %18 = arith.truncf %16 : vector<16x4xf32> to vector<16x4xbf16>
    %cst_13 = arith.constant dense<0.000000e+00> : vector<16x16xf32>
    %19 = tpu.matmul %17, %18, %cst_13 {dimension_numbers = #tpu.dot_dimension_numbers<[1], [1], [0], [0], [0, 0, 1, 0], [], []>} : vector<16x4xbf16>, vector<16x4xbf16>, vector<16x16xf32> -> vector<16x16xf32>
    %cst_14 = arith.constant dense<0xFF800000> : vector<16xf32>
    %20 = vector.multi_reduction <maximumf>, %19, %cst_14 [1] : vector<16x16xf32> to vector<16xf32>
    %21 = vector.shape_cast %20 : vector<16xf32> to vector<16x1xf32>
    %22 = vector.broadcast %21 : vector<16x1xf32> to vector<16x16xf32>
    %23 = arith.subf %19, %22 : vector<16x16xf32>
    %24 = math.exp %23 : vector<16x16xf32>
    %cst_15 = arith.constant dense<0.000000e+00> : vector<16xf32>
    %25 = vector.multi_reduction <add>, %24, %cst_15 [1] : vector<16x16xf32> to vector<16xf32>
    %26 = vector.shape_cast %25 : vector<16xf32> to vector<16x1xf32>
    %27 = tpu.reciprocal %26 {approx = true} : vector<16x1xf32> -> vector<16x1xf32>
    %28 = vector.broadcast %27 : vector<16x1xf32> to vector<16x16xf32>
    %29 = arith.mulf %24, %28 : vector<16x16xf32>
    %30 = vector.extract_strided_slice %14 {offsets = [0, 0], sizes = [16, 4], strides = [1, 1]} : vector<16x32xf32> to vector<16x4xf32>
    %31 = arith.truncf %29 : vector<16x16xf32> to vector<16x16xbf16>
    %32 = arith.truncf %30 : vector<16x4xf32> to vector<16x4xbf16>
    %cst_16 = arith.constant dense<0.000000e+00> : vector<16x4xf32>
    %33 = tpu.matmul %31, %32, %cst_16 {dimension_numbers = #tpu.dot_dimension_numbers<[1], [0], [0], [1], [0, 0, 1, 1], [], []>} : vector<16x16xbf16>, vector<16x4xbf16>, vector<16x4xf32> -> vector<16x4xf32>
    %34 = vector.extract_strided_slice %12 {offsets = [0, 4], sizes = [16, 4], strides = [1, 1]} : vector<16x32xf32> to vector<16x4xf32>
    %35 = vector.extract_strided_slice %13 {offsets = [0, 4], sizes = [16, 4], strides = [1, 1]} : vector<16x32xf32> to vector<16x4xf32>
    %36 = arith.truncf %34 : vector<16x4xf32> to vector<16x4xbf16>
    %37 = arith.truncf %35 : vector<16x4xf32> to vector<16x4xbf16>
    %cst_17 = arith.constant dense<0.000000e+00> : vector<16x16xf32>
    %38 = tpu.matmul %36, %37, %cst_17 {dimension_numbers = #tpu.dot_dimension_numbers<[1], [1], [0], [0], [0, 0, 1, 0], [], []>} : vector<16x4xbf16>, vector<16x4xbf16>, vector<16x16xf32> -> vector<16x16xf32>
    %cst_18 = arith.constant dense<0xFF800000> : vector<16xf32>
    %39 = vector.multi_reduction <maximumf>, %38, %cst_18 [1] : vector<16x16xf32> to vector<16xf32>
    %40 = vector.shape_cast %39 : vector<16xf32> to vector<16x1xf32>
    %41 = vector.broadcast %40 : vector<16x1xf32> to vector<16x16xf32>
    %42 = arith.subf %38, %41 : vector<16x16xf32>
    %43 = math.exp %42 : vector<16x16xf32>
    %cst_19 = arith.constant dense<0.000000e+00> : vector<16xf32>
    %44 = vector.multi_reduction <add>, %43, %cst_19 [1] : vector<16x16xf32> to vector<16xf32>
    %45 = vector.shape_cast %44 : vector<16xf32> to vector<16x1xf32>
    %46 = tpu.reciprocal %45 {approx = true} : vector<16x1xf32> -> vector<16x1xf32>
    %47 = vector.broadcast %46 : vector<16x1xf32> to vector<16x16xf32>
    %48 = arith.mulf %43, %47 : vector<16x16xf32>
    %49 = vector.extract_strided_slice %14 {offsets = [0, 4], sizes = [16, 4], strides = [1, 1]} : vector<16x32xf32> to vector<16x4xf32>
    %50 = arith.truncf %48 : vector<16x16xf32> to vector<16x16xbf16>
    %51 = arith.truncf %49 : vector<16x4xf32> to vector<16x4xbf16>
    %cst_20 = arith.constant dense<0.000000e+00> : vector<16x4xf32>
    %52 = tpu.matmul %50, %51, %cst_20 {dimension_numbers = #tpu.dot_dimension_numbers<[1], [0], [0], [1], [0, 0, 1, 1], [], []>} : vector<16x16xbf16>, vector<16x4xbf16>, vector<16x4xf32> -> vector<16x4xf32>
    %53 = vector.extract_strided_slice %12 {offsets = [0, 8], sizes = [16, 4], strides = [1, 1]} : vector<16x32xf32> to vector<16x4xf32>
    %54 = vector.extract_strided_slice %13 {offsets = [0, 8], sizes = [16, 4], strides = [1, 1]} : vector<16x32xf32> to vector<16x4xf32>
    %55 = arith.truncf %53 : vector<16x4xf32> to vector<16x4xbf16>
    %56 = arith.truncf %54 : vector<16x4xf32> to vector<16x4xbf16>
    %cst_21 = arith.constant dense<0.000000e+00> : vector<16x16xf32>
    %57 = tpu.matmul %55, %56, %cst_21 {dimension_numbers = #tpu.dot_dimension_numbers<[1], [1], [0], [0], [0, 0, 1, 0], [], []>} : vector<16x4xbf16>, vector<16x4xbf16>, vector<16x16xf32> -> vector<16x16xf32>
    %cst_22 = arith.constant dense<0xFF800000> : vector<16xf32>
    %58 = vector.multi_reduction <maximumf>, %57, %cst_22 [1] : vector<16x16xf32> to vector<16xf32>
    %59 = vector.shape_cast %58 : vector<16xf32> to vector<16x1xf32>
    %60 = vector.broadcast %59 : vector<16x1xf32> to vector<16x16xf32>
    %61 = arith.subf %57, %60 : vector<16x16xf32>
    %62 = math.exp %61 : vector<16x16xf32>
    %cst_23 = arith.constant dense<0.000000e+00> : vector<16xf32>
    %63 = vector.multi_reduction <add>, %62, %cst_23 [1] : vector<16x16xf32> to vector<16xf32>
    %64 = vector.shape_cast %63 : vector<16xf32> to vector<16x1xf32>
    %65 = tpu.reciprocal %64 {approx = true} : vector<16x1xf32> -> vector<16x1xf32>
    %66 = vector.broadcast %65 : vector<16x1xf32> to vector<16x16xf32>
    %67 = arith.mulf %62, %66 : vector<16x16xf32>
    %68 = vector.extract_strided_slice %14 {offsets = [0, 8], sizes = [16, 4], strides = [1, 1]} : vector<16x32xf32> to vector<16x4xf32>
    %69 = arith.truncf %67 : vector<16x16xf32> to vector<16x16xbf16>
    %70 = arith.truncf %68 : vector<16x4xf32> to vector<16x4xbf16>
    %cst_24 = arith.constant dense<0.000000e+00> : vector<16x4xf32>
    %71 = tpu.matmul %69, %70, %cst_24 {dimension_numbers = #tpu.dot_dimension_numbers<[1], [0], [0], [1], [0, 0, 1, 1], [], []>} : vector<16x16xbf16>, vector<16x4xbf16>, vector<16x4xf32> -> vector<16x4xf32>
    %72 = vector.extract_strided_slice %12 {offsets = [0, 12], sizes = [16, 4], strides = [1, 1]} : vector<16x32xf32> to vector<16x4xf32>
    %73 = vector.extract_strided_slice %13 {offsets = [0, 12], sizes = [16, 4], strides = [1, 1]} : vector<16x32xf32> to vector<16x4xf32>
    %74 = arith.truncf %72 : vector<16x4xf32> to vector<16x4xbf16>
    %75 = arith.truncf %73 : vector<16x4xf32> to vector<16x4xbf16>
    %cst_25 = arith.constant dense<0.000000e+00> : vector<16x16xf32>
    %76 = tpu.matmul %74, %75, %cst_25 {dimension_numbers = #tpu.dot_dimension_numbers<[1], [1], [0], [0], [0, 0, 1, 0], [], []>} : vector<16x4xbf16>, vector<16x4xbf16>, vector<16x16xf32> -> vector<16x16xf32>
    %cst_26 = arith.constant dense<0xFF800000> : vector<16xf32>
    %77 = vector.multi_reduction <maximumf>, %76, %cst_26 [1] : vector<16x16xf32> to vector<16xf32>
    %78 = vector.shape_cast %77 : vector<16xf32> to vector<16x1xf32>
    %79 = vector.broadcast %78 : vector<16x1xf32> to vector<16x16xf32>
    %80 = arith.subf %76, %79 : vector<16x16xf32>
    %81 = math.exp %80 : vector<16x16xf32>
    %cst_27 = arith.constant dense<0.000000e+00> : vector<16xf32>
    %82 = vector.multi_reduction <add>, %81, %cst_27 [1] : vector<16x16xf32> to vector<16xf32>
    %83 = vector.shape_cast %82 : vector<16xf32> to vector<16x1xf32>
    %84 = tpu.reciprocal %83 {approx = true} : vector<16x1xf32> -> vector<16x1xf32>
    %85 = vector.broadcast %84 : vector<16x1xf32> to vector<16x16xf32>
    %86 = arith.mulf %81, %85 : vector<16x16xf32>
    %87 = vector.extract_strided_slice %14 {offsets = [0, 12], sizes = [16, 4], strides = [1, 1]} : vector<16x32xf32> to vector<16x4xf32>
    %88 = arith.truncf %86 : vector<16x16xf32> to vector<16x16xbf16>
    %89 = arith.truncf %87 : vector<16x4xf32> to vector<16x4xbf16>
    %cst_28 = arith.constant dense<0.000000e+00> : vector<16x4xf32>
    %90 = tpu.matmul %88, %89, %cst_28 {dimension_numbers = #tpu.dot_dimension_numbers<[1], [0], [0], [1], [0, 0, 1, 1], [], []>} : vector<16x16xbf16>, vector<16x4xbf16>, vector<16x4xf32> -> vector<16x4xf32>
    %91 = vector.extract_strided_slice %12 {offsets = [0, 16], sizes = [16, 4], strides = [1, 1]} : vector<16x32xf32> to vector<16x4xf32>
    %92 = vector.extract_strided_slice %13 {offsets = [0, 16], sizes = [16, 4], strides = [1, 1]} : vector<16x32xf32> to vector<16x4xf32>
    %93 = arith.truncf %91 : vector<16x4xf32> to vector<16x4xbf16>
    %94 = arith.truncf %92 : vector<16x4xf32> to vector<16x4xbf16>
    %cst_29 = arith.constant dense<0.000000e+00> : vector<16x16xf32>
    %95 = tpu.matmul %93, %94, %cst_29 {dimension_numbers = #tpu.dot_dimension_numbers<[1], [1], [0], [0], [0, 0, 1, 0], [], []>} : vector<16x4xbf16>, vector<16x4xbf16>, vector<16x16xf32> -> vector<16x16xf32>
    %cst_30 = arith.constant dense<0xFF800000> : vector<16xf32>
    %96 = vector.multi_reduction <maximumf>, %95, %cst_30 [1] : vector<16x16xf32> to vector<16xf32>
    %97 = vector.shape_cast %96 : vector<16xf32> to vector<16x1xf32>
    %98 = vector.broadcast %97 : vector<16x1xf32> to vector<16x16xf32>
    %99 = arith.subf %95, %98 : vector<16x16xf32>
    %100 = math.exp %99 : vector<16x16xf32>
    %cst_31 = arith.constant dense<0.000000e+00> : vector<16xf32>
    %101 = vector.multi_reduction <add>, %100, %cst_31 [1] : vector<16x16xf32> to vector<16xf32>
    %102 = vector.shape_cast %101 : vector<16xf32> to vector<16x1xf32>
    %103 = tpu.reciprocal %102 {approx = true} : vector<16x1xf32> -> vector<16x1xf32>
    %104 = vector.broadcast %103 : vector<16x1xf32> to vector<16x16xf32>
    %105 = arith.mulf %100, %104 : vector<16x16xf32>
    %106 = vector.extract_strided_slice %14 {offsets = [0, 16], sizes = [16, 4], strides = [1, 1]} : vector<16x32xf32> to vector<16x4xf32>
    %107 = arith.truncf %105 : vector<16x16xf32> to vector<16x16xbf16>
    %108 = arith.truncf %106 : vector<16x4xf32> to vector<16x4xbf16>
    %cst_32 = arith.constant dense<0.000000e+00> : vector<16x4xf32>
    %109 = tpu.matmul %107, %108, %cst_32 {dimension_numbers = #tpu.dot_dimension_numbers<[1], [0], [0], [1], [0, 0, 1, 1], [], []>} : vector<16x16xbf16>, vector<16x4xbf16>, vector<16x4xf32> -> vector<16x4xf32>
    %110 = vector.extract_strided_slice %12 {offsets = [0, 20], sizes = [16, 4], strides = [1, 1]} : vector<16x32xf32> to vector<16x4xf32>
    %111 = vector.extract_strided_slice %13 {offsets = [0, 20], sizes = [16, 4], strides = [1, 1]} : vector<16x32xf32> to vector<16x4xf32>
    %112 = arith.truncf %110 : vector<16x4xf32> to vector<16x4xbf16>
    %113 = arith.truncf %111 : vector<16x4xf32> to vector<16x4xbf16>
    %cst_33 = arith.constant dense<0.000000e+00> : vector<16x16xf32>
    %114 = tpu.matmul %112, %113, %cst_33 {dimension_numbers = #tpu.dot_dimension_numbers<[1], [1], [0], [0], [0, 0, 1, 0], [], []>} : vector<16x4xbf16>, vector<16x4xbf16>, vector<16x16xf32> -> vector<16x16xf32>
    %cst_34 = arith.constant dense<0xFF800000> : vector<16xf32>
    %115 = vector.multi_reduction <maximumf>, %114, %cst_34 [1] : vector<16x16xf32> to vector<16xf32>
    %116 = vector.shape_cast %115 : vector<16xf32> to vector<16x1xf32>
    %117 = vector.broadcast %116 : vector<16x1xf32> to vector<16x16xf32>
    %118 = arith.subf %114, %117 : vector<16x16xf32>
    %119 = math.exp %118 : vector<16x16xf32>
    %cst_35 = arith.constant dense<0.000000e+00> : vector<16xf32>
    %120 = vector.multi_reduction <add>, %119, %cst_35 [1] : vector<16x16xf32> to vector<16xf32>
    %121 = vector.shape_cast %120 : vector<16xf32> to vector<16x1xf32>
    %122 = tpu.reciprocal %121 {approx = true} : vector<16x1xf32> -> vector<16x1xf32>
    %123 = vector.broadcast %122 : vector<16x1xf32> to vector<16x16xf32>
    %124 = arith.mulf %119, %123 : vector<16x16xf32>
    %125 = vector.extract_strided_slice %14 {offsets = [0, 20], sizes = [16, 4], strides = [1, 1]} : vector<16x32xf32> to vector<16x4xf32>
    %126 = arith.truncf %124 : vector<16x16xf32> to vector<16x16xbf16>
    %127 = arith.truncf %125 : vector<16x4xf32> to vector<16x4xbf16>
    %cst_36 = arith.constant dense<0.000000e+00> : vector<16x4xf32>
    %128 = tpu.matmul %126, %127, %cst_36 {dimension_numbers = #tpu.dot_dimension_numbers<[1], [0], [0], [1], [0, 0, 1, 1], [], []>} : vector<16x16xbf16>, vector<16x4xbf16>, vector<16x4xf32> -> vector<16x4xf32>
    %129 = vector.extract_strided_slice %12 {offsets = [0, 24], sizes = [16, 4], strides = [1, 1]} : vector<16x32xf32> to vector<16x4xf32>
    %130 = vector.extract_strided_slice %13 {offsets = [0, 24], sizes = [16, 4], strides = [1, 1]} : vector<16x32xf32> to vector<16x4xf32>
    %131 = arith.truncf %129 : vector<16x4xf32> to vector<16x4xbf16>
    %132 = arith.truncf %130 : vector<16x4xf32> to vector<16x4xbf16>
    %cst_37 = arith.constant dense<0.000000e+00> : vector<16x16xf32>
    %133 = tpu.matmul %131, %132, %cst_37 {dimension_numbers = #tpu.dot_dimension_numbers<[1], [1], [0], [0], [0, 0, 1, 0], [], []>} : vector<16x4xbf16>, vector<16x4xbf16>, vector<16x16xf32> -> vector<16x16xf32>
    %cst_38 = arith.constant dense<0xFF800000> : vector<16xf32>
    %134 = vector.multi_reduction <maximumf>, %133, %cst_38 [1] : vector<16x16xf32> to vector<16xf32>
    %135 = vector.shape_cast %134 : vector<16xf32> to vector<16x1xf32>
    %136 = vector.broadcast %135 : vector<16x1xf32> to vector<16x16xf32>
    %137 = arith.subf %133, %136 : vector<16x16xf32>
    %138 = math.exp %137 : vector<16x16xf32>
    %cst_39 = arith.constant dense<0.000000e+00> : vector<16xf32>
    %139 = vector.multi_reduction <add>, %138, %cst_39 [1] : vector<16x16xf32> to vector<16xf32>
    %140 = vector.shape_cast %139 : vector<16xf32> to vector<16x1xf32>
    %141 = tpu.reciprocal %140 {approx = true} : vector<16x1xf32> -> vector<16x1xf32>
    %142 = vector.broadcast %141 : vector<16x1xf32> to vector<16x16xf32>
    %143 = arith.mulf %138, %142 : vector<16x16xf32>
    %144 = vector.extract_strided_slice %14 {offsets = [0, 24], sizes = [16, 4], strides = [1, 1]} : vector<16x32xf32> to vector<16x4xf32>
    %145 = arith.truncf %143 : vector<16x16xf32> to vector<16x16xbf16>
    %146 = arith.truncf %144 : vector<16x4xf32> to vector<16x4xbf16>
    %cst_40 = arith.constant dense<0.000000e+00> : vector<16x4xf32>
    %147 = tpu.matmul %145, %146, %cst_40 {dimension_numbers = #tpu.dot_dimension_numbers<[1], [0], [0], [1], [0, 0, 1, 1], [], []>} : vector<16x16xbf16>, vector<16x4xbf16>, vector<16x4xf32> -> vector<16x4xf32>
    %148 = vector.extract_strided_slice %12 {offsets = [0, 28], sizes = [16, 4], strides = [1, 1]} : vector<16x32xf32> to vector<16x4xf32>
    %149 = vector.extract_strided_slice %13 {offsets = [0, 28], sizes = [16, 4], strides = [1, 1]} : vector<16x32xf32> to vector<16x4xf32>
    %150 = arith.truncf %148 : vector<16x4xf32> to vector<16x4xbf16>
    %151 = arith.truncf %149 : vector<16x4xf32> to vector<16x4xbf16>
    %cst_41 = arith.constant dense<0.000000e+00> : vector<16x16xf32>
    %152 = tpu.matmul %150, %151, %cst_41 {dimension_numbers = #tpu.dot_dimension_numbers<[1], [1], [0], [0], [0, 0, 1, 0], [], []>} : vector<16x4xbf16>, vector<16x4xbf16>, vector<16x16xf32> -> vector<16x16xf32>
    %cst_42 = arith.constant dense<0xFF800000> : vector<16xf32>
    %153 = vector.multi_reduction <maximumf>, %152, %cst_42 [1] : vector<16x16xf32> to vector<16xf32>
    %154 = vector.shape_cast %153 : vector<16xf32> to vector<16x1xf32>
    %155 = vector.broadcast %154 : vector<16x1xf32> to vector<16x16xf32>
    %156 = arith.subf %152, %155 : vector<16x16xf32>
    %157 = math.exp %156 : vector<16x16xf32>
    %cst_43 = arith.constant dense<0.000000e+00> : vector<16xf32>
    %158 = vector.multi_reduction <add>, %157, %cst_43 [1] : vector<16x16xf32> to vector<16xf32>
    %159 = vector.shape_cast %158 : vector<16xf32> to vector<16x1xf32>
    %160 = tpu.reciprocal %159 {approx = true} : vector<16x1xf32> -> vector<16x1xf32>
    %161 = vector.broadcast %160 : vector<16x1xf32> to vector<16x16xf32>
    %162 = arith.mulf %157, %161 : vector<16x16xf32>
    %163 = vector.extract_strided_slice %14 {offsets = [0, 28], sizes = [16, 4], strides = [1, 1]} : vector<16x32xf32> to vector<16x4xf32>
    %164 = arith.truncf %162 : vector<16x16xf32> to vector<16x16xbf16>
    %165 = arith.truncf %163 : vector<16x4xf32> to vector<16x4xbf16>
    %cst_44 = arith.constant dense<0.000000e+00> : vector<16x4xf32>
    %166 = tpu.matmul %164, %165, %cst_44 {dimension_numbers = #tpu.dot_dimension_numbers<[1], [0], [0], [1], [0, 0, 1, 1], [], []>} : vector<16x16xbf16>, vector<16x4xbf16>, vector<16x4xf32> -> vector<16x4xf32>
    %167 = tpu.concatenate %33, %52, %71, %90, %109, %128, %147, %166 in 1 : vector<16x4xf32>, vector<16x4xf32>, vector<16x4xf32>, vector<16x4xf32>, vector<16x4xf32>, vector<16x4xf32>, vector<16x4xf32>, vector<16x4xf32> -> vector<16x32xf32>
    %168 = arith.truncf %167 : vector<16x32xf32> to vector<16x32xbf16>
    %cst_45 = arith.constant dense<0.000000e+00> : vector<16x32xf32>
    %169 = tpu.matmul %168, %6, %cst_45 {dimension_numbers = #tpu.dot_dimension_numbers<[1], [0], [0], [1], [0, 0, 1, 1], [], []>} : vector<16x32xbf16>, vector<32x32xbf16>, vector<16x32xf32> -> vector<16x32xf32>
    %170 = vector.broadcast %7 : vector<1x32xf32> to vector<16x32xf32>
    %171 = arith.addf %169, %170 : vector<16x32xf32>
    %172 = arith.addf %1, %171 : vector<16x32xf32>
    %c0_46 = arith.constant 0 : index
    %c0_47 = arith.constant 0 : index
    %c0_48 = arith.constant 0 : index
    %173 = vector.load %arg15[%c0_46, %c0_47, %c0_48] : memref<2x1x32xf32, #tpu.memory_space<vmem>>, vector<1x1x32xf32>
    %174 = vector.shape_cast %173 : vector<1x1x32xf32> to vector<1x32xf32>
    %c0_49 = arith.constant 0 : index
    %c0_50 = arith.constant 0 : index
    %c0_51 = arith.constant 0 : index
    %175 = vector.load %arg16[%c0_49, %c0_50, %c0_51] : memref<2x1x32xf32, #tpu.memory_space<vmem>>, vector<1x1x32xf32>
    %176 = vector.shape_cast %175 : vector<1x1x32xf32> to vector<1x32xf32>
    %cst_52 = arith.constant dense<0.000000e+00> : vector<16xf32>
    %177 = vector.multi_reduction <add>, %172, %cst_52 [1] : vector<16x32xf32> to vector<16xf32>
    %178 = vector.shape_cast %177 : vector<16xf32> to vector<16x1xf32>
    %cst_53 = arith.constant 3.200000e+01 : f32
    %179 = vector.broadcast %cst_53 : f32 to vector<16x1xf32>
    %180 = arith.divf %178, %179 : vector<16x1xf32>
    %181 = vector.broadcast %180 : vector<16x1xf32> to vector<16x32xf32>
    %182 = arith.subf %172, %181 : vector<16x32xf32>
    %183 = arith.mulf %182, %182 : vector<16x32xf32>
    %cst_54 = arith.constant dense<0.000000e+00> : vector<16xf32>
    %184 = vector.multi_reduction <add>, %183, %cst_54 [1] : vector<16x32xf32> to vector<16xf32>
    %185 = vector.shape_cast %184 : vector<16xf32> to vector<16x1xf32>
    %cst_55 = arith.constant 3.200000e+01 : f32
    %186 = vector.broadcast %cst_55 : f32 to vector<16x1xf32>
    %187 = arith.divf %185, %186 : vector<16x1xf32>
    %cst_56 = arith.constant 9.99999974E-6 : f32
    %188 = vector.broadcast %cst_56 : f32 to vector<16x1xf32>
    %189 = arith.addf %187, %188 : vector<16x1xf32>
    %190 = math.rsqrt %189 : vector<16x1xf32>
    %191 = vector.broadcast %190 : vector<16x1xf32> to vector<16x32xf32>
    %192 = arith.mulf %182, %191 : vector<16x32xf32>
    %193 = vector.broadcast %174 : vector<1x32xf32> to vector<16x32xf32>
    %194 = arith.mulf %192, %193 : vector<16x32xf32>
    %195 = vector.broadcast %176 : vector<1x32xf32> to vector<16x32xf32>
    %196 = arith.addf %194, %195 : vector<16x32xf32>
    %c0_57 = arith.constant 0 : index
    %c0_58 = arith.constant 0 : index
    %197 = vector.load %arg7[%c0_57, %c0_58] : memref<32x128xbf16, #tpu.memory_space<vmem>>, vector<32x128xbf16>
    %198 = arith.truncf %196 : vector<16x32xf32> to vector<16x32xbf16>
    %cst_59 = arith.constant dense<0.000000e+00> : vector<16x128xf32>
    %199 = tpu.matmul %198, %197, %cst_59 {dimension_numbers = #tpu.dot_dimension_numbers<[1], [0], [0], [1], [0, 0, 1, 1], [], []>} : vector<16x32xbf16>, vector<32x128xbf16>, vector<16x128xf32> -> vector<16x128xf32>
    %c0_60 = arith.constant 0 : index
    %c0_61 = arith.constant 0 : index
    %200 = vector.load %arg8[%c0_60, %c0_61] : memref<1x128xf32, #tpu.memory_space<vmem>>, vector<1x128xf32>
    %201 = vector.broadcast %200 : vector<1x128xf32> to vector<16x128xf32>
    %202 = arith.addf %199, %201 : vector<16x128xf32>
    %cst_62 = arith.constant 0.000000e+00 : f32
    %203 = vector.broadcast %cst_62 : f32 to vector<16x128xf32>
    %204 = arith.maximumf %202, %203 : vector<16x128xf32>
    %c0_63 = arith.constant 0 : index
    %c0_64 = arith.constant 0 : index
    %205 = vector.load %arg9[%c0_63, %c0_64] : memref<128x32xbf16, #tpu.memory_space<vmem>>, vector<128x32xbf16>
    %206 = arith.truncf %204 : vector<16x128xf32> to vector<16x128xbf16>
    %cst_65 = arith.constant dense<0.000000e+00> : vector<16x32xf32>
    %207 = tpu.matmul %206, %205, %cst_65 {dimension_numbers = #tpu.dot_dimension_numbers<[1], [0], [0], [1], [0, 0, 1, 1], [], []>} : vector<16x128xbf16>, vector<128x32xbf16>, vector<16x32xf32> -> vector<16x32xf32>
    %c0_66 = arith.constant 0 : index
    %c0_67 = arith.constant 0 : index
    %208 = vector.load %arg10[%c0_66, %c0_67] : memref<1x32xf32, #tpu.memory_space<vmem>>, vector<1x32xf32>
    %209 = vector.broadcast %208 : vector<1x32xf32> to vector<16x32xf32>
    %210 = arith.addf %207, %209 : vector<16x32xf32>
    %211 = arith.addf %196, %210 : vector<16x32xf32>
    %c1 = arith.constant 1 : index
    %c0_68 = arith.constant 0 : index
    %c0_69 = arith.constant 0 : index
    %212 = vector.load %arg15[%c1, %c0_68, %c0_69] : memref<2x1x32xf32, #tpu.memory_space<vmem>>, vector<1x1x32xf32>
    %213 = vector.shape_cast %212 : vector<1x1x32xf32> to vector<1x32xf32>
    %c1_70 = arith.constant 1 : index
    %c0_71 = arith.constant 0 : index
    %c0_72 = arith.constant 0 : index
    %214 = vector.load %arg16[%c1_70, %c0_71, %c0_72] : memref<2x1x32xf32, #tpu.memory_space<vmem>>, vector<1x1x32xf32>
    %215 = vector.shape_cast %214 : vector<1x1x32xf32> to vector<1x32xf32>
    %cst_73 = arith.constant dense<0.000000e+00> : vector<16xf32>
    %216 = vector.multi_reduction <add>, %211, %cst_73 [1] : vector<16x32xf32> to vector<16xf32>
    %217 = vector.shape_cast %216 : vector<16xf32> to vector<16x1xf32>
    %cst_74 = arith.constant 3.200000e+01 : f32
    %218 = vector.broadcast %cst_74 : f32 to vector<16x1xf32>
    %219 = arith.divf %217, %218 : vector<16x1xf32>
    %220 = vector.broadcast %219 : vector<16x1xf32> to vector<16x32xf32>
    %221 = arith.subf %211, %220 : vector<16x32xf32>
    %222 = arith.mulf %221, %221 : vector<16x32xf32>
    %cst_75 = arith.constant dense<0.000000e+00> : vector<16xf32>
    %223 = vector.multi_reduction <add>, %222, %cst_75 [1] : vector<16x32xf32> to vector<16xf32>
    %224 = vector.shape_cast %223 : vector<16xf32> to vector<16x1xf32>
    %cst_76 = arith.constant 3.200000e+01 : f32
    %225 = vector.broadcast %cst_76 : f32 to vector<16x1xf32>
    %226 = arith.divf %224, %225 : vector<16x1xf32>
    %cst_77 = arith.constant 9.99999974E-6 : f32
    %227 = vector.broadcast %cst_77 : f32 to vector<16x1xf32>
    %228 = arith.addf %226, %227 : vector<16x1xf32>
    %229 = math.rsqrt %228 : vector<16x1xf32>
    %230 = vector.broadcast %229 : vector<16x1xf32> to vector<16x32xf32>
    %231 = arith.mulf %221, %230 : vector<16x32xf32>
    %232 = vector.broadcast %213 : vector<1x32xf32> to vector<16x32xf32>
    %233 = arith.mulf %231, %232 : vector<16x32xf32>
    %234 = vector.broadcast %215 : vector<1x32xf32> to vector<16x32xf32>
    %235 = arith.addf %233, %234 : vector<16x32xf32>
    %c0_78 = arith.constant 0 : index
    %c0_79 = arith.constant 0 : index
    %236 = vector.load %arg11[%c0_78, %c0_79] : memref<32x96xbf16, #tpu.memory_space<vmem>>, vector<32x96xbf16>
    %c0_80 = arith.constant 0 : index
    %c0_81 = arith.constant 0 : index
    %237 = vector.load %arg12[%c0_80, %c0_81] : memref<1x96xf32, #tpu.memory_space<vmem>>, vector<1x96xf32>
    %c0_82 = arith.constant 0 : index
    %c0_83 = arith.constant 0 : index
    %238 = vector.load %arg13[%c0_82, %c0_83] : memref<32x32xbf16, #tpu.memory_space<vmem>>, vector<32x32xbf16>
    %c0_84 = arith.constant 0 : index
    %c0_85 = arith.constant 0 : index
    %239 = vector.load %arg14[%c0_84, %c0_85] : memref<1x32xf32, #tpu.memory_space<vmem>>, vector<1x32xf32>
    %240 = vector.extract_strided_slice %236 {offsets = [0, 0], sizes = [32, 32], strides = [1, 1]} : vector<32x96xbf16> to vector<32x32xbf16>
    %241 = arith.truncf %3 : vector<8x32xf32> to vector<8x32xbf16>
    %cst_86 = arith.constant dense<0.000000e+00> : vector<8x32xf32>
    %242 = tpu.matmul %241, %240, %cst_86 {dimension_numbers = #tpu.dot_dimension_numbers<[1], [0], [0], [1], [0, 0, 1, 1], [], []>} : vector<8x32xbf16>, vector<32x32xbf16>, vector<8x32xf32> -> vector<8x32xf32>
    %243 = vector.extract_strided_slice %237 {offsets = [0, 0], sizes = [1, 32], strides = [1, 1]} : vector<1x96xf32> to vector<1x32xf32>
    %244 = vector.broadcast %243 : vector<1x32xf32> to vector<8x32xf32>
    %245 = arith.addf %242, %244 : vector<8x32xf32>
    %246 = vector.extract_strided_slice %236 {offsets = [0, 32], sizes = [32, 64], strides = [1, 1]} : vector<32x96xbf16> to vector<32x64xbf16>
    %247 = arith.truncf %235 : vector<16x32xf32> to vector<16x32xbf16>
    %cst_87 = arith.constant dense<0.000000e+00> : vector<16x64xf32>
    %248 = tpu.matmul %247, %246, %cst_87 {dimension_numbers = #tpu.dot_dimension_numbers<[1], [0], [0], [1], [0, 0, 1, 1], [], []>} : vector<16x32xbf16>, vector<32x64xbf16>, vector<16x64xf32> -> vector<16x64xf32>
    %249 = vector.extract_strided_slice %237 {offsets = [0, 32], sizes = [1, 64], strides = [1, 1]} : vector<1x96xf32> to vector<1x64xf32>
    %250 = vector.broadcast %249 : vector<1x64xf32> to vector<16x64xf32>
    %251 = arith.addf %248, %250 : vector<16x64xf32>
    %252 = vector.extract_strided_slice %251 {offsets = [0, 0], sizes = [16, 32], strides = [1, 1]} : vector<16x64xf32> to vector<16x32xf32>
    %253 = vector.extract_strided_slice %251 {offsets = [0, 32], sizes = [16, 32], strides = [1, 1]} : vector<16x64xf32> to vector<16x32xf32>
    %cst_88 = arith.constant 0.000000e+00 : f32
    %254 = vector.broadcast %cst_88 : f32 to vector<8x16xf32>
    %255 = vector.extract_strided_slice %245 {offsets = [0, 0], sizes = [8, 4], strides = [1, 1]} : vector<8x32xf32> to vector<8x4xf32>
    %256 = vector.extract_strided_slice %252 {offsets = [0, 0], sizes = [16, 4], strides = [1, 1]} : vector<16x32xf32> to vector<16x4xf32>
    %257 = arith.truncf %255 : vector<8x4xf32> to vector<8x4xbf16>
    %258 = arith.truncf %256 : vector<16x4xf32> to vector<16x4xbf16>
    %cst_89 = arith.constant dense<0.000000e+00> : vector<8x16xf32>
    %259 = tpu.matmul %257, %258, %cst_89 {dimension_numbers = #tpu.dot_dimension_numbers<[1], [1], [0], [0], [0, 0, 1, 0], [], []>} : vector<8x4xbf16>, vector<16x4xbf16>, vector<8x16xf32> -> vector<8x16xf32>
    %cst_90 = arith.constant dense<0xFF800000> : vector<8xf32>
    %260 = vector.multi_reduction <maximumf>, %259, %cst_90 [1] : vector<8x16xf32> to vector<8xf32>
    %261 = vector.shape_cast %260 : vector<8xf32> to vector<8x1xf32>
    %262 = vector.broadcast %261 : vector<8x1xf32> to vector<8x16xf32>
    %263 = arith.subf %259, %262 : vector<8x16xf32>
    %264 = math.exp %263 : vector<8x16xf32>
    %cst_91 = arith.constant dense<0.000000e+00> : vector<8xf32>
    %265 = vector.multi_reduction <add>, %264, %cst_91 [1] : vector<8x16xf32> to vector<8xf32>
    %266 = vector.shape_cast %265 : vector<8xf32> to vector<8x1xf32>
    %267 = tpu.reciprocal %266 {approx = true} : vector<8x1xf32> -> vector<8x1xf32>
    %268 = vector.broadcast %267 : vector<8x1xf32> to vector<8x16xf32>
    %269 = arith.mulf %264, %268 : vector<8x16xf32>
    %270 = vector.extract_strided_slice %253 {offsets = [0, 0], sizes = [16, 4], strides = [1, 1]} : vector<16x32xf32> to vector<16x4xf32>
    %271 = arith.truncf %269 : vector<8x16xf32> to vector<8x16xbf16>
    %272 = arith.truncf %270 : vector<16x4xf32> to vector<16x4xbf16>
    %cst_92 = arith.constant dense<0.000000e+00> : vector<8x4xf32>
    %273 = tpu.matmul %271, %272, %cst_92 {dimension_numbers = #tpu.dot_dimension_numbers<[1], [0], [0], [1], [0, 0, 1, 1], [], []>} : vector<8x16xbf16>, vector<16x4xbf16>, vector<8x4xf32> -> vector<8x4xf32>
    %274 = arith.addf %254, %269 : vector<8x16xf32>
    %275 = vector.extract_strided_slice %245 {offsets = [0, 4], sizes = [8, 4], strides = [1, 1]} : vector<8x32xf32> to vector<8x4xf32>
    %276 = vector.extract_strided_slice %252 {offsets = [0, 4], sizes = [16, 4], strides = [1, 1]} : vector<16x32xf32> to vector<16x4xf32>
    %277 = arith.truncf %275 : vector<8x4xf32> to vector<8x4xbf16>
    %278 = arith.truncf %276 : vector<16x4xf32> to vector<16x4xbf16>
    %cst_93 = arith.constant dense<0.000000e+00> : vector<8x16xf32>
    %279 = tpu.matmul %277, %278, %cst_93 {dimension_numbers = #tpu.dot_dimension_numbers<[1], [1], [0], [0], [0, 0, 1, 0], [], []>} : vector<8x4xbf16>, vector<16x4xbf16>, vector<8x16xf32> -> vector<8x16xf32>
    %cst_94 = arith.constant dense<0xFF800000> : vector<8xf32>
    %280 = vector.multi_reduction <maximumf>, %279, %cst_94 [1] : vector<8x16xf32> to vector<8xf32>
    %281 = vector.shape_cast %280 : vector<8xf32> to vector<8x1xf32>
    %282 = vector.broadcast %281 : vector<8x1xf32> to vector<8x16xf32>
    %283 = arith.subf %279, %282 : vector<8x16xf32>
    %284 = math.exp %283 : vector<8x16xf32>
    %cst_95 = arith.constant dense<0.000000e+00> : vector<8xf32>
    %285 = vector.multi_reduction <add>, %284, %cst_95 [1] : vector<8x16xf32> to vector<8xf32>
    %286 = vector.shape_cast %285 : vector<8xf32> to vector<8x1xf32>
    %287 = tpu.reciprocal %286 {approx = true} : vector<8x1xf32> -> vector<8x1xf32>
    %288 = vector.broadcast %287 : vector<8x1xf32> to vector<8x16xf32>
    %289 = arith.mulf %284, %288 : vector<8x16xf32>
    %290 = vector.extract_strided_slice %253 {offsets = [0, 4], sizes = [16, 4], strides = [1, 1]} : vector<16x32xf32> to vector<16x4xf32>
    %291 = arith.truncf %289 : vector<8x16xf32> to vector<8x16xbf16>
    %292 = arith.truncf %290 : vector<16x4xf32> to vector<16x4xbf16>
    %cst_96 = arith.constant dense<0.000000e+00> : vector<8x4xf32>
    %293 = tpu.matmul %291, %292, %cst_96 {dimension_numbers = #tpu.dot_dimension_numbers<[1], [0], [0], [1], [0, 0, 1, 1], [], []>} : vector<8x16xbf16>, vector<16x4xbf16>, vector<8x4xf32> -> vector<8x4xf32>
    %294 = arith.addf %274, %289 : vector<8x16xf32>
    %295 = vector.extract_strided_slice %245 {offsets = [0, 8], sizes = [8, 4], strides = [1, 1]} : vector<8x32xf32> to vector<8x4xf32>
    %296 = vector.extract_strided_slice %252 {offsets = [0, 8], sizes = [16, 4], strides = [1, 1]} : vector<16x32xf32> to vector<16x4xf32>
    %297 = arith.truncf %295 : vector<8x4xf32> to vector<8x4xbf16>
    %298 = arith.truncf %296 : vector<16x4xf32> to vector<16x4xbf16>
    %cst_97 = arith.constant dense<0.000000e+00> : vector<8x16xf32>
    %299 = tpu.matmul %297, %298, %cst_97 {dimension_numbers = #tpu.dot_dimension_numbers<[1], [1], [0], [0], [0, 0, 1, 0], [], []>} : vector<8x4xbf16>, vector<16x4xbf16>, vector<8x16xf32> -> vector<8x16xf32>
    %cst_98 = arith.constant dense<0xFF800000> : vector<8xf32>
    %300 = vector.multi_reduction <maximumf>, %299, %cst_98 [1] : vector<8x16xf32> to vector<8xf32>
    %301 = vector.shape_cast %300 : vector<8xf32> to vector<8x1xf32>
    %302 = vector.broadcast %301 : vector<8x1xf32> to vector<8x16xf32>
    %303 = arith.subf %299, %302 : vector<8x16xf32>
    %304 = math.exp %303 : vector<8x16xf32>
    %cst_99 = arith.constant dense<0.000000e+00> : vector<8xf32>
    %305 = vector.multi_reduction <add>, %304, %cst_99 [1] : vector<8x16xf32> to vector<8xf32>
    %306 = vector.shape_cast %305 : vector<8xf32> to vector<8x1xf32>
    %307 = tpu.reciprocal %306 {approx = true} : vector<8x1xf32> -> vector<8x1xf32>
    %308 = vector.broadcast %307 : vector<8x1xf32> to vector<8x16xf32>
    %309 = arith.mulf %304, %308 : vector<8x16xf32>
    %310 = vector.extract_strided_slice %253 {offsets = [0, 8], sizes = [16, 4], strides = [1, 1]} : vector<16x32xf32> to vector<16x4xf32>
    %311 = arith.truncf %309 : vector<8x16xf32> to vector<8x16xbf16>
    %312 = arith.truncf %310 : vector<16x4xf32> to vector<16x4xbf16>
    %cst_100 = arith.constant dense<0.000000e+00> : vector<8x4xf32>
    %313 = tpu.matmul %311, %312, %cst_100 {dimension_numbers = #tpu.dot_dimension_numbers<[1], [0], [0], [1], [0, 0, 1, 1], [], []>} : vector<8x16xbf16>, vector<16x4xbf16>, vector<8x4xf32> -> vector<8x4xf32>
    %314 = arith.addf %294, %309 : vector<8x16xf32>
    %315 = vector.extract_strided_slice %245 {offsets = [0, 12], sizes = [8, 4], strides = [1, 1]} : vector<8x32xf32> to vector<8x4xf32>
    %316 = vector.extract_strided_slice %252 {offsets = [0, 12], sizes = [16, 4], strides = [1, 1]} : vector<16x32xf32> to vector<16x4xf32>
    %317 = arith.truncf %315 : vector<8x4xf32> to vector<8x4xbf16>
    %318 = arith.truncf %316 : vector<16x4xf32> to vector<16x4xbf16>
    %cst_101 = arith.constant dense<0.000000e+00> : vector<8x16xf32>
    %319 = tpu.matmul %317, %318, %cst_101 {dimension_numbers = #tpu.dot_dimension_numbers<[1], [1], [0], [0], [0, 0, 1, 0], [], []>} : vector<8x4xbf16>, vector<16x4xbf16>, vector<8x16xf32> -> vector<8x16xf32>
    %cst_102 = arith.constant dense<0xFF800000> : vector<8xf32>
    %320 = vector.multi_reduction <maximumf>, %319, %cst_102 [1] : vector<8x16xf32> to vector<8xf32>
    %321 = vector.shape_cast %320 : vector<8xf32> to vector<8x1xf32>
    %322 = vector.broadcast %321 : vector<8x1xf32> to vector<8x16xf32>
    %323 = arith.subf %319, %322 : vector<8x16xf32>
    %324 = math.exp %323 : vector<8x16xf32>
    %cst_103 = arith.constant dense<0.000000e+00> : vector<8xf32>
    %325 = vector.multi_reduction <add>, %324, %cst_103 [1] : vector<8x16xf32> to vector<8xf32>
    %326 = vector.shape_cast %325 : vector<8xf32> to vector<8x1xf32>
    %327 = tpu.reciprocal %326 {approx = true} : vector<8x1xf32> -> vector<8x1xf32>
    %328 = vector.broadcast %327 : vector<8x1xf32> to vector<8x16xf32>
    %329 = arith.mulf %324, %328 : vector<8x16xf32>
    %330 = vector.extract_strided_slice %253 {offsets = [0, 12], sizes = [16, 4], strides = [1, 1]} : vector<16x32xf32> to vector<16x4xf32>
    %331 = arith.truncf %329 : vector<8x16xf32> to vector<8x16xbf16>
    %332 = arith.truncf %330 : vector<16x4xf32> to vector<16x4xbf16>
    %cst_104 = arith.constant dense<0.000000e+00> : vector<8x4xf32>
    %333 = tpu.matmul %331, %332, %cst_104 {dimension_numbers = #tpu.dot_dimension_numbers<[1], [0], [0], [1], [0, 0, 1, 1], [], []>} : vector<8x16xbf16>, vector<16x4xbf16>, vector<8x4xf32> -> vector<8x4xf32>
    %334 = arith.addf %314, %329 : vector<8x16xf32>
    %335 = vector.extract_strided_slice %245 {offsets = [0, 16], sizes = [8, 4], strides = [1, 1]} : vector<8x32xf32> to vector<8x4xf32>
    %336 = vector.extract_strided_slice %252 {offsets = [0, 16], sizes = [16, 4], strides = [1, 1]} : vector<16x32xf32> to vector<16x4xf32>
    %337 = arith.truncf %335 : vector<8x4xf32> to vector<8x4xbf16>
    %338 = arith.truncf %336 : vector<16x4xf32> to vector<16x4xbf16>
    %cst_105 = arith.constant dense<0.000000e+00> : vector<8x16xf32>
    %339 = tpu.matmul %337, %338, %cst_105 {dimension_numbers = #tpu.dot_dimension_numbers<[1], [1], [0], [0], [0, 0, 1, 0], [], []>} : vector<8x4xbf16>, vector<16x4xbf16>, vector<8x16xf32> -> vector<8x16xf32>
    %cst_106 = arith.constant dense<0xFF800000> : vector<8xf32>
    %340 = vector.multi_reduction <maximumf>, %339, %cst_106 [1] : vector<8x16xf32> to vector<8xf32>
    %341 = vector.shape_cast %340 : vector<8xf32> to vector<8x1xf32>
    %342 = vector.broadcast %341 : vector<8x1xf32> to vector<8x16xf32>
    %343 = arith.subf %339, %342 : vector<8x16xf32>
    %344 = math.exp %343 : vector<8x16xf32>
    %cst_107 = arith.constant dense<0.000000e+00> : vector<8xf32>
    %345 = vector.multi_reduction <add>, %344, %cst_107 [1] : vector<8x16xf32> to vector<8xf32>
    %346 = vector.shape_cast %345 : vector<8xf32> to vector<8x1xf32>
    %347 = tpu.reciprocal %346 {approx = true} : vector<8x1xf32> -> vector<8x1xf32>
    %348 = vector.broadcast %347 : vector<8x1xf32> to vector<8x16xf32>
    %349 = arith.mulf %344, %348 : vector<8x16xf32>
    %350 = vector.extract_strided_slice %253 {offsets = [0, 16], sizes = [16, 4], strides = [1, 1]} : vector<16x32xf32> to vector<16x4xf32>
    %351 = arith.truncf %349 : vector<8x16xf32> to vector<8x16xbf16>
    %352 = arith.truncf %350 : vector<16x4xf32> to vector<16x4xbf16>
    %cst_108 = arith.constant dense<0.000000e+00> : vector<8x4xf32>
    %353 = tpu.matmul %351, %352, %cst_108 {dimension_numbers = #tpu.dot_dimension_numbers<[1], [0], [0], [1], [0, 0, 1, 1], [], []>} : vector<8x16xbf16>, vector<16x4xbf16>, vector<8x4xf32> -> vector<8x4xf32>
    %354 = arith.addf %334, %349 : vector<8x16xf32>
    %355 = vector.extract_strided_slice %245 {offsets = [0, 20], sizes = [8, 4], strides = [1, 1]} : vector<8x32xf32> to vector<8x4xf32>
    %356 = vector.extract_strided_slice %252 {offsets = [0, 20], sizes = [16, 4], strides = [1, 1]} : vector<16x32xf32> to vector<16x4xf32>
    %357 = arith.truncf %355 : vector<8x4xf32> to vector<8x4xbf16>
    %358 = arith.truncf %356 : vector<16x4xf32> to vector<16x4xbf16>
    %cst_109 = arith.constant dense<0.000000e+00> : vector<8x16xf32>
    %359 = tpu.matmul %357, %358, %cst_109 {dimension_numbers = #tpu.dot_dimension_numbers<[1], [1], [0], [0], [0, 0, 1, 0], [], []>} : vector<8x4xbf16>, vector<16x4xbf16>, vector<8x16xf32> -> vector<8x16xf32>
    %cst_110 = arith.constant dense<0xFF800000> : vector<8xf32>
    %360 = vector.multi_reduction <maximumf>, %359, %cst_110 [1] : vector<8x16xf32> to vector<8xf32>
    %361 = vector.shape_cast %360 : vector<8xf32> to vector<8x1xf32>
    %362 = vector.broadcast %361 : vector<8x1xf32> to vector<8x16xf32>
    %363 = arith.subf %359, %362 : vector<8x16xf32>
    %364 = math.exp %363 : vector<8x16xf32>
    %cst_111 = arith.constant dense<0.000000e+00> : vector<8xf32>
    %365 = vector.multi_reduction <add>, %364, %cst_111 [1] : vector<8x16xf32> to vector<8xf32>
    %366 = vector.shape_cast %365 : vector<8xf32> to vector<8x1xf32>
    %367 = tpu.reciprocal %366 {approx = true} : vector<8x1xf32> -> vector<8x1xf32>
    %368 = vector.broadcast %367 : vector<8x1xf32> to vector<8x16xf32>
    %369 = arith.mulf %364, %368 : vector<8x16xf32>
    %370 = vector.extract_strided_slice %253 {offsets = [0, 20], sizes = [16, 4], strides = [1, 1]} : vector<16x32xf32> to vector<16x4xf32>
    %371 = arith.truncf %369 : vector<8x16xf32> to vector<8x16xbf16>
    %372 = arith.truncf %370 : vector<16x4xf32> to vector<16x4xbf16>
    %cst_112 = arith.constant dense<0.000000e+00> : vector<8x4xf32>
    %373 = tpu.matmul %371, %372, %cst_112 {dimension_numbers = #tpu.dot_dimension_numbers<[1], [0], [0], [1], [0, 0, 1, 1], [], []>} : vector<8x16xbf16>, vector<16x4xbf16>, vector<8x4xf32> -> vector<8x4xf32>
    %374 = arith.addf %354, %369 : vector<8x16xf32>
    %375 = vector.extract_strided_slice %245 {offsets = [0, 24], sizes = [8, 4], strides = [1, 1]} : vector<8x32xf32> to vector<8x4xf32>
    %376 = vector.extract_strided_slice %252 {offsets = [0, 24], sizes = [16, 4], strides = [1, 1]} : vector<16x32xf32> to vector<16x4xf32>
    %377 = arith.truncf %375 : vector<8x4xf32> to vector<8x4xbf16>
    %378 = arith.truncf %376 : vector<16x4xf32> to vector<16x4xbf16>
    %cst_113 = arith.constant dense<0.000000e+00> : vector<8x16xf32>
    %379 = tpu.matmul %377, %378, %cst_113 {dimension_numbers = #tpu.dot_dimension_numbers<[1], [1], [0], [0], [0, 0, 1, 0], [], []>} : vector<8x4xbf16>, vector<16x4xbf16>, vector<8x16xf32> -> vector<8x16xf32>
    %cst_114 = arith.constant dense<0xFF800000> : vector<8xf32>
    %380 = vector.multi_reduction <maximumf>, %379, %cst_114 [1] : vector<8x16xf32> to vector<8xf32>
    %381 = vector.shape_cast %380 : vector<8xf32> to vector<8x1xf32>
    %382 = vector.broadcast %381 : vector<8x1xf32> to vector<8x16xf32>
    %383 = arith.subf %379, %382 : vector<8x16xf32>
    %384 = math.exp %383 : vector<8x16xf32>
    %cst_115 = arith.constant dense<0.000000e+00> : vector<8xf32>
    %385 = vector.multi_reduction <add>, %384, %cst_115 [1] : vector<8x16xf32> to vector<8xf32>
    %386 = vector.shape_cast %385 : vector<8xf32> to vector<8x1xf32>
    %387 = tpu.reciprocal %386 {approx = true} : vector<8x1xf32> -> vector<8x1xf32>
    %388 = vector.broadcast %387 : vector<8x1xf32> to vector<8x16xf32>
    %389 = arith.mulf %384, %388 : vector<8x16xf32>
    %390 = vector.extract_strided_slice %253 {offsets = [0, 24], sizes = [16, 4], strides = [1, 1]} : vector<16x32xf32> to vector<16x4xf32>
    %391 = arith.truncf %389 : vector<8x16xf32> to vector<8x16xbf16>
    %392 = arith.truncf %390 : vector<16x4xf32> to vector<16x4xbf16>
    %cst_116 = arith.constant dense<0.000000e+00> : vector<8x4xf32>
    %393 = tpu.matmul %391, %392, %cst_116 {dimension_numbers = #tpu.dot_dimension_numbers<[1], [0], [0], [1], [0, 0, 1, 1], [], []>} : vector<8x16xbf16>, vector<16x4xbf16>, vector<8x4xf32> -> vector<8x4xf32>
    %394 = arith.addf %374, %389 : vector<8x16xf32>
    %395 = vector.extract_strided_slice %245 {offsets = [0, 28], sizes = [8, 4], strides = [1, 1]} : vector<8x32xf32> to vector<8x4xf32>
    %396 = vector.extract_strided_slice %252 {offsets = [0, 28], sizes = [16, 4], strides = [1, 1]} : vector<16x32xf32> to vector<16x4xf32>
    %397 = arith.truncf %395 : vector<8x4xf32> to vector<8x4xbf16>
    %398 = arith.truncf %396 : vector<16x4xf32> to vector<16x4xbf16>
    %cst_117 = arith.constant dense<0.000000e+00> : vector<8x16xf32>
    %399 = tpu.matmul %397, %398, %cst_117 {dimension_numbers = #tpu.dot_dimension_numbers<[1], [1], [0], [0], [0, 0, 1, 0], [], []>} : vector<8x4xbf16>, vector<16x4xbf16>, vector<8x16xf32> -> vector<8x16xf32>
    %cst_118 = arith.constant dense<0xFF800000> : vector<8xf32>
    %400 = vector.multi_reduction <maximumf>, %399, %cst_118 [1] : vector<8x16xf32> to vector<8xf32>
    %401 = vector.shape_cast %400 : vector<8xf32> to vector<8x1xf32>
    %402 = vector.broadcast %401 : vector<8x1xf32> to vector<8x16xf32>
    %403 = arith.subf %399, %402 : vector<8x16xf32>
    %404 = math.exp %403 : vector<8x16xf32>
    %cst_119 = arith.constant dense<0.000000e+00> : vector<8xf32>
    %405 = vector.multi_reduction <add>, %404, %cst_119 [1] : vector<8x16xf32> to vector<8xf32>
    %406 = vector.shape_cast %405 : vector<8xf32> to vector<8x1xf32>
    %407 = tpu.reciprocal %406 {approx = true} : vector<8x1xf32> -> vector<8x1xf32>
    %408 = vector.broadcast %407 : vector<8x1xf32> to vector<8x16xf32>
    %409 = arith.mulf %404, %408 : vector<8x16xf32>
    %410 = vector.extract_strided_slice %253 {offsets = [0, 28], sizes = [16, 4], strides = [1, 1]} : vector<16x32xf32> to vector<16x4xf32>
    %411 = arith.truncf %409 : vector<8x16xf32> to vector<8x16xbf16>
    %412 = arith.truncf %410 : vector<16x4xf32> to vector<16x4xbf16>
    %cst_120 = arith.constant dense<0.000000e+00> : vector<8x4xf32>
    %413 = tpu.matmul %411, %412, %cst_120 {dimension_numbers = #tpu.dot_dimension_numbers<[1], [0], [0], [1], [0, 0, 1, 1], [], []>} : vector<8x16xbf16>, vector<16x4xbf16>, vector<8x4xf32> -> vector<8x4xf32>
    %414 = arith.addf %394, %409 : vector<8x16xf32>
    %415 = tpu.concatenate %273, %293, %313, %333, %353, %373, %393, %413 in 1 : vector<8x4xf32>, vector<8x4xf32>, vector<8x4xf32>, vector<8x4xf32>, vector<8x4xf32>, vector<8x4xf32>, vector<8x4xf32>, vector<8x4xf32> -> vector<8x32xf32>
    %416 = arith.truncf %415 : vector<8x32xf32> to vector<8x32xbf16>
    %cst_121 = arith.constant dense<0.000000e+00> : vector<8x32xf32>
    %417 = tpu.matmul %416, %238, %cst_121 {dimension_numbers = #tpu.dot_dimension_numbers<[1], [0], [0], [1], [0, 0, 1, 1], [], []>} : vector<8x32xbf16>, vector<32x32xbf16>, vector<8x32xf32> -> vector<8x32xf32>
    %418 = vector.broadcast %239 : vector<1x32xf32> to vector<8x32xf32>
    %419 = arith.addf %417, %418 : vector<8x32xf32>
    %cst_122 = arith.constant 1.250000e-01 : f32
    %420 = vector.broadcast %cst_122 : f32 to vector<8x16xf32>
    %421 = arith.mulf %414, %420 : vector<8x16xf32>
    %c0_123 = arith.constant 0 : index
    %c0_124 = arith.constant 0 : index
    %422 = vector.load %arg17[%c0_123, %c0_124] : memref<1x32xf32, #tpu.memory_space<vmem>>, vector<1x32xf32>
    %c0_125 = arith.constant 0 : index
    %c0_126 = arith.constant 0 : index
    %423 = vector.load %arg18[%c0_125, %c0_126] : memref<1x32xf32, #tpu.memory_space<vmem>>, vector<1x32xf32>
    %cst_127 = arith.constant dense<0.000000e+00> : vector<8xf32>
    %424 = vector.multi_reduction <add>, %419, %cst_127 [1] : vector<8x32xf32> to vector<8xf32>
    %425 = vector.shape_cast %424 : vector<8xf32> to vector<8x1xf32>
    %cst_128 = arith.constant 3.200000e+01 : f32
    %426 = vector.broadcast %cst_128 : f32 to vector<8x1xf32>
    %427 = arith.divf %425, %426 : vector<8x1xf32>
    %428 = vector.broadcast %427 : vector<8x1xf32> to vector<8x32xf32>
    %429 = arith.subf %419, %428 : vector<8x32xf32>
    %430 = arith.mulf %429, %429 : vector<8x32xf32>
    %cst_129 = arith.constant dense<0.000000e+00> : vector<8xf32>
    %431 = vector.multi_reduction <add>, %430, %cst_129 [1] : vector<8x32xf32> to vector<8xf32>
    %432 = vector.shape_cast %431 : vector<8xf32> to vector<8x1xf32>
    %cst_130 = arith.constant 3.200000e+01 : f32
    %433 = vector.broadcast %cst_130 : f32 to vector<8x1xf32>
    %434 = arith.divf %432, %433 : vector<8x1xf32>
    %cst_131 = arith.constant 9.99999974E-6 : f32
    %435 = vector.broadcast %cst_131 : f32 to vector<8x1xf32>
    %436 = arith.addf %434, %435 : vector<8x1xf32>
    %437 = math.rsqrt %436 : vector<8x1xf32>
    %438 = vector.broadcast %437 : vector<8x1xf32> to vector<8x32xf32>
    %439 = arith.mulf %429, %438 : vector<8x32xf32>
    %440 = vector.broadcast %422 : vector<1x32xf32> to vector<8x32xf32>
    %441 = arith.mulf %439, %440 : vector<8x32xf32>
    %442 = vector.broadcast %423 : vector<1x32xf32> to vector<8x32xf32>
    %443 = arith.addf %441, %442 : vector<8x32xf32>
    %c0_132 = arith.constant 0 : index
    %c0_133 = arith.constant 0 : index
    %c0_134 = arith.constant 0 : index
    %444 = vector.load %arg19[%c0_132, %c0_133, %c0_134] : memref<1x16x32xf32, #tpu.memory_space<vmem>>, vector<1x16x32xf32>
    %445 = vector.shape_cast %444 : vector<1x16x32xf32> to vector<16x32xf32>
    %446 = vector.shape_cast %235 : vector<16x32xf32> to vector<1x16x32xf32>
    tpu.vector_store %arg19[%c0_132, %c0_133, %c0_134], %446 {strides = array<i32>} : memref<1x16x32xf32, #tpu.memory_space<vmem>>, vector<1x16x32xf32>,
    %c0_135 = arith.constant 0 : index
    %c0_136 = arith.constant 0 : index
    %c0_137 = arith.constant 0 : index
    %447 = vector.load %arg20[%c0_135, %c0_136, %c0_137] : memref<1x8x32xf32, #tpu.memory_space<vmem>>, vector<1x8x32xf32>
    %448 = vector.shape_cast %447 : vector<1x8x32xf32> to vector<8x32xf32>
    %449 = vector.shape_cast %443 : vector<8x32xf32> to vector<1x8x32xf32>
    tpu.vector_store %arg20[%c0_135, %c0_136, %c0_137], %449 {strides = array<i32>} : memref<1x8x32xf32, #tpu.memory_space<vmem>>, vector<1x8x32xf32>,
    %c0_138 = arith.constant 0 : index
    %c0_139 = arith.constant 0 : index
    %c0_140 = arith.constant 0 : index
    %450 = vector.load %arg21[%c0_138, %c0_139, %c0_140] : memref<1x8x16xf32, #tpu.memory_space<vmem>>, vector<1x8x16xf32>
    %451 = vector.shape_cast %450 : vector<1x8x16xf32> to vector<8x16xf32>
    %452 = vector.shape_cast %421 : vector<8x16xf32> to vector<1x8x16xf32>
    tpu.vector_store %arg21[%c0_138, %c0_139, %c0_140], %452 {strides = array<i32>} : memref<1x8x16xf32, #tpu.memory_space<vmem>>, vector<1x8x16xf32>,
    return
  }
  func.func @transform_0(%arg0: i32) -> (i32, i32, i32) {
    %c0_i32 = arith.constant 0 : i32
    %c0_i32_0 = arith.constant 0 : i32
    %c0_i32_1 = arith.constant 0 : i32
    return %arg0, %c0_i32, %c0_i32_0 : i32, i32, i32
  }
  func.func @transform_1(%arg0: i32) -> (i32, i32, i32) {
    %c0_i32 = arith.constant 0 : i32
    %c0_i32_0 = arith.constant 0 : i32
    %c0_i32_1 = arith.constant 0 : i32
    %c0_i32_2 = arith.constant 0 : i32
    return %c0_i32, %c0_i32_0, %c0_i32_1 : i32, i32, i32
  }
  func.func @transform_2(%arg0: i32) -> (i32, i32) {
    %c0_i32 = arith.constant 0 : i32
    %c0_i32_0 = arith.constant 0 : i32
    %c0_i32_1 = arith.constant 0 : i32
    return %c0_i32, %c0_i32_0 : i32, i32
  }
  func.func @transform_3(%arg0: i32) -> (i32, i32) {
    %c0_i32 = arith.constant 0 : i32
    %c0_i32_0 = arith.constant 0 : i32
    %c0_i32_1 = arith.constant 0 : i32
    return %c0_i32, %c0_i32_0 : i32, i32
  }
  func.func @transform_4(%arg0: i32) -> (i32, i32) {
    %c0_i32 = arith.constant 0 : i32
    %c0_i32_0 = arith.constant 0 : i32
    %c0_i32_1 = arith.constant 0 : i32
    return %c0_i32, %c0_i32_0 : i32, i32
  }
  func.func @transform_5(%arg0: i32) -> (i32, i32) {
    %c0_i32 = arith.constant 0 : i32
    %c0_i32_0 = arith.constant 0 : i32
    %c0_i32_1 = arith.constant 0 : i32
    return %c0_i32, %c0_i32_0 : i32, i32
  }
  func.func @transform_6(%arg0: i32) -> (i32, i32) {
    %c0_i32 = arith.constant 0 : i32
    %c0_i32_0 = arith.constant 0 : i32
    %c0_i32_1 = arith.constant 0 : i32
    return %c0_i32, %c0_i32_0 : i32, i32
  }
  func.func @transform_7(%arg0: i32) -> (i32, i32) {
    %c0_i32 = arith.constant 0 : i32
    %c0_i32_0 = arith.constant 0 : i32
    %c0_i32_1 = arith.constant 0 : i32
    return %c0_i32, %c0_i32_0 : i32, i32
  }
  func.func @transform_8(%arg0: i32) -> (i32, i32) {
    %c0_i32 = arith.constant 0 : i32
    %c0_i32_0 = arith.constant 0 : i32
    %c0_i32_1 = arith.constant 0 : i32
    return %c0_i32, %c0_i32_0 : i32, i32
  }
  func.func @transform_9(%arg0: i32) -> (i32, i32) {
    %c0_i32 = arith.constant 0 : i32
    %c0_i32_0 = arith.constant 0 : i32
    %c0_i32_1 = arith.constant 0 : i32
    return %c0_i32, %c0_i32_0 : i32, i32
  }
  func.func @transform_10(%arg0: i32) -> (i32, i32) {
    %c0_i32 = arith.constant 0 : i32
    %c0_i32_0 = arith.constant 0 : i32
    %c0_i32_1 = arith.constant 0 : i32
    return %c0_i32, %c0_i32_0 : i32, i32
  }
  func.func @transform_11(%arg0: i32) -> (i32, i32) {
    %c0_i32 = arith.constant 0 : i32
    %c0_i32_0 = arith.constant 0 : i32
    %c0_i32_1 = arith.constant 0 : i32
    return %c0_i32, %c0_i32_0 : i32, i32
  }
  func.func @transform_12(%arg0: i32) -> (i32, i32) {
    %c0_i32 = arith.constant 0 : i32
    %c0_i32_0 = arith.constant 0 : i32
    %c0_i32_1 = arith.constant 0 : i32
    return %c0_i32, %c0_i32_0 : i32, i32
  }
  func.func @transform_13(%arg0: i32) -> (i32, i32) {
    %c0_i32 = arith.constant 0 : i32
    %c0_i32_0 = arith.constant 0 : i32
    %c0_i32_1 = arith.constant 0 : i32
    return %c0_i32, %c0_i32_0 : i32, i32
  }
  func.func @transform_14(%arg0: i32) -> (i32, i32, i32) {
    %c0_i32 = arith.constant 0 : i32
    %c0_i32_0 = arith.constant 0 : i32
    %c0_i32_1 = arith.constant 0 : i32
    %c0_i32_2 = arith.constant 0 : i32
    return %c0_i32, %c0_i32_0, %c0_i32_1 : i32, i32, i32
  }
  func.func @transform_15(%arg0: i32) -> (i32, i32, i32) {
    %c0_i32 = arith.constant 0 : i32
    %c0_i32_0 = arith.constant 0 : i32
    %c0_i32_1 = arith.constant 0 : i32
    %c0_i32_2 = arith.constant 0 : i32
    return %c0_i32, %c0_i32_0, %c0_i32_1 : i32, i32, i32
  }
  func.func @transform_16(%arg0: i32) -> (i32, i32) {
    %c0_i32 = arith.constant 0 : i32
    %c0_i32_0 = arith.constant 0 : i32
    %c0_i32_1 = arith.constant 0 : i32
    return %c0_i32, %c0_i32_0 : i32, i32
  }
  func.func @transform_17(%arg0: i32) -> (i32, i32) {
    %c0_i32 = arith.constant 0 : i32
    %c0_i32_0 = arith.constant 0 : i32
    %c0_i32_1 = arith.constant 0 : i32
    return %c0_i32, %c0_i32_0 : i32, i32
  }
  func.func @transform_18(%arg0: i32) -> (i32, i32, i32) {
    %c0_i32 = arith.constant 0 : i32
    %c0_i32_0 = arith.constant 0 : i32
    %c0_i32_1 = arith.constant 0 : i32
    return %arg0, %c0_i32, %c0_i32_0 : i32, i32, i32
  }
  func.func @transform_19(%arg0: i32) -> (i32, i32, i32) {
    %c0_i32 = arith.constant 0 : i32
    %c0_i32_0 = arith.constant 0 : i32
    %c0_i32_1 = arith.constant 0 : i32
    return %arg0, %c0_i32, %c0_i32_0 : i32, i32, i32
  }
  func.func @transform_20(%arg0: i32) -> (i32, i32, i32) {
    %c0_i32 = arith.constant 0 : i32
    %c0_i32_0 = arith.constant 0 : i32
    %c0_i32_1 = arith.constant 0 : i32
    return %arg0, %c0_i32, %c0_i32_0 : i32, i32, i32
  }
}

</mosaic_0001>

<llo_original>
// kernel: boq_block_forward.2
$region0: #{boq_block_forward.2}
  #allocation0 [shape = 'u32[]', space=smem, size = 0x4, offset = 0x4, fixed_abs, tag = 'smem constant byte address 0x4 - core index']
  #allocation1 [shape = 'u32[144,128]{1,0:T(1,128)}', space=vmem, size = 0x12000, scoped, tag = 'internal scratch']
  %s0 = inlined_call_operand.hbm [shape: f32[1,8,32], index: 0, kind: input, shape index: {}]
  %s1 = inlined_call_operand.vmem [shape: bf16[32,96], index: 1, kind: input, shape index: {}]
  %s2 = inlined_call_operand.vmem [shape: f32[1,96], index: 2, kind: input, shape index: {}]
  %s3 = inlined_call_operand.vmem [shape: bf16[32,32], index: 3, kind: input, shape index: {}]
  %s4 = inlined_call_operand.vmem [shape: f32[1,32], index: 4, kind: input, shape index: {}]
  %s5 = inlined_call_operand.hbm [shape: f32[1,32], index: 5, kind: input, shape index: {}]
  %s6 = inlined_call_operand.hbm [shape: f32[1,32], index: 6, kind: input, shape index: {}]
  %s7 = inlined_call_operand.vmem [shape: f32[1,8,32], index: 7, kind: output, shape index: {}]
  %s8 = sld [smem:[#allocation0]]
  $region50: #{boq_block_forward.2} parent=0
    _
  %s10 = ssub.s32 1, %s8
  %s11 = scalar_select 0, %s10, %s8
  $region1: #{boq_block_forward.2} parent=0
    #allocation2 [shape = 'u8[4096]{0}', space=vmem, size = 0x1000, scoped, tag = 'input window, operand 0, single buffered']
    #allocation3 [shape = 's32[1]{0}', space=sflag, size = 0x4, scoped, tag = 'scoped memory for boq_block_forward.2']
    #allocation4 [shape = 'u8[512]{0}', space=vmem, size = 0x400, scoped, tag = 'input window, operand 5, single buffered']
    #allocation5 [shape = 's32[1]{0}', space=sflag, size = 0x4, scoped, tag = 'scoped memory for boq_block_forward.2']
    #allocation6 [shape = 'u8[512]{0}', space=vmem, size = 0x400, scoped, tag = 'input window, operand 6, single buffered']
    %12 = vsyncpa [#allocation3], 0
    %13 = vsyncpa [#allocation5], 0
    // Predicated region
    $region2: #{boq_block_forward.2} parent=1 // pred_check
      _
    $region3: #{boq_block_forward.2} parent=1 // pred_check_branch
      %15 = sbr.rel (0) target = $region5
    $region4: #{boq_block_forward.2} parent=1 // pred_region
      %s17 = ssub.s32 128, 128
      %18 = vsyncadd [#allocation3], %s17
      %s20 = sshll.u32 [#allocation2], 4
      %s21 = int_to_ptr.vmem [resolvable:$true] %s20
      %23 = dma.hbm_to_vmem [thread:$0]  %s0, 128, %s21, [#allocation3]
    $region5: #{boq_block_forward.2} parent=1 // pred_fallthru
      _
    // Predicated region
    $region6: #{boq_block_forward.2} parent=1 // pred_check
      _
    $region7: #{boq_block_forward.2} parent=1 // pred_check_branch
      %25 = sbr.rel (0) target = $region9
    $region8: #{boq_block_forward.2} parent=1 // pred_region
      _
    $region9: #{boq_block_forward.2} parent=1 // pred_fallthru
      _
    // Predicated region
    $region10: #{boq_block_forward.2} parent=1 // pred_check
      _
    $region11: #{boq_block_forward.2} parent=1 // pred_check_branch
      %27 = sbr.rel (0) target = $region13
    $region12: #{boq_block_forward.2} parent=1 // pred_region
      _
    $region13: #{boq_block_forward.2} parent=1 // pred_fallthru
      _
    // Predicated region
    $region14: #{boq_block_forward.2} parent=1 // pred_check
      _
    $region15: #{boq_block_forward.2} parent=1 // pred_check_branch
      %29 = sbr.rel (0) target = $region17
    $region16: #{boq_block_forward.2} parent=1 // pred_region
      _
    $region17: #{boq_block_forward.2} parent=1 // pred_fallthru
      _
    // Predicated region
    $region18: #{boq_block_forward.2} parent=1 // pred_check
      _
    $region19: #{boq_block_forward.2} parent=1 // pred_check_branch
      %31 = sbr.rel (0) target = $region21
    $region20: #{boq_block_forward.2} parent=1 // pred_region
      _
    $region21: #{boq_block_forward.2} parent=1 // pred_fallthru
      _
    // Predicated region
    $region22: #{boq_block_forward.2} parent=1 // pred_check
      _
    $region23: #{boq_block_forward.2} parent=1 // pred_check_branch
      %33 = sbr.rel (0) target = $region25
    $region24: #{boq_block_forward.2} parent=1 // pred_region
      %s35 = ssub.s32 16, 16
      %36 = vsyncadd [#allocation5], %s35
      %s38 = sshll.u32 [#allocation4], 4
      %s39 = int_to_ptr.vmem [resolvable:$true] %s38
      %41 = dma.hbm_to_vmem [thread:$0]  %s5, 16, %s39, [#allocation5]
    $region25: #{boq_block_forward.2} parent=1 // pred_fallthru
      _
    // Predicated region
    $region26: #{boq_block_forward.2} parent=1 // pred_check
      _
    $region27: #{boq_block_forward.2} parent=1 // pred_check_branch
      %43 = sbr.rel (0) target = $region29
    $region28: #{boq_block_forward.2} parent=1 // pred_region
      %s45 = ssub.s32 16, 16
      %46 = vsyncadd [#allocation5], %s45
      %s48 = sshll.u32 [#allocation6], 4
      %s49 = int_to_ptr.vmem [resolvable:$true] %s48
      %51 = dma.hbm_to_vmem [thread:$0]  %s6, 16, %s49, [#allocation5]
    $region29: #{boq_block_forward.2} parent=1 // pred_fallthru
      _
    // Predicated region
    $region30: #{boq_block_forward.2} parent=1 // pred_check
      _
    $region31: #{boq_block_forward.2} parent=1 // pred_check_branch
      %53 = sbr.rel (0) target = $region33
    $region32: #{boq_block_forward.2} parent=1 // pred_region
      %54 = dma.done [#allocation3], 128
    $region33: #{boq_block_forward.2} parent=1 // pred_fallthru
      _
    // Predicated region
    $region34: #{boq_block_forward.2} parent=1 // pred_check
      _
    $region35: #{boq_block_forward.2} parent=1 // pred_check_branch
      %56 = sbr.rel (0) target = $region37
    $region36: #{boq_block_forward.2} parent=1 // pred_region
      %57 = dma.done [#allocation5], 16
    $region37: #{boq_block_forward.2} parent=1 // pred_fallthru
      _
    // Predicated region
    $region38: #{boq_block_forward.2} parent=1 // pred_check
      _
    $region39: #{boq_block_forward.2} parent=1 // pred_check_branch
      %59 = sbr.rel (0) target = $region41
    $region40: #{boq_block_forward.2} parent=1 // pred_region
      %60 = dma.done [#allocation5], 16
    $region41: #{boq_block_forward.2} parent=1 // pred_fallthru
      _
    %v62 = vld [vmem:[#allocation2] sm:$0xff]
    %v63 = vld [vmem:[%s1] sm:$0xf]
    %v64 = vld [vmem:[%s1 + $0x4] sm:$0xf]
    %v65 = vld [vmem:[%s1 + $0x8] sm:$0xf]
    %v66 = vld [vmem:[%s1 + $0xc] sm:$0xf]
    %v67 = vld [vmem:[%s2] sm:$0x1]
    %v68 = vld [vmem:[%s3] sm:$0xf]
    %v69 = vld [vmem:[%s3 + $0x4] sm:$0xf]
    %v70 = vld [vmem:[%s3 + $0x8] sm:$0xf]
    %v71 = vld [vmem:[%s3 + $0xc] sm:$0xf]
    %v72 = vld [vmem:[%s4] sm:$0x1]
    %v73 = vpack.c.bf16 %v62, %v62
    %v75 = vlaneseq
    %v76 = vshrl.u32 %v75, 7
    %v77 = vsub.s32 0, %v76
    %v78 = vrot.slane %v67, %v77
    %v84 = vunpack.c.l.b16 %v63
    %v85 = vunpack.c.l.b16 %v64
    %v86 = vunpack.c.l.b16 %v65
    %v87 = vunpack.c.l.b16 %v66
    %v88 = vpack.c.b16 %v85, %v84
    %v89 = vpack.c.b16 %v87, %v86
    %vm92 = vcmask 261120
    %v94 = vsel %vm92, %v73, 0
    %96 = vmatprep.subr.bf16.mxu0 0
    %97 = vmatpush1.bf16.msra.mxu0 0
    %98 = vmatprep.subr.bf16.mxu0 0
    %99 = vmatpush1.bf16.msra.mxu0 0
    %100 = vmatprep.subr.bf16.mxu0 0
    %101 = vmatpush1.bf16.msra.mxu0 0
    %102 = vmatprep.subr.bf16.mxu0 0
    %103 = vmatpush1.bf16.msra.mxu0 0
    %104 = vmatprep.subr.bf16.mxu0 0
    %105 = vmatpush1.bf16.msra.mxu0 0
    %106 = vmatprep.subr.bf16.mxu0 0
    %107 = vmatpush1.bf16.msra.mxu0 0
    %108 = vmatprep.subr.bf16.mxu0 0
    %109 = vmatpush1.bf16.msra.mxu0 %v89
    %110 = vmatprep.subr.bf16.mxu0 0
    %111 = vmatpush1.bf16.msra.mxu0 %v88
    %112 = vmatprep.subr.bf16.mxu0 0
    %113 = vmatpush2.bf16.msra.mxu0 0
    %114 = vmatprep.subr.bf16.mxu0 0
    %115 = vmatpush2.bf16.msra.mxu0 0
    %116 = vmatprep.subr.bf16.mxu0 0
    %117 = vmatpush2.bf16.msra.mxu0 0
    %118 = vmatprep.subr.bf16.mxu0 0
    %119 = vmatpush2.bf16.msra.mxu0 0
    %120 = vmatprep.subr.bf16.mxu0 0
    %121 = vmatpush2.bf16.msra.mxu0 0
    %122 = vmatprep.subr.bf16.mxu0 0
    %123 = vmatpush2.bf16.msra.mxu0 0
    %124 = vmatprep.subr.bf16.mxu0 0
    %125 = vmatpush2.bf16.msra.mxu0 0
    %126 = vmatprep.subr.bf16.mxu0 0
    %127 = vmatpush2.bf16.msra.mxu0 0
    %128 = vmatprep.mubr.bf16.mxu0 0
    %129 = vmatmul.mubr.bf16.gmra.mxu0 %v94
    %v130 = vpop.f32.mrf.mxu0
    %v131 = vadd.f32 %v78, %v130
    %v132 = vpop.f32.mrf.mxu0
    %v133 = vpop.f32.mrf.mxu0
    %v134 = vpop.f32.mrf.mxu0
    %135 = vdwg.mxu0
    %v136 = vpack.c.bf16 %v131, %v131
    %138 = vrot.lane.b32.xlu0 %v136, 96
    %v139 = vpop.permute.xlu0 %138
    %vm140 = vcmask 31744
    %v142 = vsel %vm140, %v136, 0
    %v145 = vsel %vm140, %v139, 0
    %147 = vmatprep.subr.bf16.mxu0 0
    %148 = vmatpush1.bf16.xpose.msra.mxu0 0
    %149 = vmatprep.subr.bf16.mxu0 0
    %150 = vmatpush1.bf16.xpose.msra.mxu0 0
    %151 = vmatprep.subr.bf16.mxu0 0
    %152 = vmatpush1.bf16.xpose.msra.mxu0 0
    %153 = vmatprep.subr.bf16.mxu0 0
    %154 = vmatpush1.bf16.xpose.msra.mxu0 0
    %155 = vmatprep.subr.bf16.mxu0 0
    %156 = vmatpush1.bf16.xpose.msra.mxu0 0
    %157 = vmatprep.subr.bf16.mxu0 0
    %158 = vmatpush1.bf16.xpose.msra.mxu0 0
    %159 = vmatprep.subr.bf16.mxu0 0
    %160 = vmatpush1.bf16.xpose.msra.mxu0 0
    %161 = vmatprep.subr.bf16.mxu0 0
    %162 = vmatpush1.bf16.xpose.msra.mxu0 %v145
    %163 = vmatprep.subr.bf16.mxu0 0
    %164 = vmatpush2.bf16.xpose.msra.mxu0 0
    %165 = vmatprep.subr.bf16.mxu0 0
    %166 = vmatpush2.bf16.xpose.msra.mxu0 0
    %167 = vmatprep.subr.bf16.mxu0 0
    %168 = vmatpush2.bf16.xpose.msra.mxu0 0
    %169 = vmatprep.subr.bf16.mxu0 0
    %170 = vmatpush2.bf16.xpose.msra.mxu0 0
    %171 = vmatprep.subr.bf16.mxu0 0
    %172 = vmatpush2.bf16.xpose.msra.mxu0 0
    %173 = vmatprep.subr.bf16.mxu0 0
    %174 = vmatpush2.bf16.xpose.msra.mxu0 0
    %175 = vmatprep.subr.bf16.mxu0 0
    %176 = vmatpush2.bf16.xpose.msra.mxu0 0
    %177 = vmatprep.subr.bf16.mxu0 0
    %178 = vmatpush2.bf16.xpose.msra.mxu0 0
    %179 = vmatprep.mubr.bf16.mxu0 0
    %180 = vmatmul.mubr.bf16.gmra.mxu0 %v142
    %v181 = vpop.f32.mrf.mxu0
    %v182 = vadd.f32 0.0, %v181
    %v183 = vpop.f32.mrf.mxu0
    %v184 = vpop.f32.mrf.mxu0
    %v185 = vpop.f32.mrf.mxu0
    %186 = vdwg.mxu0
    %vm187 = vcmask 64512
    %v188 = vsel %vm187, %v182, -inf
    %189 = vmax.xlane.f32.xlu0 %v188
    %v190 = vpop.xlane.xlu0 %189
    %v191 = vsub.f32 %v182, %v190
    %v192 = vmul.f32 %v191, 1.442695
    %v193 = vpow.pop %v192
    %v194 = vsel %vm187, %v193, 0.0
    %195 = vadd.xlane.f32.xlu0 %v194
    %v196 = vpop.xlane.xlu0 %195
    %v197 = vrcp.pop %v196
    %v198 = vmul.f32 %v193, %v197
    %v199 = vpack.c.bf16 %v198, %v198
    %200 = vrot.lane.b32.xlu0 %v136, 64
    %v201 = vpop.permute.xlu0 %200
    %v203 = vsel %vm187, %v199, 0
    %vm205 = vcmask 1043456
    %v207 = vsel %vm205, %v201, 0
    %209 = vmatprep.subr.bf16.mxu0 0
    %210 = vmatpush1.bf16.msra.mxu0 0
    %211 = vmatprep.subr.bf16.mxu0 0
    %212 = vmatpush1.bf16.msra.mxu0 0
    %213 = vmatprep.subr.bf16.mxu0 0
    %214 = vmatpush1.bf16.msra.mxu0 0
    %215 = vmatprep.subr.bf16.mxu0 0
    %216 = vmatpush1.bf16.msra.mxu0 0
    %217 = vmatprep.subr.bf16.mxu0 0
    %218 = vmatpush1.bf16.msra.mxu0 0
    %219 = vmatprep.subr.bf16.mxu0 0
    %220 = vmatpush1.bf16.msra.mxu0 0
    %221 = vmatprep.subr.bf16.mxu0 0
    %222 = vmatpush1.bf16.msra.mxu0 0
    %223 = vmatprep.subr.bf16.mxu0 0
    %224 = vmatpush1.bf16.msra.mxu0 %v207
    %225 = vmatprep.subr.bf16.mxu0 0
    %226 = vmatpush2.bf16.msra.mxu0 0
    %227 = vmatprep.subr.bf16.mxu0 0
    %228 = vmatpush2.bf16.msra.mxu0 0
    %229 = vmatprep.subr.bf16.mxu0 0
    %230 = vmatpush2.bf16.msra.mxu0 0
    %231 = vmatprep.subr.bf16.mxu0 0
    %232 = vmatpush2.bf16.msra.mxu0 0
    %233 = vmatprep.subr.bf16.mxu0 0
    %234 = vmatpush2.bf16.msra.mxu0 0
    %235 = vmatprep.subr.bf16.mxu0 0
    %236 = vmatpush2.bf16.msra.mxu0 0
    %237 = vmatprep.subr.bf16.mxu0 0
    %238 = vmatpush2.bf16.msra.mxu0 0
    %239 = vmatprep.subr.bf16.mxu0 0
    %240 = vmatpush2.bf16.msra.mxu0 0
    %241 = vmatprep.mubr.bf16.mxu0 0
    %242 = vmatmul.mubr.bf16.gmra.mxu0 %v203
    %v243 = vpop.f32.mrf.mxu0
    %v244 = vadd.f32 0.0, %v243
    %v245 = vpop.f32.mrf.mxu0
    %v246 = vpop.f32.mrf.mxu0
    %v247 = vpop.f32.mrf.mxu0
    %248 = vdwg.mxu0
    %249 = vrot.lane.b32.xlu0 %v136, 124
    %v250 = vpop.permute.xlu0 %249
    %251 = vrot.lane.b32.xlu0 %v136, 92
    %v252 = vpop.permute.xlu0 %251
    %v254 = vsel %vm140, %v250, 0
    %v257 = vsel %vm140, %v252, 0
    %259 = vmatprep.subr.bf16.mxu0 0
    %260 = vmatpush1.bf16.xpose.msra.mxu0 0
    %261 = vmatprep.subr.bf16.mxu0 0
    %262 = vmatpush1.bf16.xpose.msra.mxu0 0
    %263 = vmatprep.subr.bf16.mxu0 0
    %264 = vmatpush1.bf16.xpose.msra.mxu0 0
    %265 = vmatprep.subr.bf16.mxu0 0
    %266 = vmatpush1.bf16.xpose.msra.mxu0 0
    %267 = vmatprep.subr.bf16.mxu0 0
    %268 = vmatpush1.bf16.xpose.msra.mxu0 0
    %269 = vmatprep.subr.bf16.mxu0 0
    %270 = vmatpush1.bf16.xpose.msra.mxu0 0
    %271 = vmatprep.subr.bf16.mxu0 0
    %272 = vmatpush1.bf16.xpose.msra.mxu0 0
    %273 = vmatprep.subr.bf16.mxu0 0
    %274 = vmatpush1.bf16.xpose.msra.mxu0 %v257
    %275 = vmatprep.subr.bf16.mxu0 0
    %276 = vmatpush2.bf16.xpose.msra.mxu0 0
    %277 = vmatprep.subr.bf16.mxu0 0
    %278 = vmatpush2.bf16.xpose.msra.mxu0 0
    %279 = vmatprep.subr.bf16.mxu0 0
    %280 = vmatpush2.bf16.xpose.msra.mxu0 0
    %281 = vmatprep.subr.bf16.mxu0 0
    %282 = vmatpush2.bf16.xpose.msra.mxu0 0
    %283 = vmatprep.subr.bf16.mxu0 0
    %284 = vmatpush2.bf16.xpose.msra.mxu0 0
    %285 = vmatprep.subr.bf16.mxu0 0
    %286 = vmatpush2.bf16.xpose.msra.mxu0 0
    %287 = vmatprep.subr.bf16.mxu0 0
    %288 = vmatpush2.bf16.xpose.msra.mxu0 0
    %289 = vmatprep.subr.bf16.mxu0 0
    %290 = vmatpush2.bf16.xpose.msra.mxu0 0
    %291 = vmatprep.mubr.bf16.mxu0 0
    %292 = vmatmul.mubr.bf16.gmra.mxu0 %v254
    %v293 = vpop.f32.mrf.mxu0
    %v294 = vadd.f32 0.0, %v293
    %v295 = vpop.f32.mrf.mxu0
    %v296 = vpop.f32.mrf.mxu0
    %v297 = vpop.f32.mrf.mxu0
    %298 = vdwg.mxu0
    %v299 = vsel %vm187, %v294, -inf
    %300 = vmax.xlane.f32.xlu0 %v299
    %v301 = vpop.xlane.xlu0 %300
    %v302 = vsub.f32 %v294, %v301
    %v303 = vmul.f32 %v302, 1.442695
    %v304 = vpow.pop %v303
    %v305 = vsel %vm187, %v304, 0.0
    %306 = vadd.xlane.f32.xlu0 %v305
    %v307 = vpop.xlane.xlu0 %306
    %v308 = vrcp.pop %v307
    %v309 = vmul.f32 %v304, %v308
    %v310 = vpack.c.bf16 %v309, %v309
    %311 = vrot.lane.b32.xlu0 %v136, 60
    %v312 = vpop.permute.xlu0 %311
    %v314 = vsel %vm187, %v310, 0
    %v317 = vsel %vm205, %v312, 0
    %319 = vmatprep.subr.bf16.mxu0 0
    %320 = vmatpush1.bf16.msra.mxu0 0
    %321 = vmatprep.subr.bf16.mxu0 0
    %322 = vmatpush1.bf16.msra.mxu0 0
    %323 = vmatprep.subr.bf16.mxu0 0
    %324 = vmatpush1.bf16.msra.mxu0 0
    %325 = vmatprep.subr.bf16.mxu0 0
    %326 = vmatpush1.bf16.msra.mxu0 0
    %327 = vmatprep.subr.bf16.mxu0 0
    %328 = vmatpush1.bf16.msra.mxu0 0
    %329 = vmatprep.subr.bf16.mxu0 0
    %330 = vmatpush1.bf16.msra.mxu0 0
    %331 = vmatprep.subr.bf16.mxu0 0
    %332 = vmatpush1.bf16.msra.mxu0 0
    %333 = vmatprep.subr.bf16.mxu0 0
    %334 = vmatpush1.bf16.msra.mxu0 %v317
    %335 = vmatprep.subr.bf16.mxu0 0
    %336 = vmatpush2.bf16.msra.mxu0 0
    %337 = vmatprep.subr.bf16.mxu0 0
    %338 = vmatpush2.bf16.msra.mxu0 0
    %339 = vmatprep.subr.bf16.mxu0 0
    %340 = vmatpush2.bf16.msra.mxu0 0
    %341 = vmatprep.subr.bf16.mxu0 0
    %342 = vmatpush2.bf16.msra.mxu0 0
    %343 = vmatprep.subr.bf16.mxu0 0
    %344 = vmatpush2.bf16.msra.mxu0 0
    %345 = vmatprep.subr.bf16.mxu0 0
    %346 = vmatpush2.bf16.msra.mxu0 0
    %347 = vmatprep.subr.bf16.mxu0 0
    %348 = vmatpush2.bf16.msra.mxu0 0
    %349 = vmatprep.subr.bf16.mxu0 0
    %350 = vmatpush2.bf16.msra.mxu0 0
    %351 = vmatprep.mubr.bf16.mxu0 0
    %352 = vmatmul.mubr.bf16.gmra.mxu0 %v314
    %v353 = vpop.f32.mrf.mxu0
    %v354 = vadd.f32 0.0, %v353
    %v355 = vpop.f32.mrf.mxu0
    %v356 = vpop.f32.mrf.mxu0
    %v357 = vpop.f32.mrf.mxu0
    %358 = vdwg.mxu0
    %359 = vrot.lane.b32.xlu0 %v136, 120
    %v360 = vpop.permute.xlu0 %359
    %361 = vrot.lane.b32.xlu0 %v136, 88
    %v362 = vpop.permute.xlu0 %361
    %v364 = vsel %vm140, %v360, 0
    %v367 = vsel %vm140, %v362, 0
    %369 = vmatprep.subr.bf16.mxu0 0
    %370 = vmatpush1.bf16.xpose.msra.mxu0 0
    %371 = vmatprep.subr.bf16.mxu0 0
    %372 = vmatpush1.bf16.xpose.msra.mxu0 0
    %373 = vmatprep.subr.bf16.mxu0 0
    %374 = vmatpush1.bf16.xpose.msra.mxu0 0
    %375 = vmatprep.subr.bf16.mxu0 0
    %376 = vmatpush1.bf16.xpose.msra.mxu0 0
    %377 = vmatprep.subr.bf16.mxu0 0
    %378 = vmatpush1.bf16.xpose.msra.mxu0 0
    %379 = vmatprep.subr.bf16.mxu0 0
    %380 = vmatpush1.bf16.xpose.msra.mxu0 0
    %381 = vmatprep.subr.bf16.mxu0 0
    %382 = vmatpush1.bf16.xpose.msra.mxu0 0
    %383 = vmatprep.subr.bf16.mxu0 0
    %384 = vmatpush1.bf16.xpose.msra.mxu0 %v367
    %385 = vmatprep.subr.bf16.mxu0 0
    %386 = vmatpush2.bf16.xpose.msra.mxu0 0
    %387 = vmatprep.subr.bf16.mxu0 0
    %388 = vmatpush2.bf16.xpose.msra.mxu0 0
    %389 = vmatprep.subr.bf16.mxu0 0
    %390 = vmatpush2.bf16.xpose.msra.mxu0 0
    %391 = vmatprep.subr.bf16.mxu0 0
    %392 = vmatpush2.bf16.xpose.msra.mxu0 0
    %393 = vmatprep.subr.bf16.mxu0 0
    %394 = vmatpush2.bf16.xpose.msra.mxu0 0
    %395 = vmatprep.subr.bf16.mxu0 0
    %396 = vmatpush2.bf16.xpose.msra.mxu0 0
    %397 = vmatprep.subr.bf16.mxu0 0
    %398 = vmatpush2.bf16.xpose.msra.mxu0 0
    %399 = vmatprep.subr.bf16.mxu0 0
    %400 = vmatpush2.bf16.xpose.msra.mxu0 0
    %401 = vmatprep.mubr.bf16.mxu0 0
    %402 = vmatmul.mubr.bf16.gmra.mxu0 %v364
    %v403 = vpop.f32.mrf.mxu0
    %v404 = vadd.f32 0.0, %v403
    %v405 = vpop.f32.mrf.mxu0
    %v406 = vpop.f32.mrf.mxu0
    %v407 = vpop.f32.mrf.mxu0
    %408 = vdwg.mxu0
    %v409 = vsel %vm187, %v404, -inf
    %410 = vmax.xlane.f32.xlu0 %v409
    %v411 = vpop.xlane.xlu0 %410
    %v412 = vsub.f32 %v404, %v411
    %v413 = vmul.f32 %v412, 1.442695
    %v414 = vpow.pop %v413
    %v415 = vsel %vm187, %v414, 0.0
    %416 = vadd.xlane.f32.xlu0 %v415
    %v417 = vpop.xlane.xlu0 %416
    %v418 = vrcp.pop %v417
    %v419 = vmul.f32 %v414, %v418
    %v420 = vpack.c.bf16 %v419, %v419
    %421 = vrot.lane.b32.xlu0 %v136, 56
    %v422 = vpop.permute.xlu0 %421
    %v424 = vsel %vm187, %v420, 0
    %v427 = vsel %vm205, %v422, 0
    %429 = vmatprep.subr.bf16.mxu0 0
    %430 = vmatpush1.bf16.msra.mxu0 0
    %431 = vmatprep.subr.bf16.mxu0 0
    %432 = vmatpush1.bf16.msra.mxu0 0
    %433 = vmatprep.subr.bf16.mxu0 0
    %434 = vmatpush1.bf16.msra.mxu0 0
    %435 = vmatprep.subr.bf16.mxu0 0
    %436 = vmatpush1.bf16.msra.mxu0 0
    %437 = vmatprep.subr.bf16.mxu0 0
    %438 = vmatpush1.bf16.msra.mxu0 0
    %439 = vmatprep.subr.bf16.mxu0 0
    %440 = vmatpush1.bf16.msra.mxu0 0
    %441 = vmatprep.subr.bf16.mxu0 0
    %442 = vmatpush1.bf16.msra.mxu0 0
    %443 = vmatprep.subr.bf16.mxu0 0
    %444 = vmatpush1.bf16.msra.mxu0 %v427
    %445 = vmatprep.subr.bf16.mxu0 0
    %446 = vmatpush2.bf16.msra.mxu0 0
    %447 = vmatprep.subr.bf16.mxu0 0
    %448 = vmatpush2.bf16.msra.mxu0 0
    %449 = vmatprep.subr.bf16.mxu0 0
    %450 = vmatpush2.bf16.msra.mxu0 0
    %451 = vmatprep.subr.bf16.mxu0 0
    %452 = vmatpush2.bf16.msra.mxu0 0
    %453 = vmatprep.subr.bf16.mxu0 0
    %454 = vmatpush2.bf16.msra.mxu0 0
    %455 = vmatprep.subr.bf16.mxu0 0
    %456 = vmatpush2.bf16.msra.mxu0 0
    %457 = vmatprep.subr.bf16.mxu0 0
    %458 = vmatpush2.bf16.msra.mxu0 0
    %459 = vmatprep.subr.bf16.mxu0 0
    %460 = vmatpush2.bf16.msra.mxu0 0
    %461 = vmatprep.mubr.bf16.mxu0 0
    %462 = vmatmul.mubr.bf16.gmra.mxu0 %v424
    %v463 = vpop.f32.mrf.mxu0
    %v464 = vadd.f32 0.0, %v463
    %v465 = vpop.f32.mrf.mxu0
    %v466 = vpop.f32.mrf.mxu0
    %v467 = vpop.f32.mrf.mxu0
    %468 = vdwg.mxu0
    %469 = vrot.lane.b32.xlu0 %v136, 116
    %v470 = vpop.permute.xlu0 %469
    %471 = vrot.lane.b32.xlu0 %v136, 84
    %v472 = vpop.permute.xlu0 %471
    %v474 = vsel %vm140, %v470, 0
    %v477 = vsel %vm140, %v472, 0
    %479 = vmatprep.subr.bf16.mxu0 0
    %480 = vmatpush1.bf16.xpose.msra.mxu0 0
    %481 = vmatprep.subr.bf16.mxu0 0
    %482 = vmatpush1.bf16.xpose.msra.mxu0 0
    %483 = vmatprep.subr.bf16.mxu0 0
    %484 = vmatpush1.bf16.xpose.msra.mxu0 0
    %485 = vmatprep.subr.bf16.mxu0 0
    %486 = vmatpush1.bf16.xpose.msra.mxu0 0
    %487 = vmatprep.subr.bf16.mxu0 0
    %488 = vmatpush1.bf16.xpose.msra.mxu0 0
    %489 = vmatprep.subr.bf16.mxu0 0
    %490 = vmatpush1.bf16.xpose.msra.mxu0 0
    %491 = vmatprep.subr.bf16.mxu0 0
    %492 = vmatpush1.bf16.xpose.msra.mxu0 0
    %493 = vmatprep.subr.bf16.mxu0 0
    %494 = vmatpush1.bf16.xpose.msra.mxu0 %v477
    %495 = vmatprep.subr.bf16.mxu0 0
    %496 = vmatpush2.bf16.xpose.msra.mxu0 0
    %497 = vmatprep.subr.bf16.mxu0 0
    %498 = vmatpush2.bf16.xpose.msra.mxu0 0
    %499 = vmatprep.subr.bf16.mxu0 0
    %500 = vmatpush2.bf16.xpose.msra.mxu0 0
    %501 = vmatprep.subr.bf16.mxu0 0
    %502 = vmatpush2.bf16.xpose.msra.mxu0 0
    %503 = vmatprep.subr.bf16.mxu0 0
    %504 = vmatpush2.bf16.xpose.msra.mxu0 0
    %505 = vmatprep.subr.bf16.mxu0 0
    %506 = vmatpush2.bf16.xpose.msra.mxu0 0
    %507 = vmatprep.subr.bf16.mxu0 0
    %508 = vmatpush2.bf16.xpose.msra.mxu0 0
    %509 = vmatprep.subr.bf16.mxu0 0
    %510 = vmatpush2.bf16.xpose.msra.mxu0 0
    %511 = vmatprep.mubr.bf16.mxu0 0
    %512 = vmatmul.mubr.bf16.gmra.mxu0 %v474
    %v513 = vpop.f32.mrf.mxu0
    %v514 = vadd.f32 0.0, %v513
    %v515 = vpop.f32.mrf.mxu0
    %v516 = vpop.f32.mrf.mxu0
    %v517 = vpop.f32.mrf.mxu0
    %518 = vdwg.mxu0
    %v519 = vsel %vm187, %v514, -inf
    %520 = vmax.xlane.f32.xlu0 %v519
    %v521 = vpop.xlane.xlu0 %520
    %v522 = vsub.f32 %v514, %v521
    %v523 = vmul.f32 %v522, 1.442695
    %v524 = vpow.pop %v523
    %v525 = vsel %vm187, %v524, 0.0
    %526 = vadd.xlane.f32.xlu0 %v525
    %v527 = vpop.xlane.xlu0 %526
    %v528 = vrcp.pop %v527
    %v529 = vmul.f32 %v524, %v528
    %v530 = vpack.c.bf16 %v529, %v529
    %531 = vrot.lane.b32.xlu0 %v136, 52
    %v532 = vpop.permute.xlu0 %531
    %v534 = vsel %vm187, %v530, 0
    %v537 = vsel %vm205, %v532, 0
    %539 = vmatprep.subr.bf16.mxu0 0
    %540 = vmatpush1.bf16.msra.mxu0 0
    %541 = vmatprep.subr.bf16.mxu0 0
    %542 = vmatpush1.bf16.msra.mxu0 0
    %543 = vmatprep.subr.bf16.mxu0 0
    %544 = vmatpush1.bf16.msra.mxu0 0
    %545 = vmatprep.subr.bf16.mxu0 0
    %546 = vmatpush1.bf16.msra.mxu0 0
    %547 = vmatprep.subr.bf16.mxu0 0
    %548 = vmatpush1.bf16.msra.mxu0 0
    %549 = vmatprep.subr.bf16.mxu0 0
    %550 = vmatpush1.bf16.msra.mxu0 0
    %551 = vmatprep.subr.bf16.mxu0 0
    %552 = vmatpush1.bf16.msra.mxu0 0
    %553 = vmatprep.subr.bf16.mxu0 0
    %554 = vmatpush1.bf16.msra.mxu0 %v537
    %555 = vmatprep.subr.bf16.mxu0 0
    %556 = vmatpush2.bf16.msra.mxu0 0
    %557 = vmatprep.subr.bf16.mxu0 0
    %558 = vmatpush2.bf16.msra.mxu0 0
    %559 = vmatprep.subr.bf16.mxu0 0
    %560 = vmatpush2.bf16.msra.mxu0 0
    %561 = vmatprep.subr.bf16.mxu0 0
    %562 = vmatpush2.bf16.msra.mxu0 0
    %563 = vmatprep.subr.bf16.mxu0 0
    %564 = vmatpush2.bf16.msra.mxu0 0
    %565 = vmatprep.subr.bf16.mxu0 0
    %566 = vmatpush2.bf16.msra.mxu0 0
    %567 = vmatprep.subr.bf16.mxu0 0
    %568 = vmatpush2.bf16.msra.mxu0 0
    %569 = vmatprep.subr.bf16.mxu0 0
    %570 = vmatpush2.bf16.msra.mxu0 0
    %571 = vmatprep.mubr.bf16.mxu0 0
    %572 = vmatmul.mubr.bf16.gmra.mxu0 %v534
    %v573 = vpop.f32.mrf.mxu0
    %v574 = vadd.f32 0.0, %v573
    %v575 = vpop.f32.mrf.mxu0
    %v576 = vpop.f32.mrf.mxu0
    %v577 = vpop.f32.mrf.mxu0
    %578 = vdwg.mxu0
    %579 = vrot.lane.b32.xlu0 %v136, 112
    %v580 = vpop.permute.xlu0 %579
    %581 = vrot.lane.b32.xlu0 %v136, 80
    %v582 = vpop.permute.xlu0 %581
    %v584 = vsel %vm140, %v580, 0
    %v587 = vsel %vm140, %v582, 0
    %589 = vmatprep.subr.bf16.mxu0 0
    %590 = vmatpush1.bf16.xpose.msra.mxu0 0
    %591 = vmatprep.subr.bf16.mxu0 0
    %592 = vmatpush1.bf16.xpose.msra.mxu0 0
    %593 = vmatprep.subr.bf16.mxu0 0
    %594 = vmatpush1.bf16.xpose.msra.mxu0 0
    %595 = vmatprep.subr.bf16.mxu0 0
    %596 = vmatpush1.bf16.xpose.msra.mxu0 0
    %597 = vmatprep.subr.bf16.mxu0 0
    %598 = vmatpush1.bf16.xpose.msra.mxu0 0
    %599 = vmatprep.subr.bf16.mxu0 0
    %600 = vmatpush1.bf16.xpose.msra.mxu0 0
    %601 = vmatprep.subr.bf16.mxu0 0
    %602 = vmatpush1.bf16.xpose.msra.mxu0 0
    %603 = vmatprep.subr.bf16.mxu0 0
    %604 = vmatpush1.bf16.xpose.msra.mxu0 %v587
    %605 = vmatprep.subr.bf16.mxu0 0
    %606 = vmatpush2.bf16.xpose.msra.mxu0 0
    %607 = vmatprep.subr.bf16.mxu0 0
    %608 = vmatpush2.bf16.xpose.msra.mxu0 0
    %609 = vmatprep.subr.bf16.mxu0 0
    %610 = vmatpush2.bf16.xpose.msra.mxu0 0
    %611 = vmatprep.subr.bf16.mxu0 0
    %612 = vmatpush2.bf16.xpose.msra.mxu0 0
    %613 = vmatprep.subr.bf16.mxu0 0
    %614 = vmatpush2.bf16.xpose.msra.mxu0 0
    %615 = vmatprep.subr.bf16.mxu0 0
    %616 = vmatpush2.bf16.xpose.msra.mxu0 0
    %617 = vmatprep.subr.bf16.mxu0 0
    %618 = vmatpush2.bf16.xpose.msra.mxu0 0
    %619 = vmatprep.subr.bf16.mxu0 0
    %620 = vmatpush2.bf16.xpose.msra.mxu0 0
    %621 = vmatprep.mubr.bf16.mxu0 0
    %622 = vmatmul.mubr.bf16.gmra.mxu0 %v584
    %v623 = vpop.f32.mrf.mxu0
    %v624 = vadd.f32 0.0, %v623
    %v625 = vpop.f32.mrf.mxu0
    %v626 = vpop.f32.mrf.mxu0
    %v627 = vpop.f32.mrf.mxu0
    %628 = vdwg.mxu0
    %v629 = vsel %vm187, %v624, -inf
    %630 = vmax.xlane.f32.xlu0 %v629
    %v631 = vpop.xlane.xlu0 %630
    %v632 = vsub.f32 %v624, %v631
    %v633 = vmul.f32 %v632, 1.442695
    %v634 = vpow.pop %v633
    %v635 = vsel %vm187, %v634, 0.0
    %636 = vadd.xlane.f32.xlu0 %v635
    %v637 = vpop.xlane.xlu0 %636
    %v638 = vrcp.pop %v637
    %v639 = vmul.f32 %v634, %v638
    %v640 = vpack.c.bf16 %v639, %v639
    %641 = vrot.lane.b32.xlu0 %v136, 48
    %v642 = vpop.permute.xlu0 %641
    %v644 = vsel %vm187, %v640, 0
    %v647 = vsel %vm205, %v642, 0
    %649 = vmatprep.subr.bf16.mxu0 0
    %650 = vmatpush1.bf16.msra.mxu0 0
    %651 = vmatprep.subr.bf16.mxu0 0
    %652 = vmatpush1.bf16.msra.mxu0 0
    %653 = vmatprep.subr.bf16.mxu0 0
    %654 = vmatpush1.bf16.msra.mxu0 0
    %655 = vmatprep.subr.bf16.mxu0 0
    %656 = vmatpush1.bf16.msra.mxu0 0
    %657 = vmatprep.subr.bf16.mxu0 0
    %658 = vmatpush1.bf16.msra.mxu0 0
    %659 = vmatprep.subr.bf16.mxu0 0
    %660 = vmatpush1.bf16.msra.mxu0 0
    %661 = vmatprep.subr.bf16.mxu0 0
    %662 = vmatpush1.bf16.msra.mxu0 0
    %663 = vmatprep.subr.bf16.mxu0 0
    %664 = vmatpush1.bf16.msra.mxu0 %v647
    %665 = vmatprep.subr.bf16.mxu0 0
    %666 = vmatpush2.bf16.msra.mxu0 0
    %667 = vmatprep.subr.bf16.mxu0 0
    %668 = vmatpush2.bf16.msra.mxu0 0
    %669 = vmatprep.subr.bf16.mxu0 0
    %670 = vmatpush2.bf16.msra.mxu0 0
    %671 = vmatprep.subr.bf16.mxu0 0
    %672 = vmatpush2.bf16.msra.mxu0 0
    %673 = vmatprep.subr.bf16.mxu0 0
    %674 = vmatpush2.bf16.msra.mxu0 0
    %675 = vmatprep.subr.bf16.mxu0 0
    %676 = vmatpush2.bf16.msra.mxu0 0
    %677 = vmatprep.subr.bf16.mxu0 0
    %678 = vmatpush2.bf16.msra.mxu0 0
    %679 = vmatprep.subr.bf16.mxu0 0
    %680 = vmatpush2.bf16.msra.mxu0 0
    %681 = vmatprep.mubr.bf16.mxu0 0
    %682 = vmatmul.mubr.bf16.gmra.mxu0 %v644
    %v683 = vpop.f32.mrf.mxu0
    %v684 = vadd.f32 0.0, %v683
    %v685 = vpop.f32.mrf.mxu0
    %v686 = vpop.f32.mrf.mxu0
    %v687 = vpop.f32.mrf.mxu0
    %688 = vdwg.mxu0
    %689 = vrot.lane.b32.xlu0 %v136, 108
    %v690 = vpop.permute.xlu0 %689
    %691 = vrot.lane.b32.xlu0 %v136, 76
    %v692 = vpop.permute.xlu0 %691
    %v694 = vsel %vm140, %v690, 0
    %v697 = vsel %vm140, %v692, 0
    %699 = vmatprep.subr.bf16.mxu0 0
    %700 = vmatpush1.bf16.xpose.msra.mxu0 0
    %701 = vmatprep.subr.bf16.mxu0 0
    %702 = vmatpush1.bf16.xpose.msra.mxu0 0
    %703 = vmatprep.subr.bf16.mxu0 0
    %704 = vmatpush1.bf16.xpose.msra.mxu0 0
    %705 = vmatprep.subr.bf16.mxu0 0
    %706 = vmatpush1.bf16.xpose.msra.mxu0 0
    %707 = vmatprep.subr.bf16.mxu0 0
    %708 = vmatpush1.bf16.xpose.msra.mxu0 0
    %709 = vmatprep.subr.bf16.mxu0 0
    %710 = vmatpush1.bf16.xpose.msra.mxu0 0
    %711 = vmatprep.subr.bf16.mxu0 0
    %712 = vmatpush1.bf16.xpose.msra.mxu0 0
    %713 = vmatprep.subr.bf16.mxu0 0
    %714 = vmatpush1.bf16.xpose.msra.mxu0 %v697
    %715 = vmatprep.subr.bf16.mxu0 0
    %716 = vmatpush2.bf16.xpose.msra.mxu0 0
    %717 = vmatprep.subr.bf16.mxu0 0
    %718 = vmatpush2.bf16.xpose.msra.mxu0 0
    %719 = vmatprep.subr.bf16.mxu0 0
    %720 = vmatpush2.bf16.xpose.msra.mxu0 0
    %721 = vmatprep.subr.bf16.mxu0 0
    %722 = vmatpush2.bf16.xpose.msra.mxu0 0
    %723 = vmatprep.subr.bf16.mxu0 0
    %724 = vmatpush2.bf16.xpose.msra.mxu0 0
    %725 = vmatprep.subr.bf16.mxu0 0
    %726 = vmatpush2.bf16.xpose.msra.mxu0 0
    %727 = vmatprep.subr.bf16.mxu0 0
    %728 = vmatpush2.bf16.xpose.msra.mxu0 0
    %729 = vmatprep.subr.bf16.mxu0 0
    %730 = vmatpush2.bf16.xpose.msra.mxu0 0
    %731 = vmatprep.mubr.bf16.mxu0 0
    %732 = vmatmul.mubr.bf16.gmra.mxu0 %v694
    %v733 = vpop.f32.mrf.mxu0
    %v734 = vadd.f32 0.0, %v733
    %v735 = vpop.f32.mrf.mxu0
    %v736 = vpop.f32.mrf.mxu0
    %v737 = vpop.f32.mrf.mxu0
    %738 = vdwg.mxu0
    %v739 = vsel %vm187, %v734, -inf
    %740 = vmax.xlane.f32.xlu0 %v739
    %v741 = vpop.xlane.xlu0 %740
    %v742 = vsub.f32 %v734, %v741
    %v743 = vmul.f32 %v742, 1.442695
    %v744 = vpow.pop %v743
    %v745 = vsel %vm187, %v744, 0.0
    %746 = vadd.xlane.f32.xlu0 %v745
    %v747 = vpop.xlane.xlu0 %746
    %v748 = vrcp.pop %v747
    %v749 = vmul.f32 %v744, %v748
    %v750 = vpack.c.bf16 %v749, %v749
    %751 = vrot.lane.b32.xlu0 %v136, 44
    %v752 = vpop.permute.xlu0 %751
    %v754 = vsel %vm187, %v750, 0
    %v757 = vsel %vm205, %v752, 0
    %759 = vmatprep.subr.bf16.mxu0 0
    %760 = vmatpush1.bf16.msra.mxu0 0
    %761 = vmatprep.subr.bf16.mxu0 0
    %762 = vmatpush1.bf16.msra.mxu0 0
    %763 = vmatprep.subr.bf16.mxu0 0
    %764 = vmatpush1.bf16.msra.mxu0 0
    %765 = vmatprep.subr.bf16.mxu0 0
    %766 = vmatpush1.bf16.msra.mxu0 0
    %767 = vmatprep.subr.bf16.mxu0 0
    %768 = vmatpush1.bf16.msra.mxu0 0
    %769 = vmatprep.subr.bf16.mxu0 0
    %770 = vmatpush1.bf16.msra.mxu0 0
    %771 = vmatprep.subr.bf16.mxu0 0
    %772 = vmatpush1.bf16.msra.mxu0 0
    %773 = vmatprep.subr.bf16.mxu0 0
    %774 = vmatpush1.bf16.msra.mxu0 %v757
    %775 = vmatprep.subr.bf16.mxu0 0
    %776 = vmatpush2.bf16.msra.mxu0 0
    %777 = vmatprep.subr.bf16.mxu0 0
    %778 = vmatpush2.bf16.msra.mxu0 0
    %779 = vmatprep.subr.bf16.mxu0 0
    %780 = vmatpush2.bf16.msra.mxu0 0
    %781 = vmatprep.subr.bf16.mxu0 0
    %782 = vmatpush2.bf16.msra.mxu0 0
    %783 = vmatprep.subr.bf16.mxu0 0
    %784 = vmatpush2.bf16.msra.mxu0 0
    %785 = vmatprep.subr.bf16.mxu0 0
    %786 = vmatpush2.bf16.msra.mxu0 0
    %787 = vmatprep.subr.bf16.mxu0 0
    %788 = vmatpush2.bf16.msra.mxu0 0
    %789 = vmatprep.subr.bf16.mxu0 0
    %790 = vmatpush2.bf16.msra.mxu0 0
    %791 = vmatprep.mubr.bf16.mxu0 0
    %792 = vmatmul.mubr.bf16.gmra.mxu0 %v754
    %v793 = vpop.f32.mrf.mxu0
    %v794 = vadd.f32 0.0, %v793
    %v795 = vpop.f32.mrf.mxu0
    %v796 = vpop.f32.mrf.mxu0
    %v797 = vpop.f32.mrf.mxu0
    %798 = vdwg.mxu0
    %799 = vrot.lane.b32.xlu0 %v136, 104
    %v800 = vpop.permute.xlu0 %799
    %801 = vrot.lane.b32.xlu0 %v136, 72
    %v802 = vpop.permute.xlu0 %801
    %v804 = vsel %vm140, %v800, 0
    %v807 = vsel %vm140, %v802, 0
    %809 = vmatprep.subr.bf16.mxu0 0
    %810 = vmatpush1.bf16.xpose.msra.mxu0 0
    %811 = vmatprep.subr.bf16.mxu0 0
    %812 = vmatpush1.bf16.xpose.msra.mxu0 0
    %813 = vmatprep.subr.bf16.mxu0 0
    %814 = vmatpush1.bf16.xpose.msra.mxu0 0
    %815 = vmatprep.subr.bf16.mxu0 0
    %816 = vmatpush1.bf16.xpose.msra.mxu0 0
    %817 = vmatprep.subr.bf16.mxu0 0
    %818 = vmatpush1.bf16.xpose.msra.mxu0 0
    %819 = vmatprep.subr.bf16.mxu0 0
    %820 = vmatpush1.bf16.xpose.msra.mxu0 0
    %821 = vmatprep.subr.bf16.mxu0 0
    %822 = vmatpush1.bf16.xpose.msra.mxu0 0
    %823 = vmatprep.subr.bf16.mxu0 0
    %824 = vmatpush1.bf16.xpose.msra.mxu0 %v807
    %825 = vmatprep.subr.bf16.mxu0 0
    %826 = vmatpush2.bf16.xpose.msra.mxu0 0
    %827 = vmatprep.subr.bf16.mxu0 0
    %828 = vmatpush2.bf16.xpose.msra.mxu0 0
    %829 = vmatprep.subr.bf16.mxu0 0
    %830 = vmatpush2.bf16.xpose.msra.mxu0 0
    %831 = vmatprep.subr.bf16.mxu0 0
    %832 = vmatpush2.bf16.xpose.msra.mxu0 0
    %833 = vmatprep.subr.bf16.mxu0 0
    %834 = vmatpush2.bf16.xpose.msra.mxu0 0
    %835 = vmatprep.subr.bf16.mxu0 0
    %836 = vmatpush2.bf16.xpose.msra.mxu0 0
    %837 = vmatprep.subr.bf16.mxu0 0
    %838 = vmatpush2.bf16.xpose.msra.mxu0 0
    %839 = vmatprep.subr.bf16.mxu0 0
    %840 = vmatpush2.bf16.xpose.msra.mxu0 0
    %841 = vmatprep.mubr.bf16.mxu0 0
    %842 = vmatmul.mubr.bf16.gmra.mxu0 %v804
    %v843 = vpop.f32.mrf.mxu0
    %v844 = vadd.f32 0.0, %v843
    %v845 = vpop.f32.mrf.mxu0
    %v846 = vpop.f32.mrf.mxu0
    %v847 = vpop.f32.mrf.mxu0
    %848 = vdwg.mxu0
    %v849 = vsel %vm187, %v844, -inf
    %850 = vmax.xlane.f32.xlu0 %v849
    %v851 = vpop.xlane.xlu0 %850
    %v852 = vsub.f32 %v844, %v851
    %v853 = vmul.f32 %v852, 1.442695
    %v854 = vpow.pop %v853
    %v855 = vsel %vm187, %v854, 0.0
    %856 = vadd.xlane.f32.xlu0 %v855
    %v857 = vpop.xlane.xlu0 %856
    %v858 = vrcp.pop %v857
    %v859 = vmul.f32 %v854, %v858
    %v860 = vpack.c.bf16 %v859, %v859
    %861 = vrot.lane.b32.xlu0 %v136, 40
    %v862 = vpop.permute.xlu0 %861
    %v864 = vsel %vm187, %v860, 0
    %v867 = vsel %vm205, %v862, 0
    %869 = vmatprep.subr.bf16.mxu0 0
    %870 = vmatpush1.bf16.msra.mxu0 0
    %871 = vmatprep.subr.bf16.mxu0 0
    %872 = vmatpush1.bf16.msra.mxu0 0
    %873 = vmatprep.subr.bf16.mxu0 0
    %874 = vmatpush1.bf16.msra.mxu0 0
    %875 = vmatprep.subr.bf16.mxu0 0
    %876 = vmatpush1.bf16.msra.mxu0 0
    %877 = vmatprep.subr.bf16.mxu0 0
    %878 = vmatpush1.bf16.msra.mxu0 0
    %879 = vmatprep.subr.bf16.mxu0 0
    %880 = vmatpush1.bf16.msra.mxu0 0
    %881 = vmatprep.subr.bf16.mxu0 0
    %882 = vmatpush1.bf16.msra.mxu0 0
    %883 = vmatprep.subr.bf16.mxu0 0
    %884 = vmatpush1.bf16.msra.mxu0 %v867
    %885 = vmatprep.subr.bf16.mxu0 0
    %886 = vmatpush2.bf16.msra.mxu0 0
    %887 = vmatprep.subr.bf16.mxu0 0
    %888 = vmatpush2.bf16.msra.mxu0 0
    %889 = vmatprep.subr.bf16.mxu0 0
    %890 = vmatpush2.bf16.msra.mxu0 0
    %891 = vmatprep.subr.bf16.mxu0 0
    %892 = vmatpush2.bf16.msra.mxu0 0
    %893 = vmatprep.subr.bf16.mxu0 0
    %894 = vmatpush2.bf16.msra.mxu0 0
    %895 = vmatprep.subr.bf16.mxu0 0
    %896 = vmatpush2.bf16.msra.mxu0 0
    %897 = vmatprep.subr.bf16.mxu0 0
    %898 = vmatpush2.bf16.msra.mxu0 0
    %899 = vmatprep.subr.bf16.mxu0 0
    %900 = vmatpush2.bf16.msra.mxu0 0
    %901 = vmatprep.mubr.bf16.mxu0 0
    %902 = vmatmul.mubr.bf16.gmra.mxu0 %v864
    %v903 = vpop.f32.mrf.mxu0
    %v904 = vadd.f32 0.0, %v903
    %v905 = vpop.f32.mrf.mxu0
    %v906 = vpop.f32.mrf.mxu0
    %v907 = vpop.f32.mrf.mxu0
    %908 = vdwg.mxu0
    %909 = vrot.lane.b32.xlu0 %v136, 100
    %v910 = vpop.permute.xlu0 %909
    %911 = vrot.lane.b32.xlu0 %v136, 68
    %v912 = vpop.permute.xlu0 %911
    %v914 = vsel %vm140, %v910, 0
    %v917 = vsel %vm140, %v912, 0
    %919 = vmatprep.subr.bf16.mxu0 0
    %920 = vmatpush1.bf16.xpose.msra.mxu0 0
    %921 = vmatprep.subr.bf16.mxu0 0
    %922 = vmatpush1.bf16.xpose.msra.mxu0 0
    %923 = vmatprep.subr.bf16.mxu0 0
    %924 = vmatpush1.bf16.xpose.msra.mxu0 0
    %925 = vmatprep.subr.bf16.mxu0 0
    %926 = vmatpush1.bf16.xpose.msra.mxu0 0
    %927 = vmatprep.subr.bf16.mxu0 0
    %928 = vmatpush1.bf16.xpose.msra.mxu0 0
    %929 = vmatprep.subr.bf16.mxu0 0
    %930 = vmatpush1.bf16.xpose.msra.mxu0 0
    %931 = vmatprep.subr.bf16.mxu0 0
    %932 = vmatpush1.bf16.xpose.msra.mxu0 0
    %933 = vmatprep.subr.bf16.mxu0 0
    %934 = vmatpush1.bf16.xpose.msra.mxu0 %v917
    %935 = vmatprep.subr.bf16.mxu0 0
    %936 = vmatpush2.bf16.xpose.msra.mxu0 0
    %937 = vmatprep.subr.bf16.mxu0 0
    %938 = vmatpush2.bf16.xpose.msra.mxu0 0
    %939 = vmatprep.subr.bf16.mxu0 0
    %940 = vmatpush2.bf16.xpose.msra.mxu0 0
    %941 = vmatprep.subr.bf16.mxu0 0
    %942 = vmatpush2.bf16.xpose.msra.mxu0 0
    %943 = vmatprep.subr.bf16.mxu0 0
    %944 = vmatpush2.bf16.xpose.msra.mxu0 0
    %945 = vmatprep.subr.bf16.mxu0 0
    %946 = vmatpush2.bf16.xpose.msra.mxu0 0
    %947 = vmatprep.subr.bf16.mxu0 0
    %948 = vmatpush2.bf16.xpose.msra.mxu0 0
    %949 = vmatprep.subr.bf16.mxu0 0
    %950 = vmatpush2.bf16.xpose.msra.mxu0 0
    %951 = vmatprep.mubr.bf16.mxu0 0
    %952 = vmatmul.mubr.bf16.gmra.mxu0 %v914
    %v953 = vpop.f32.mrf.mxu0
    %v954 = vadd.f32 0.0, %v953
    %v955 = vpop.f32.mrf.mxu0
    %v956 = vpop.f32.mrf.mxu0
    %v957 = vpop.f32.mrf.mxu0
    %958 = vdwg.mxu0
    %v959 = vsel %vm187, %v954, -inf
    %960 = vmax.xlane.f32.xlu0 %v959
    %v961 = vpop.xlane.xlu0 %960
    %v962 = vsub.f32 %v954, %v961
    %v963 = vmul.f32 %v962, 1.442695
    %v964 = vpow.pop %v963
    %v965 = vsel %vm187, %v964, 0.0
    %966 = vadd.xlane.f32.xlu0 %v965
    %v967 = vpop.xlane.xlu0 %966
    %v968 = vrcp.pop %v967
    %v969 = vmul.f32 %v964, %v968
    %v970 = vpack.c.bf16 %v969, %v969
    %971 = vrot.lane.b32.xlu0 %v136, 36
    %v972 = vpop.permute.xlu0 %971
    %v974 = vsel %vm187, %v970, 0
    %v977 = vsel %vm205, %v972, 0
    %979 = vmatprep.subr.bf16.mxu0 0
    %980 = vmatpush1.bf16.msra.mxu0 0
    %981 = vmatprep.subr.bf16.mxu0 0
    %982 = vmatpush1.bf16.msra.mxu0 0
    %983 = vmatprep.subr.bf16.mxu0 0
    %984 = vmatpush1.bf16.msra.mxu0 0
    %985 = vmatprep.subr.bf16.mxu0 0
    %986 = vmatpush1.bf16.msra.mxu0 0
    %987 = vmatprep.subr.bf16.mxu0 0
    %988 = vmatpush1.bf16.msra.mxu0 0
    %989 = vmatprep.subr.bf16.mxu0 0
    %990 = vmatpush1.bf16.msra.mxu0 0
    %991 = vmatprep.subr.bf16.mxu0 0
    %992 = vmatpush1.bf16.msra.mxu0 0
    %993 = vmatprep.subr.bf16.mxu0 0
    %994 = vmatpush1.bf16.msra.mxu0 %v977
    %995 = vmatprep.subr.bf16.mxu0 0
    %996 = vmatpush2.bf16.msra.mxu0 0
    %997 = vmatprep.subr.bf16.mxu0 0
    %998 = vmatpush2.bf16.msra.mxu0 0
    %999 = vmatprep.subr.bf16.mxu0 0
    %1000 = vmatpush2.bf16.msra.mxu0 0
    %1001 = vmatprep.subr.bf16.mxu0 0
    %1002 = vmatpush2.bf16.msra.mxu0 0
    %1003 = vmatprep.subr.bf16.mxu0 0
    %1004 = vmatpush2.bf16.msra.mxu0 0
    %1005 = vmatprep.subr.bf16.mxu0 0
    %1006 = vmatpush2.bf16.msra.mxu0 0
    %1007 = vmatprep.subr.bf16.mxu0 0
    %1008 = vmatpush2.bf16.msra.mxu0 0
    %1009 = vmatprep.subr.bf16.mxu0 0
    %1010 = vmatpush2.bf16.msra.mxu0 0
    %1011 = vmatprep.mubr.bf16.mxu0 0
    %1012 = vmatmul.mubr.bf16.gmra.mxu0 %v974
    %v1013 = vpop.f32.mrf.mxu0
    %v1014 = vadd.f32 0.0, %v1013
    %v1015 = vpop.f32.mrf.mxu0
    %v1016 = vpop.f32.mrf.mxu0
    %v1017 = vpop.f32.mrf.mxu0
    %1018 = vdwg.mxu0
    %1020 = vrot.lane.b32.xlu0 %v354, 4
    %v1021 = vpop.permute.xlu0 %1020
    %1024 = vrot.lane.b32.xlu0 %v464, 8
    %v1025 = vpop.permute.xlu0 %1024
    %1028 = vrot.lane.b32.xlu0 %v574, 12
    %v1029 = vpop.permute.xlu0 %1028
    %1032 = vrot.lane.b32.xlu0 %v684, 16
    %v1033 = vpop.permute.xlu0 %1032
    %1036 = vrot.lane.b32.xlu0 %v794, 20
    %v1037 = vpop.permute.xlu0 %1036
    %1040 = vrot.lane.b32.xlu0 %v904, 24
    %v1041 = vpop.permute.xlu0 %1040
    %1044 = vrot.lane.b32.xlu0 %v1014, 28
    %v1045 = vpop.permute.xlu0 %1044
    %v1047 = vsel %vm140, %v244, %v1021
    %v1048 = vsel %vm187, %v1047, %v1025
    %vm1049 = vcmask 97280
    %v1050 = vsel %vm1049, %v1048, %v1029
    %vm1051 = vcmask 130048
    %v1052 = vsel %vm1051, %v1050, %v1033
    %vm1053 = vcmask 162816
    %v1054 = vsel %vm1053, %v1052, %v1037
    %vm1055 = vcmask 195584
    %v1056 = vsel %vm1055, %v1054, %v1041
    %vm1057 = vcmask 228352
    %v1058 = vsel %vm1057, %v1056, %v1045
    %v1059 = vpack.c.bf16 %v1058, %v1058
    %v1061 = vlaneseq
    %v1062 = vshrl.u32 %v1061, 7
    %v1063 = vsub.s32 0, %v1062
    %v1064 = vrot.slane %v72, %v1063
    %v1070 = vunpack.c.l.b16 %v68
    %v1071 = vunpack.c.l.b16 %v69
    %v1072 = vunpack.c.l.b16 %v70
    %v1073 = vunpack.c.l.b16 %v71
    %v1074 = vpack.c.b16 %v1071, %v1070
    %v1075 = vpack.c.b16 %v1073, %v1072
    %v1079 = vsel %vm92, %v1059, 0
    %1081 = vmatprep.subr.bf16.mxu0 0
    %1082 = vmatpush1.bf16.msra.mxu0 0
    %1083 = vmatprep.subr.bf16.mxu0 0
    %1084 = vmatpush1.bf16.msra.mxu0 0
    %1085 = vmatprep.subr.bf16.mxu0 0
    %1086 = vmatpush1.bf16.msra.mxu0 0
    %1087 = vmatprep.subr.bf16.mxu0 0
    %1088 = vmatpush1.bf16.msra.mxu0 0
    %1089 = vmatprep.subr.bf16.mxu0 0
    %1090 = vmatpush1.bf16.msra.mxu0 0
    %1091 = vmatprep.subr.bf16.mxu0 0
    %1092 = vmatpush1.bf16.msra.mxu0 0
    %1093 = vmatprep.subr.bf16.mxu0 0
    %1094 = vmatpush1.bf16.msra.mxu0 %v1075
    %1095 = vmatprep.subr.bf16.mxu0 0
    %1096 = vmatpush1.bf16.msra.mxu0 %v1074
    %1097 = vmatprep.subr.bf16.mxu0 0
    %1098 = vmatpush2.bf16.msra.mxu0 0
    %1099 = vmatprep.subr.bf16.mxu0 0
    %1100 = vmatpush2.bf16.msra.mxu0 0
    %1101 = vmatprep.subr.bf16.mxu0 0
    %1102 = vmatpush2.bf16.msra.mxu0 0
    %1103 = vmatprep.subr.bf16.mxu0 0
    %1104 = vmatpush2.bf16.msra.mxu0 0
    %1105 = vmatprep.subr.bf16.mxu0 0
    %1106 = vmatpush2.bf16.msra.mxu0 0
    %1107 = vmatprep.subr.bf16.mxu0 0
    %1108 = vmatpush2.bf16.msra.mxu0 0
    %1109 = vmatprep.subr.bf16.mxu0 0
    %1110 = vmatpush2.bf16.msra.mxu0 0
    %1111 = vmatprep.subr.bf16.mxu0 0
    %1112 = vmatpush2.bf16.msra.mxu0 0
    %1113 = vmatprep.mubr.bf16.mxu0 0
    %1114 = vmatmul.mubr.bf16.gmra.mxu0 %v1079
    %v1115 = vpop.f32.mrf.mxu0
    %v1116 = vadd.f32 %v1064, %v1115
    %v1117 = vpop.f32.mrf.mxu0
    %v1118 = vpop.f32.mrf.mxu0
    %v1119 = vpop.f32.mrf.mxu0
    %1120 = vdwg.mxu0
    %v1121 = vadd.f32 %v62, %v1116
    %v1122 = vld [vmem:[#allocation4] sm:$0x1]
    %v1123 = vld [vmem:[#allocation6] sm:$0x1]
    %v1124 = vsel %vm92, %v1121, 0.0
    %1125 = vadd.xlane.f32.xlu0 %v1124
    %v1126 = vpop.xlane.xlu0 %1125
    %v1127 = vrcp.pop 32.0
    %v1128 = vmul.f32 %v1126, %v1127
    %v1129 = vsub.f32 %v1121, %v1128
    %v1130 = vmul.f32 %v1129, %v1129
    %v1131 = vsel %vm92, %v1130, 0.0
    %1132 = vadd.xlane.f32.xlu0 %v1131
    %v1133 = vpop.xlane.xlu0 %1132
    %v1134 = vmul.f32 %v1133, %v1127
    %v1135 = vadd.f32 %v1134, 1e-05
    %v1136 = vrsqrt.pop %v1135
    %v1137 = vmul.f32 %v1129, %v1136
    %v1139 = vlaneseq
    %v1140 = vshrl.u32 %v1139, 7
    %v1141 = vsub.s32 0, %v1140
    %v1142 = vrot.slane %v1122, %v1141
    %v1144 = vmul.f32 %v1137, %v1142
    %v1146 = vlaneseq
    %v1147 = vshrl.u32 %v1146, 7
    %v1148 = vsub.s32 0, %v1147
    %v1149 = vrot.slane %v1123, %v1148
    %v1151 = vadd.f32 %v1144, %v1149
    %1152 = vst.msk [vmem:[%s7] sm:$0xff] %vm92, %v1151
    // Predicated region
    $region42: #{boq_block_forward.2} parent=1 // pred_check
      _
    $region43: #{boq_block_forward.2} parent=1 // pred_check_branch
      %1154 = sbr.rel (0) target = $region45
    $region44: #{boq_block_forward.2} parent=1 // pred_region
      _
    $region45: #{boq_block_forward.2} parent=1 // pred_fallthru
      _
    // Predicated region
    $region46: #{boq_block_forward.2} parent=1 // pred_check
      _
    $region47: #{boq_block_forward.2} parent=1 // pred_check_branch
      %1156 = sbr.rel (0) target = $region49
    $region48: #{boq_block_forward.2} parent=1 // pred_region
      _
    $region49: #{boq_block_forward.2} parent=1 // pred_fallthru
      _
    %1157 = vsyncpa [#allocation3], 1
    %1158 = vsyncpa [#allocation5], 1

// kernel: boq_block_forward.3
$region0: #{boq_block_forward.3}
  #allocation0 [shape = 'u32[]', space=smem, size = 0x4, offset = 0x4, fixed_abs, tag = 'smem constant byte address 0x4 - core index']
  #allocation1 [shape = 'u32[144,128]{1,0:T(1,128)}', space=vmem, size = 0x12000, scoped, tag = 'internal scratch']
  %s0 = inlined_call_operand.vmem [shape: f32[2,16,32], index: 0, kind: input, shape index: {}]
  %s1 = inlined_call_operand.vmem [shape: f32[1,8,32], index: 1, kind: input, shape index: {}]
  %s2 = inlined_call_operand.vmem [shape: bf16[32,96], index: 2, kind: input, shape index: {}]
  %s3 = inlined_call_operand.hbm [shape: f32[1,96], index: 3, kind: input, shape index: {}]
  %s4 = inlined_call_operand.vmem [shape: bf16[32,32], index: 4, kind: input, shape index: {}]
  %s5 = inlined_call_operand.hbm [shape: f32[1,32], index: 5, kind: input, shape index: {}]
  %s6 = inlined_call_operand.vmem [shape: bf16[32,128], index: 6, kind: input, shape index: {}]
  %s7 = inlined_call_operand.hbm [shape: f32[1,128], index: 7, kind: input, shape index: {}]
  %s8 = inlined_call_operand.vmem [shape: bf16[128,32], index: 8, kind: input, shape index: {}]
  %s9 = inlined_call_operand.hbm [shape: f32[1,32], index: 9, kind: input, shape index: {}]
  %s10 = inlined_call_operand.vmem [shape: bf16[32,96], index: 10, kind: input, shape index: {}]
  %s11 = inlined_call_operand.hbm [shape: f32[1,96], index: 11, kind: input, shape index: {}]
  %s12 = inlined_call_operand.vmem [shape: bf16[32,32], index: 12, kind: input, shape index: {}]
  %s13 = inlined_call_operand.hbm [shape: f32[1,32], index: 13, kind: input, shape index: {}]
  %s14 = inlined_call_operand.vmem [shape: f32[2,1,32], index: 14, kind: input, shape index: {}]
  %s15 = inlined_call_operand.vmem [shape: f32[2,1,32], index: 15, kind: input, shape index: {}]
  %s16 = inlined_call_operand.hbm [shape: f32[1,32], index: 16, kind: input, shape index: {}]
  %s17 = inlined_call_operand.hbm [shape: f32[1,32], index: 17, kind: input, shape index: {}]
  %s18 = inlined_call_operand.hbm [shape: f32[2,16,32], index: 18, kind: output, shape index: {0}]
  %s19 = inlined_call_operand.hbm [shape: f32[2,8,32], index: 19, kind: output, shape index: {1}]
  %s20 = inlined_call_operand.hbm [shape: f32[2,8,16], index: 20, kind: output, shape index: {2}]
  %21 = xla_tuple %s18, %s19, %s20
  %s22 = sld [smem:[#allocation0]]
  $region153: #{boq_block_forward.3} parent=0
    _
  %s24 = ssub.s32 1, %s22
  %s25 = scalar_select 0, %s24, %s22
  $region1: #{boq_block_forward.3} parent=0
    #allocation2 [shape = 'u8[512]{0}', space=vmem, size = 0x400, scoped, tag = 'input window, operand 3, single buffered']
    #allocation3 [shape = 's32[2]{0}', space=sflag, size = 0x8, scoped, tag = 'scoped memory for boq_block_forward.3']
    #allocation4 [shape = 's32[2]{0}', space=sflag, size = 0x8, scoped, tag = 'scoped memory for boq_block_forward.3']
    #allocation5 [shape = 'u8[512]{0}', space=vmem, size = 0x400, scoped, tag = 'input window, operand 5, single buffered']
    #allocation6 [shape = 's32[1]{0}', space=sflag, size = 0x4, scoped, tag = 'scoped memory for boq_block_forward.3']
    #allocation7 [shape = 'u8[512]{0}', space=vmem, size = 0x400, scoped, tag = 'input window, operand 7, single buffered']
    #allocation8 [shape = 'u8[512]{0}', space=vmem, size = 0x400, scoped, tag = 'input window, operand 9, single buffered']
    #allocation9 [shape = 's32[1]{0}', space=sflag, size = 0x4, scoped, tag = 'scoped memory for boq_block_forward.3']
    #allocation10 [shape = 'u8[512]{0}', space=vmem, size = 0x400, scoped, tag = 'input window, operand 11, single buffered']
    #allocation11 [shape = 'u8[512]{0}', space=vmem, size = 0x400, scoped, tag = 'input window, operand 13, single buffered']
    #allocation12 [shape = 's32[1]{0}', space=sflag, size = 0x4, scoped, tag = 'scoped memory for boq_block_forward.3']
    #allocation13 [shape = 'u8[512]{0}', space=vmem, size = 0x400, scoped, tag = 'input window, operand 16, single buffered']
    #allocation14 [shape = 'u8[512]{0}', space=vmem, size = 0x400, scoped, tag = 'input window, operand 17, single buffered']
    #allocation15 [shape = 's32[1]{0}', space=sflag, size = 0x4, scoped, tag = 'scoped memory for boq_block_forward.3']
    #allocation16 [shape = 'u8[16384]{0}', space=vmem, size = 0x4000, scoped, tag = 'output window, operand 0']
    #allocation17 [shape = 'u8[8192]{0}', space=vmem, size = 0x2000, scoped, tag = 'output window, operand 1']
    #allocation18 [shape = 's32[2]{0}', space=sflag, size = 0x8, scoped, tag = 'scoped memory for boq_block_forward.3']
    #allocation19 [shape = 'u8[8192]{0}', space=vmem, size = 0x2000, scoped, tag = 'output window, operand 2']
    %26 = vsyncpa [#allocation3], 0
    %27 = vsyncpa [#allocation6], 0
    %28 = vsyncpa [#allocation9], 0
    %29 = vsyncpa [#allocation12], 0
    %30 = vsyncpa [#allocation15], 0
    %31 = vsyncpa [#allocation4], 0
    %s32 = scalar_lea.sflag [#allocation4], 1
    %33 = vsyncpa %s32, 0
    %34 = vsyncpa [#allocation18], 0
    %s35 = scalar_lea.sflag [#allocation18], 1
    %36 = vsyncpa %s35, 0
    loop: start=0, step=1, limit=4
    $region2: #{boq_block_forward.3} parent=1 // loop_pre_header
      _
    $region3: #{boq_block_forward.3} parent=1 // loop_header
      %s38 = sphi 0, %s42
      %p39 = scmp.ge.s32.totalorder %s38, 4
      %s48 = sphi 0, %s50
      %s51 = sphi 0, %s48
      %s52 = sphi 0, %s51
      %s68 = sphi 0, %s52
      %s72 = sphi 0, %s72
      %s74 = sphi 0, %s72
      %s75 = sphi 0, %s74
      %s89 = sphi 0, %s75
      %s93 = sphi 0, %s93
      %s95 = sphi 0, %s93
      %s96 = sphi 0, %s95
      %s110 = sphi 0, %s96
      %s114 = sphi 0, %s114
      %s116 = sphi 0, %s114
      %s117 = sphi 0, %s116
      %s131 = sphi 0, %s117
      %s135 = sphi 0, %s135
      %s137 = sphi 0, %s135
      %s138 = sphi 0, %s137
      %s152 = sphi 0, %s138
      %s156 = sphi 0, %s156
      %s158 = sphi 0, %s156
      %s159 = sphi 0, %s158
      %s173 = sphi 0, %s159
      %s177 = sphi 0, %s177
      %s179 = sphi 0, %s177
      %s180 = sphi 0, %s179
      %s194 = sphi 0, %s180
      %s198 = sphi 0, %s198
      %s200 = sphi 0, %s198
      %s201 = sphi 0, %s200
      %s215 = sphi 0, %s201
      %s219 = sphi 0, %s219
      %s221 = sphi 0, %s219
      %s222 = sphi 0, %s221
      %s236 = sphi 0, %s222
      %s240 = sphi 0, %s240
      %s242 = sphi 0, %s240
      %s243 = sphi 0, %s242
      %s257 = sphi 0, %s243
      %s261 = sphi 0, %s261
      %s263 = sphi 0, %s261
      %s264 = sphi 0, %s263
      %s278 = sphi 0, %s264
      %s282 = sphi 0, %s282
      %s284 = sphi 0, %s282
      %s285 = sphi 0, %s284
      %s299 = sphi 0, %s285
      %s303 = sphi 0, %s303
      %s305 = sphi 0, %s303
      %s306 = sphi 0, %s305
      %s320 = sphi 0, %s306
      %s324 = sphi 0, %s324
      %s326 = sphi 0, %s324
      %s327 = sphi 0, %s326
      %s341 = sphi 0, %s327
      %s345 = sphi 0, %s345
      %s347 = sphi 0, %s345
      %s348 = sphi 0, %s347
      %s362 = sphi 0, %s348
      %s366 = sphi 0, %s366
      %s368 = sphi 0, %s366
      %s369 = sphi 0, %s368
      %s383 = sphi 0, %s369
      %s387 = sphi 0, %s387
      %s389 = sphi 0, %s387
      %s390 = sphi 0, %s389
      %s404 = sphi 0, %s390
      %s408 = sphi 0, %s408
      %s410 = sphi 0, %s408
      %s411 = sphi 0, %s410
      %s425 = sphi 0, %s411
      %s431 = sphi 0, %s433
      %s434 = sphi 0, %s431
      %s435 = sphi 0, %s434
      %s451 = sphi 0, %s435
      %s457 = sphi 0, %s459
      %s460 = sphi 0, %s457
      %s461 = sphi 0, %s460
      %s477 = sphi 0, %s461
      %s483 = sphi 0, %s485
      %s486 = sphi 0, %s483
      %s487 = sphi 0, %s486
      %s503 = sphi 0, %s487
    $region4: #{boq_block_forward.3} parent=1 // loop_header_branch
      %41 = sbr.rel (%p39) target = $region8
    $region5: #{boq_block_forward.3} parent=1 // loop_body
      %s43 = ssub.s32 %s38, 1
      %s44 = ssub.s32 %s38, 2
      %s45 = sadd.s32 %s38, 1
      %s46 = ssub.s32 %s38, %s45
      %p47 = scmp.eq.s32.totalorder %s46, 0
      %s49 = sadd.s32 %s48, 1
      %s50 = scalar_select %p47, %s48, %s49
      %p53 = pneg %p47
      %p54 = scmp.eq.s32.totalorder %s38, 1
      %p55 = por %p53, %p54
      %p56 = scmp.ne.s32.totalorder %s48, %s51
      %p57 = scmp.eq.s32.totalorder %s38, 0
      %p58 = por %p56, %p57
      %p59 = scmp.ne.s32.totalorder %s48, %s51
      %p60 = scmp.eq.s32.totalorder %s43, 1
      %p61 = por %p59, %p60
      %p62 = scmp.ne.s32.totalorder %s51, %s52
      %p63 = scmp.eq.s32.totalorder %s43, 0
      %p64 = por %p62, %p63
      %p65 = scmp.ne.s32.totalorder %s51, %s52
      %p66 = scmp.eq.s32.totalorder %s44, 1
      %p67 = por %p65, %p66
      %p69 = scmp.ne.s32.totalorder %s52, %s68
      %p70 = scmp.eq.s32.totalorder %s44, 0
      %p71 = por %p69, %p70
      %s73 = sadd.s32 %s72, 1
      %p76 = scmp.eq.s32.totalorder %s38, 1
      %p77 = scmp.ne.s32.totalorder %s72, %s74
      %p78 = scmp.eq.s32.totalorder %s38, 0
      %p79 = por %p77, %p78
      %p80 = scmp.ne.s32.totalorder %s72, %s74
      %p81 = scmp.eq.s32.totalorder %s43, 1
      %p82 = por %p80, %p81
      %p83 = scmp.ne.s32.totalorder %s74, %s75
      %p84 = scmp.eq.s32.totalorder %s43, 0
      %p85 = por %p83, %p84
      %p86 = scmp.ne.s32.totalorder %s74, %s75
      %p87 = scmp.eq.s32.totalorder %s44, 1
      %p88 = por %p86, %p87
      %p90 = scmp.ne.s32.totalorder %s75, %s89
      %p91 = scmp.eq.s32.totalorder %s44, 0
      %p92 = por %p90, %p91
      %s94 = sadd.s32 %s93, 1
      %p97 = scmp.eq.s32.totalorder %s38, 1
      %p98 = scmp.ne.s32.totalorder %s93, %s95
      %p99 = scmp.eq.s32.totalorder %s38, 0
      %p100 = por %p98, %p99
      %p101 = scmp.ne.s32.totalorder %s93, %s95
      %p102 = scmp.eq.s32.totalorder %s43, 1
      %p103 = por %p101, %p102
      %p104 = scmp.ne.s32.totalorder %s95, %s96
      %p105 = scmp.eq.s32.totalorder %s43, 0
      %p106 = por %p104, %p105
      %p107 = scmp.ne.s32.totalorder %s95, %s96
      %p108 = scmp.eq.s32.totalorder %s44, 1
      %p109 = por %p107, %p108
      %p111 = scmp.ne.s32.totalorder %s96, %s110
      %p112 = scmp.eq.s32.totalorder %s44, 0
      %p113 = por %p111, %p112
      %s115 = sadd.s32 %s114, 1
      %p118 = scmp.eq.s32.totalorder %s38, 1
      %p119 = scmp.ne.s32.totalorder %s114, %s116
      %p120 = scmp.eq.s32.totalorder %s38, 0
      %p121 = por %p119, %p120
      %p122 = scmp.ne.s32.totalorder %s114, %s116
      %p123 = scmp.eq.s32.totalorder %s43, 1
      %p124 = por %p122, %p123
      %p125 = scmp.ne.s32.totalorder %s116, %s117
      %p126 = scmp.eq.s32.totalorder %s43, 0
      %p127 = por %p125, %p126
      %p128 = scmp.ne.s32.totalorder %s116, %s117
      %p129 = scmp.eq.s32.totalorder %s44, 1
      %p130 = por %p128, %p129
      %p132 = scmp.ne.s32.totalorder %s117, %s131
      %p133 = scmp.eq.s32.totalorder %s44, 0
      %p134 = por %p132, %p133
      %s136 = sadd.s32 %s135, 1
      %p139 = scmp.eq.s32.totalorder %s38, 1
      %p140 = scmp.ne.s32.totalorder %s135, %s137
      %p141 = scmp.eq.s32.totalorder %s38, 0
      %p142 = por %p140, %p141
      %p143 = scmp.ne.s32.totalorder %s135, %s137
      %p144 = scmp.eq.s32.totalorder %s43, 1
      %p145 = por %p143, %p144
      %p146 = scmp.ne.s32.totalorder %s137, %s138
      %p147 = scmp.eq.s32.totalorder %s43, 0
      %p148 = por %p146, %p147
      %p149 = scmp.ne.s32.totalorder %s137, %s138
      %p150 = scmp.eq.s32.totalorder %s44, 1
      %p151 = por %p149, %p150
      %p153 = scmp.ne.s32.totalorder %s138, %s152
      %p154 = scmp.eq.s32.totalorder %s44, 0
      %p155 = por %p153, %p154
      %s157 = sadd.s32 %s156, 1
      %p160 = scmp.eq.s32.totalorder %s38, 1
      %p161 = scmp.ne.s32.totalorder %s156, %s158
      %p162 = scmp.eq.s32.totalorder %s38, 0
      %p163 = por %p161, %p162
      %p164 = scmp.ne.s32.totalorder %s156, %s158
      %p165 = scmp.eq.s32.totalorder %s43, 1
      %p166 = por %p164, %p165
      %p167 = scmp.ne.s32.totalorder %s158, %s159
      %p168 = scmp.eq.s32.totalorder %s43, 0
      %p169 = por %p167, %p168
      %p170 = scmp.ne.s32.totalorder %s158, %s159
      %p171 = scmp.eq.s32.totalorder %s44, 1
      %p172 = por %p170, %p171
      %p174 = scmp.ne.s32.totalorder %s159, %s173
      %p175 = scmp.eq.s32.totalorder %s44, 0
      %p176 = por %p174, %p175
      %s178 = sadd.s32 %s177, 1
      %p181 = scmp.eq.s32.totalorder %s38, 1
      %p182 = scmp.ne.s32.totalorder %s177, %s179
      %p183 = scmp.eq.s32.totalorder %s38, 0
      %p184 = por %p182, %p183
      %p185 = scmp.ne.s32.totalorder %s177, %s179
      %p186 = scmp.eq.s32.totalorder %s43, 1
      %p187 = por %p185, %p186
      %p188 = scmp.ne.s32.totalorder %s179, %s180
      %p189 = scmp.eq.s32.totalorder %s43, 0
      %p190 = por %p188, %p189
      %p191 = scmp.ne.s32.totalorder %s179, %s180
      %p192 = scmp.eq.s32.totalorder %s44, 1
      %p193 = por %p191, %p192
      %p195 = scmp.ne.s32.totalorder %s180, %s194
      %p196 = scmp.eq.s32.totalorder %s44, 0
      %p197 = por %p195, %p196
      %s199 = sadd.s32 %s198, 1
      %p202 = scmp.eq.s32.totalorder %s38, 1
      %p203 = scmp.ne.s32.totalorder %s198, %s200
      %p204 = scmp.eq.s32.totalorder %s38, 0
      %p205 = por %p203, %p204
      %p206 = scmp.ne.s32.totalorder %s198, %s200
      %p207 = scmp.eq.s32.totalorder %s43, 1
      %p208 = por %p206, %p207
      %p209 = scmp.ne.s32.totalorder %s200, %s201
      %p210 = scmp.eq.s32.totalorder %s43, 0
      %p211 = por %p209, %p210
      %p212 = scmp.ne.s32.totalorder %s200, %s201
      %p213 = scmp.eq.s32.totalorder %s44, 1
      %p214 = por %p212, %p213
      %p216 = scmp.ne.s32.totalorder %s201, %s215
      %p217 = scmp.eq.s32.totalorder %s44, 0
      %p218 = por %p216, %p217
      %s220 = sadd.s32 %s219, 1
      %p223 = scmp.eq.s32.totalorder %s38, 1
      %p224 = scmp.ne.s32.totalorder %s219, %s221
      %p225 = scmp.eq.s32.totalorder %s38, 0
      %p226 = por %p224, %p225
      %p227 = scmp.ne.s32.totalorder %s219, %s221
      %p228 = scmp.eq.s32.totalorder %s43, 1
      %p229 = por %p227, %p228
      %p230 = scmp.ne.s32.totalorder %s221, %s222
      %p231 = scmp.eq.s32.totalorder %s43, 0
      %p232 = por %p230, %p231
      %p233 = scmp.ne.s32.totalorder %s221, %s222
      %p234 = scmp.eq.s32.totalorder %s44, 1
      %p235 = por %p233, %p234
      %p237 = scmp.ne.s32.totalorder %s222, %s236
      %p238 = scmp.eq.s32.totalorder %s44, 0
      %p239 = por %p237, %p238
      %s241 = sadd.s32 %s240, 1
      %p244 = scmp.eq.s32.totalorder %s38, 1
      %p245 = scmp.ne.s32.totalorder %s240, %s242
      %p246 = scmp.eq.s32.totalorder %s38, 0
      %p247 = por %p245, %p246
      %p248 = scmp.ne.s32.totalorder %s240, %s242
      %p249 = scmp.eq.s32.totalorder %s43, 1
      %p250 = por %p248, %p249
      %p251 = scmp.ne.s32.totalorder %s242, %s243
      %p252 = scmp.eq.s32.totalorder %s43, 0
      %p253 = por %p251, %p252
      %p254 = scmp.ne.s32.totalorder %s242, %s243
      %p255 = scmp.eq.s32.totalorder %s44, 1
      %p256 = por %p254, %p255
      %p258 = scmp.ne.s32.totalorder %s243, %s257
      %p259 = scmp.eq.s32.totalorder %s44, 0
      %p260 = por %p258, %p259
      %s262 = sadd.s32 %s261, 1
      %p265 = scmp.eq.s32.totalorder %s38, 1
      %p266 = scmp.ne.s32.totalorder %s261, %s263
      %p267 = scmp.eq.s32.totalorder %s38, 0
      %p268 = por %p266, %p267
      %p269 = scmp.ne.s32.totalorder %s261, %s263
      %p270 = scmp.eq.s32.totalorder %s43, 1
      %p271 = por %p269, %p270
      %p272 = scmp.ne.s32.totalorder %s263, %s264
      %p273 = scmp.eq.s32.totalorder %s43, 0
      %p274 = por %p272, %p273
      %p275 = scmp.ne.s32.totalorder %s263, %s264
      %p276 = scmp.eq.s32.totalorder %s44, 1
      %p277 = por %p275, %p276
      %p279 = scmp.ne.s32.totalorder %s264, %s278
      %p280 = scmp.eq.s32.totalorder %s44, 0
      %p281 = por %p279, %p280
      %s283 = sadd.s32 %s282, 1
      %p286 = scmp.eq.s32.totalorder %s38, 1
      %p287 = scmp.ne.s32.totalorder %s282, %s284
      %p288 = scmp.eq.s32.totalorder %s38, 0
      %p289 = por %p287, %p288
      %p290 = scmp.ne.s32.totalorder %s282, %s284
      %p291 = scmp.eq.s32.totalorder %s43, 1
      %p292 = por %p290, %p291
      %p293 = scmp.ne.s32.totalorder %s284, %s285
      %p294 = scmp.eq.s32.totalorder %s43, 0
      %p295 = por %p293, %p294
      %p296 = scmp.ne.s32.totalorder %s284, %s285
      %p297 = scmp.eq.s32.totalorder %s44, 1
      %p298 = por %p296, %p297
      %p300 = scmp.ne.s32.totalorder %s285, %s299
      %p301 = scmp.eq.s32.totalorder %s44, 0
      %p302 = por %p300, %p301
      %s304 = sadd.s32 %s303, 1
      %p307 = scmp.eq.s32.totalorder %s38, 1
      %p308 = scmp.ne.s32.totalorder %s303, %s305
      %p309 = scmp.eq.s32.totalorder %s38, 0
      %p310 = por %p308, %p309
      %p311 = scmp.ne.s32.totalorder %s303, %s305
      %p312 = scmp.eq.s32.totalorder %s43, 1
      %p313 = por %p311, %p312
      %p314 = scmp.ne.s32.totalorder %s305, %s306
      %p315 = scmp.eq.s32.totalorder %s43, 0
      %p316 = por %p314, %p315
      %p317 = scmp.ne.s32.totalorder %s305, %s306
      %p318 = scmp.eq.s32.totalorder %s44, 1
      %p319 = por %p317, %p318
      %p321 = scmp.ne.s32.totalorder %s306, %s320
      %p322 = scmp.eq.s32.totalorder %s44, 0
      %p323 = por %p321, %p322
      %s325 = sadd.s32 %s324, 1
      %p328 = scmp.eq.s32.totalorder %s38, 1
      %p329 = scmp.ne.s32.totalorder %s324, %s326
      %p330 = scmp.eq.s32.totalorder %s38, 0
      %p331 = por %p329, %p330
      %p332 = scmp.ne.s32.totalorder %s324, %s326
      %p333 = scmp.eq.s32.totalorder %s43, 1
      %p334 = por %p332, %p333
      %p335 = scmp.ne.s32.totalorder %s326, %s327
      %p336 = scmp.eq.s32.totalorder %s43, 0
      %p337 = por %p335, %p336
      %p338 = scmp.ne.s32.totalorder %s326, %s327
      %p339 = scmp.eq.s32.totalorder %s44, 1
      %p340 = por %p338, %p339
      %p342 = scmp.ne.s32.totalorder %s327, %s341
      %p343 = scmp.eq.s32.totalorder %s44, 0
      %p344 = por %p342, %p343
      %s346 = sadd.s32 %s345, 1
      %p349 = scmp.eq.s32.totalorder %s38, 1
      %p350 = scmp.ne.s32.totalorder %s345, %s347
      %p351 = scmp.eq.s32.totalorder %s38, 0
      %p352 = por %p350, %p351
      %p353 = scmp.ne.s32.totalorder %s345, %s347
      %p354 = scmp.eq.s32.totalorder %s43, 1
      %p355 = por %p353, %p354
      %p356 = scmp.ne.s32.totalorder %s347, %s348
      %p357 = scmp.eq.s32.totalorder %s43, 0
      %p358 = por %p356, %p357
      %p359 = scmp.ne.s32.totalorder %s347, %s348
      %p360 = scmp.eq.s32.totalorder %s44, 1
      %p361 = por %p359, %p360
      %p363 = scmp.ne.s32.totalorder %s348, %s362
      %p364 = scmp.eq.s32.totalorder %s44, 0
      %p365 = por %p363, %p364
      %s367 = sadd.s32 %s366, 1
      %p370 = scmp.eq.s32.totalorder %s38, 1
      %p371 = scmp.ne.s32.totalorder %s366, %s368
      %p372 = scmp.eq.s32.totalorder %s38, 0
      %p373 = por %p371, %p372
      %p374 = scmp.ne.s32.totalorder %s366, %s368
      %p375 = scmp.eq.s32.totalorder %s43, 1
      %p376 = por %p374, %p375
      %p377 = scmp.ne.s32.totalorder %s368, %s369
      %p378 = scmp.eq.s32.totalorder %s43, 0
      %p379 = por %p377, %p378
      %p380 = scmp.ne.s32.totalorder %s368, %s369
      %p381 = scmp.eq.s32.totalorder %s44, 1
      %p382 = por %p380, %p381
      %p384 = scmp.ne.s32.totalorder %s369, %s383
      %p385 = scmp.eq.s32.totalorder %s44, 0
      %p386 = por %p384, %p385
      %s388 = sadd.s32 %s387, 1
      %p391 = scmp.eq.s32.totalorder %s38, 1
      %p392 = scmp.ne.s32.totalorder %s387, %s389
      %p393 = scmp.eq.s32.totalorder %s38, 0
      %p394 = por %p392, %p393
      %p395 = scmp.ne.s32.totalorder %s387, %s389
      %p396 = scmp.eq.s32.totalorder %s43, 1
      %p397 = por %p395, %p396
      %p398 = scmp.ne.s32.totalorder %s389, %s390
      %p399 = scmp.eq.s32.totalorder %s43, 0
      %p400 = por %p398, %p399
      %p401 = scmp.ne.s32.totalorder %s389, %s390
      %p402 = scmp.eq.s32.totalorder %s44, 1
      %p403 = por %p401, %p402
      %p405 = scmp.ne.s32.totalorder %s390, %s404
      %p406 = scmp.eq.s32.totalorder %s44, 0
      %p407 = por %p405, %p406
      %s409 = sadd.s32 %s408, 1
      %p412 = scmp.eq.s32.totalorder %s38, 1
      %p413 = scmp.ne.s32.totalorder %s408, %s410
      %p414 = scmp.eq.s32.totalorder %s38, 0
      %p415 = por %p413, %p414
      %p416 = scmp.ne.s32.totalorder %s408, %s410
      %p417 = scmp.eq.s32.totalorder %s43, 1
      %p418 = por %p416, %p417
      %p419 = scmp.ne.s32.totalorder %s410, %s411
      %p420 = scmp.eq.s32.totalorder %s43, 0
      %p421 = por %p419, %p420
      %p422 = scmp.ne.s32.totalorder %s410, %s411
      %p423 = scmp.eq.s32.totalorder %s44, 1
      %p424 = por %p422, %p423
      %p426 = scmp.ne.s32.totalorder %s411, %s425
      %p427 = scmp.eq.s32.totalorder %s44, 0
      %p428 = por %p426, %p427
      %s429 = ssub.s32 %s38, %s45
      %p430 = scmp.eq.s32.totalorder %s429, 0
      %s432 = sadd.s32 %s431, 1
      %s433 = scalar_select %p430, %s431, %s432
      %p436 = pneg %p430
      %p437 = scmp.eq.s32.totalorder %s38, 1
      %p438 = por %p436, %p437
      %p439 = scmp.ne.s32.totalorder %s431, %s434
      %p440 = scmp.eq.s32.totalorder %s38, 0
      %p441 = por %p439, %p440
      %p442 = scmp.ne.s32.totalorder %s431, %s434
      %p443 = scmp.eq.s32.totalorder %s43, 1
      %p444 = por %p442, %p443
      %p445 = scmp.ne.s32.totalorder %s434, %s435
      %p446 = scmp.eq.s32.totalorder %s43, 0
      %p447 = por %p445, %p446
      %p448 = scmp.ne.s32.totalorder %s434, %s435
      %p449 = scmp.eq.s32.totalorder %s44, 1
      %p450 = por %p448, %p449
      %p452 = scmp.ne.s32.totalorder %s435, %s451
      %p453 = scmp.eq.s32.totalorder %s44, 0
      %p454 = por %p452, %p453
      %s455 = ssub.s32 %s38, %s45
      %p456 = scmp.eq.s32.totalorder %s455, 0
      %s458 = sadd.s32 %s457, 1
      %s459 = scalar_select %p456, %s457, %s458
      %p462 = pneg %p456
      %p463 = scmp.eq.s32.totalorder %s38, 1
      %p464 = por %p462, %p463
      %p465 = scmp.ne.s32.totalorder %s457, %s460
      %p466 = scmp.eq.s32.totalorder %s38, 0
      %p467 = por %p465, %p466
      %p468 = scmp.ne.s32.totalorder %s457, %s460
      %p469 = scmp.eq.s32.totalorder %s43, 1
      %p470 = por %p468, %p469
      %p471 = scmp.ne.s32.totalorder %s460, %s461
      %p472 = scmp.eq.s32.totalorder %s43, 0
      %p473 = por %p471, %p472
      %p474 = scmp.ne.s32.totalorder %s460, %s461
      %p475 = scmp.eq.s32.totalorder %s44, 1
      %p476 = por %p474, %p475
      %p478 = scmp.ne.s32.totalorder %s461, %s477
      %p479 = scmp.eq.s32.totalorder %s44, 0
      %p480 = por %p478, %p479
      %s481 = ssub.s32 %s38, %s45
      %p482 = scmp.eq.s32.totalorder %s481, 0
      %s484 = sadd.s32 %s483, 1
      %s485 = scalar_select %p482, %s483, %s484
      %p488 = pneg %p482
      %p489 = scmp.eq.s32.totalorder %s38, 1
      %p490 = por %p488, %p489
      %p491 = scmp.ne.s32.totalorder %s483, %s486
      %p492 = scmp.eq.s32.totalorder %s38, 0
      %p493 = por %p491, %p492
      %p494 = scmp.ne.s32.totalorder %s483, %s486
      %p495 = scmp.eq.s32.totalorder %s43, 1
      %p496 = por %p494, %p495
      %p497 = scmp.ne.s32.totalorder %s486, %s487
      %p498 = scmp.eq.s32.totalorder %s43, 0
      %p499 = por %p497, %p498
      %p500 = scmp.ne.s32.totalorder %s486, %s487
      %p501 = scmp.eq.s32.totalorder %s44, 1
      %p502 = por %p500, %p501
      %p504 = scmp.ne.s32.totalorder %s487, %s503
      %p505 = scmp.eq.s32.totalorder %s44, 0
      %p506 = por %p504, %p505
      %p507 = scmp.le.s32.totalorder 1, %s38
      %p508 = scmp.lt.s32.totalorder %s38, 3
      %p509 = pnand %p507, %p508
      %p510 = pneg %p509
      // Predicated region
      $region9: #{boq_block_forward.3} parent=5 // pred_check
        _
      $region10: #{boq_block_forward.3} parent=5 // pred_check_branch
        %512 = sbr.rel (%p509) target = $region12
      $region11: #{boq_block_forward.3} parent=5 // pred_region
        %s513 = ssub.s32 %s38, 1
        // Predicated region
        $region13: #{boq_block_forward.3} parent=11 // pred_check
          %p514 = pneg %p85
        $region14: #{boq_block_forward.3} parent=11 // pred_check_branch
          %516 = sbr.rel (%p514) target = $region16
        $region15: #{boq_block_forward.3} parent=11 // pred_region
          _
        $region16: #{boq_block_forward.3} parent=11 // pred_fallthru
          _
        // Predicated region
        $region17: #{boq_block_forward.3} parent=11 // pred_check
          %p517 = pneg %p106
        $region18: #{boq_block_forward.3} parent=11 // pred_check_branch
          %519 = sbr.rel (%p517) target = $region20
        $region19: #{boq_block_forward.3} parent=11 // pred_region
          _
        $region20: #{boq_block_forward.3} parent=11 // pred_fallthru
          _
        // Predicated region
        $region21: #{boq_block_forward.3} parent=11 // pred_check
          %p520 = pneg %p127
        $region22: #{boq_block_forward.3} parent=11 // pred_check_branch
          %522 = sbr.rel (%p520) target = $region24
        $region23: #{boq_block_forward.3} parent=11 // pred_region
          %s524 = ssub.s32 16, 16
          %525 = vsyncadd [#allocation3], %s524
          %s527 = sshll.u32 [#allocation2], 4
          %s528 = int_to_ptr.vmem [resolvable:$true] %s527
          %530 = dma.hbm_to_vmem [thread:$0]  %s3, 16, %s528, [#allocation3]
        $region24: #{boq_block_forward.3} parent=11 // pred_fallthru
          _
        // Predicated region
        $region25: #{boq_block_forward.3} parent=11 // pred_check
          %p531 = pneg %p148
        $region26: #{boq_block_forward.3} parent=11 // pred_check_branch
          %533 = sbr.rel (%p531) target = $region28
        $region27: #{boq_block_forward.3} parent=11 // pred_region
          _
        $region28: #{boq_block_forward.3} parent=11 // pred_fallthru
          _
        // Predicated region
        $region29: #{boq_block_forward.3} parent=11 // pred_check
          %p534 = pneg %p169
        $region30: #{boq_block_forward.3} parent=11 // pred_check_branch
          %536 = sbr.rel (%p534) target = $region32
        $region31: #{boq_block_forward.3} parent=11 // pred_region
          %s538 = ssub.s32 16, 16
          %539 = vsyncadd [#allocation6], %s538
          %s541 = sshll.u32 [#allocation5], 4
          %s542 = int_to_ptr.vmem [resolvable:$true] %s541
          %544 = dma.hbm_to_vmem [thread:$0]  %s5, 16, %s542, [#allocation6]
        $region32: #{boq_block_forward.3} parent=11 // pred_fallthru
          _
        // Predicated region
        $region33: #{boq_block_forward.3} parent=11 // pred_check
          %p545 = pneg %p190
        $region34: #{boq_block_forward.3} parent=11 // pred_check_branch
          %547 = sbr.rel (%p545) target = $region36
        $region35: #{boq_block_forward.3} parent=11 // pred_region
          _
        $region36: #{boq_block_forward.3} parent=11 // pred_fallthru
          _
        // Predicated region
        $region37: #{boq_block_forward.3} parent=11 // pred_check
          %p548 = pneg %p211
        $region38: #{boq_block_forward.3} parent=11 // pred_check_branch
          %550 = sbr.rel (%p548) target = $region40
        $region39: #{boq_block_forward.3} parent=11 // pred_region
          %s552 = ssub.s32 16, 16
          %553 = vsyncadd [#allocation6], %s552
          %s555 = sshll.u32 [#allocation7], 4
          %s556 = int_to_ptr.vmem [resolvable:$true] %s555
          %558 = dma.hbm_to_vmem [thread:$0]  %s7, 16, %s556, [#allocation6]
        $region40: #{boq_block_forward.3} parent=11 // pred_fallthru
          _
        // Predicated region
        $region41: #{boq_block_forward.3} parent=11 // pred_check
          %p559 = pneg %p232
        $region42: #{boq_block_forward.3} parent=11 // pred_check_branch
          %561 = sbr.rel (%p559) target = $region44
        $region43: #{boq_block_forward.3} parent=11 // pred_region
          _
        $region44: #{boq_block_forward.3} parent=11 // pred_fallthru
          _
        // Predicated region
        $region45: #{boq_block_forward.3} parent=11 // pred_check
          %p562 = pneg %p253
        $region46: #{boq_block_forward.3} parent=11 // pred_check_branch
          %564 = sbr.rel (%p562) target = $region48
        $region47: #{boq_block_forward.3} parent=11 // pred_region
          %s566 = ssub.s32 16, 16
          %567 = vsyncadd [#allocation9], %s566
          %s569 = sshll.u32 [#allocation8], 4
          %s570 = int_to_ptr.vmem [resolvable:$true] %s569
          %572 = dma.hbm_to_vmem [thread:$0]  %s9, 16, %s570, [#allocation9]
        $region48: #{boq_block_forward.3} parent=11 // pred_fallthru
          _
        // Predicated region
        $region49: #{boq_block_forward.3} parent=11 // pred_check
          %p573 = pneg %p274
        $region50: #{boq_block_forward.3} parent=11 // pred_check_branch
          %575 = sbr.rel (%p573) target = $region52
        $region51: #{boq_block_forward.3} parent=11 // pred_region
          _
        $region52: #{boq_block_forward.3} parent=11 // pred_fallthru
          _
        // Predicated region
        $region53: #{boq_block_forward.3} parent=11 // pred_check
          %p576 = pneg %p295
        $region54: #{boq_block_forward.3} parent=11 // pred_check_branch
          %578 = sbr.rel (%p576) target = $region56
        $region55: #{boq_block_forward.3} parent=11 // pred_region
          %s580 = ssub.s32 16, 16
          %581 = vsyncadd [#allocation9], %s580
          %s583 = sshll.u32 [#allocation10], 4
          %s584 = int_to_ptr.vmem [resolvable:$true] %s583
          %586 = dma.hbm_to_vmem [thread:$0]  %s11, 16, %s584, [#allocation9]
        $region56: #{boq_block_forward.3} parent=11 // pred_fallthru
          _
        // Predicated region
        $region57: #{boq_block_forward.3} parent=11 // pred_check
          %p587 = pneg %p316
        $region58: #{boq_block_forward.3} parent=11 // pred_check_branch
          %589 = sbr.rel (%p587) target = $region60
        $region59: #{boq_block_forward.3} parent=11 // pred_region
          _
        $region60: #{boq_block_forward.3} parent=11 // pred_fallthru
          _
        // Predicated region
        $region61: #{boq_block_forward.3} parent=11 // pred_check
          %p590 = pneg %p337
        $region62: #{boq_block_forward.3} parent=11 // pred_check_branch
          %592 = sbr.rel (%p590) target = $region64
        $region63: #{boq_block_forward.3} parent=11 // pred_region
          %s594 = ssub.s32 16, 16
          %595 = vsyncadd [#allocation12], %s594
          %s597 = sshll.u32 [#allocation11], 4
          %s598 = int_to_ptr.vmem [resolvable:$true] %s597
          %600 = dma.hbm_to_vmem [thread:$0]  %s13, 16, %s598, [#allocation12]
        $region64: #{boq_block_forward.3} parent=11 // pred_fallthru
          _
        // Predicated region
        $region65: #{boq_block_forward.3} parent=11 // pred_check
          %p601 = pneg %p358
        $region66: #{boq_block_forward.3} parent=11 // pred_check_branch
          %603 = sbr.rel (%p601) target = $region68
        $region67: #{boq_block_forward.3} parent=11 // pred_region
          _
        $region68: #{boq_block_forward.3} parent=11 // pred_fallthru
          _
        // Predicated region
        $region69: #{boq_block_forward.3} parent=11 // pred_check
          %p604 = pneg %p379
        $region70: #{boq_block_forward.3} parent=11 // pred_check_branch
          %606 = sbr.rel (%p604) target = $region72
        $region71: #{boq_block_forward.3} parent=11 // pred_region
          _
        $region72: #{boq_block_forward.3} parent=11 // pred_fallthru
          _
        // Predicated region
        $region73: #{boq_block_forward.3} parent=11 // pred_check
          %p607 = pneg %p400
        $region74: #{boq_block_forward.3} parent=11 // pred_check_branch
          %609 = sbr.rel (%p607) target = $region76
        $region75: #{boq_block_forward.3} parent=11 // pred_region
          %s611 = ssub.s32 16, 16
          %612 = vsyncadd [#allocation12], %s611
          %s614 = sshll.u32 [#allocation13], 4
          %s615 = int_to_ptr.vmem [resolvable:$true] %s614
          %617 = dma.hbm_to_vmem [thread:$0]  %s16, 16, %s615, [#allocation12]
        $region76: #{boq_block_forward.3} parent=11 // pred_fallthru
          _
        // Predicated region
        $region77: #{boq_block_forward.3} parent=11 // pred_check
          %p618 = pneg %p421
        $region78: #{boq_block_forward.3} parent=11 // pred_check_branch
          %620 = sbr.rel (%p618) target = $region80
        $region79: #{boq_block_forward.3} parent=11 // pred_region
          %s622 = ssub.s32 16, 16
          %623 = vsyncadd [#allocation15], %s622
          %s625 = sshll.u32 [#allocation14], 4
          %s626 = int_to_ptr.vmem [resolvable:$true] %s625
          %628 = dma.hbm_to_vmem [thread:$0]  %s17, 16, %s626, [#allocation15]
        $region80: #{boq_block_forward.3} parent=11 // pred_fallthru
          _
      $region12: #{boq_block_forward.3} parent=5 // pred_fallthru
        _
      %p629 = scmp.lt.s32.totalorder %s38, 2
      // Predicated region
      $region81: #{boq_block_forward.3} parent=5 // pred_check
        %p630 = pneg %p629
      $region82: #{boq_block_forward.3} parent=5 // pred_check_branch
        %632 = sbr.rel (%p630) target = $region84
      $region83: #{boq_block_forward.3} parent=5 // pred_region
        // Predicated region
        $region85: #{boq_block_forward.3} parent=83 // pred_check
          %p633 = pneg %p58
        $region86: #{boq_block_forward.3} parent=83 // pred_check_branch
          %635 = sbr.rel (%p633) target = $region88
        $region87: #{boq_block_forward.3} parent=83 // pred_region
          %p636 = scmp.lt.s32.totalorder %s38, 1
          %s637 = scalar_select %p636, %s38, 1
          %s638 = smul.addr %s637, 2
          %s639 = smul.addr %s638, 8
          %s640 = scalar_lea.vmem %s0, %s639
        $region88: #{boq_block_forward.3} parent=83 // pred_fallthru
          _
      $region84: #{boq_block_forward.3} parent=5 // pred_fallthru
        _
      %p641 = scmp.le.s32.totalorder 1, %s38
      %p642 = scmp.lt.s32.totalorder %s38, 3
      %p643 = pnand %p641, %p642
      %p644 = pneg %p643
      // Predicated region
      $region89: #{boq_block_forward.3} parent=5 // pred_check
        _
      $region90: #{boq_block_forward.3} parent=5 // pred_check_branch
        %646 = sbr.rel (%p643) target = $region92
      $region91: #{boq_block_forward.3} parent=5 // pred_region
        %s647 = ssub.s32 %s38, 1
        // Predicated region
        $region93: #{boq_block_forward.3} parent=91 // pred_check
          %p648 = pneg %p127
        $region94: #{boq_block_forward.3} parent=91 // pred_check_branch
          %650 = sbr.rel (%p648) target = $region96
        $region95: #{boq_block_forward.3} parent=91 // pred_region
          %651 = dma.done [#allocation3], 16
        $region96: #{boq_block_forward.3} parent=91 // pred_fallthru
          _
        // Predicated region
        $region97: #{boq_block_forward.3} parent=91 // pred_check
          %p652 = pneg %p169
        $region98: #{boq_block_forward.3} parent=91 // pred_check_branch
          %654 = sbr.rel (%p652) target = $region100
        $region99: #{boq_block_forward.3} parent=91 // pred_region
          %655 = dma.done [#allocation6], 16
        $region100: #{boq_block_forward.3} parent=91 // pred_fallthru
          _
        // Predicated region
        $region101: #{boq_block_forward.3} parent=91 // pred_check
          %p656 = pneg %p211
        $region102: #{boq_block_forward.3} parent=91 // pred_check_branch
          %658 = sbr.rel (%p656) target = $region104
        $region103: #{boq_block_forward.3} parent=91 // pred_region
          %659 = dma.done [#allocation6], 16
        $region104: #{boq_block_forward.3} parent=91 // pred_fallthru
          _
        // Predicated region
        $region105: #{boq_block_forward.3} parent=91 // pred_check
          %p660 = pneg %p253
        $region106: #{boq_block_forward.3} parent=91 // pred_check_branch
          %662 = sbr.rel (%p660) target = $region108
        $region107: #{boq_block_forward.3} parent=91 // pred_region
          %663 = dma.done [#allocation9], 16
        $region108: #{boq_block_forward.3} parent=91 // pred_fallthru
          _
        // Predicated region
        $region109: #{boq_block_forward.3} parent=91 // pred_check
          %p664 = pneg %p295
        $region110: #{boq_block_forward.3} parent=91 // pred_check_branch
          %666 = sbr.rel (%p664) target = $region112
        $region111: #{boq_block_forward.3} parent=91 // pred_region
          %667 = dma.done [#allocation9], 16
        $region112: #{boq_block_forward.3} parent=91 // pred_fallthru
          _
        // Predicated region
        $region113: #{boq_block_forward.3} parent=91 // pred_check
          %p668 = pneg %p337
        $region114: #{boq_block_forward.3} parent=91 // pred_check_branch
          %670 = sbr.rel (%p668) target = $region116
        $region115: #{boq_block_forward.3} parent=91 // pred_region
          %671 = dma.done [#allocation12], 16
        $region116: #{boq_block_forward.3} parent=91 // pred_fallthru
          _
        // Predicated region
        $region117: #{boq_block_forward.3} parent=91 // pred_check
          %p672 = pneg %p400
        $region118: #{boq_block_forward.3} parent=91 // pred_check_branch
          %674 = sbr.rel (%p672) target = $region120
        $region119: #{boq_block_forward.3} parent=91 // pred_region
          %675 = dma.done [#allocation12], 16
        $region120: #{boq_block_forward.3} parent=91 // pred_fallthru
          _
        // Predicated region
        $region121: #{boq_block_forward.3} parent=91 // pred_check
          %p676 = pneg %p421
        $region122: #{boq_block_forward.3} parent=91 // pred_check_branch
          %678 = sbr.rel (%p676) target = $region124
        $region123: #{boq_block_forward.3} parent=91 // pred_region
          %679 = dma.done [#allocation15], 16
        $region124: #{boq_block_forward.3} parent=91 // pred_fallthru
          _
        %p680 = scmp.lt.s32.totalorder %s43, 1
        %s681 = scalar_select %p680, %s43, 1
        %s682 = smul.addr %s681, 2
        %s683 = smul.addr %s682, 8
        %s684 = scalar_lea.vmem %s0, %s683
        %p685 = pneg %p64
        %p686 = pneg %p61
        %p687 = pneg %p85
        %p688 = pneg %p82
        %p689 = pneg %p106
        %p690 = pneg %p103
        %p691 = pneg %p127
        %p692 = pneg %p124
        %p693 = pneg %p148
        %p694 = pneg %p145
        %p695 = pneg %p169
        %p696 = pneg %p166
        %p697 = pneg %p190
        %p698 = pneg %p187
        %p699 = pneg %p211
        %p700 = pneg %p208
        %p701 = pneg %p232
        %p702 = pneg %p229
        %p703 = pneg %p253
        %p704 = pneg %p250
        %p705 = pneg %p274
        %p706 = pneg %p271
        %p707 = pneg %p295
        %p708 = pneg %p292
        %p709 = pneg %p316
        %p710 = pneg %p313
        %p711 = pneg %p337
        %p712 = pneg %p334
        %p713 = pneg %p358
        %p714 = pneg %p355
        %p715 = pneg %p379
        %p716 = pneg %p376
        %p717 = pneg %p400
        %p718 = pneg %p397
        %p719 = pneg %p421
        %p720 = pneg %p418
        %p721 = pneg %p447
        %p722 = pneg %p444
        %s723 = sand.u32 %s434, 1
        %s724 = scalar_lea.sflag [#allocation4], %s723
        %s725 = sand.u32 %s434, 1
        %s726 = smul.addr %s725, 16
        %s727 = scalar_lea.vmem [#allocation16], %s726
        %p728 = pneg %p473
        %p729 = pneg %p470
        %s730 = sand.u32 %s43, 1
        %s731 = scalar_lea.sflag [#allocation18], %s730
        %s732 = sand.u32 %s460, 1
        %s733 = smul.addr %s732, 8
        %s734 = scalar_lea.vmem [#allocation17], %s733
        %p735 = pneg %p499
        %p736 = pneg %p496
        %s737 = sand.u32 %s43, 1
        %s738 = scalar_lea.sflag [#allocation18], %s737
        %s739 = sand.u32 %s486, 1
        %s740 = smul.addr %s739, 8
        %s741 = scalar_lea.vmem [#allocation19], %s740
        %p742 = scmp.lt.s32.totalorder %s43, 1
        %s743 = scalar_select %p742, %s43, 1
        %s744 = smul.addr %s743, 2
        %s745 = smul.addr %s744, 8
        %s746 = scalar_lea.vmem %s0, %s745
        %v748 = vld [vmem:[%s746] sm:$0xff]
        %v749 = vld [vmem:[%s746 + $0x8] sm:$0xff]
        %v750 = vld [vmem:[%s1] sm:$0xff]
        %v751 = vld [vmem:[%s2] sm:$0xf]
        %v752 = vld [vmem:[%s2 + $0x4] sm:$0xf]
        %v753 = vld [vmem:[%s2 + $0x8] sm:$0xf]
        %v754 = vld [vmem:[%s2 + $0xc] sm:$0xf]
        %v755 = vld [vmem:[#allocation2] sm:$0x1]
        %v756 = vld [vmem:[%s4] sm:$0xf]
        %v757 = vld [vmem:[%s4 + $0x4] sm:$0xf]
        %v758 = vld [vmem:[%s4 + $0x8] sm:$0xf]
        %v759 = vld [vmem:[%s4 + $0xc] sm:$0xf]
        %v760 = vld [vmem:[#allocation5] sm:$0x1]
        %v761 = vpack.c.bf16 %v749, %v748
        %v763 = vlaneseq
        %v764 = vshrl.u32 %v763, 7
        %v765 = vsub.s32 0, %v764
        %v766 = vrot.slane %v755, %v765
        %v772 = vunpack.c.l.b16 %v751
        %v773 = vunpack.c.l.b16 %v752
        %v774 = vunpack.c.l.b16 %v753
        %v775 = vunpack.c.l.b16 %v754
        %v776 = vpack.c.b16 %v773, %v772
        %v777 = vpack.c.b16 %v775, %v774
        %vm780 = vcmask 261120
        %v782 = vsel %vm780, %v761, 0
        %784 = vmatprep.subr.bf16.mxu0 0
        %785 = vmatpush1.bf16.msra.mxu0 0
        %786 = vmatprep.subr.bf16.mxu0 0
        %787 = vmatpush1.bf16.msra.mxu0 0
        %788 = vmatprep.subr.bf16.mxu0 0
        %789 = vmatpush1.bf16.msra.mxu0 0
        %790 = vmatprep.subr.bf16.mxu0 0
        %791 = vmatpush1.bf16.msra.mxu0 0
        %792 = vmatprep.subr.bf16.mxu0 0
        %793 = vmatpush1.bf16.msra.mxu0 0
        %794 = vmatprep.subr.bf16.mxu0 0
        %795 = vmatpush1.bf16.msra.mxu0 0
        %796 = vmatprep.subr.bf16.mxu0 0
        %797 = vmatpush1.bf16.msra.mxu0 %v777
        %798 = vmatprep.subr.bf16.mxu0 0
        %799 = vmatpush1.bf16.msra.mxu0 %v776
        %800 = vmatprep.subr.bf16.mxu0 0
        %801 = vmatpush2.bf16.msra.mxu0 0
        %802 = vmatprep.subr.bf16.mxu0 0
        %803 = vmatpush2.bf16.msra.mxu0 0
        %804 = vmatprep.subr.bf16.mxu0 0
        %805 = vmatpush2.bf16.msra.mxu0 0
        %806 = vmatprep.subr.bf16.mxu0 0
        %807 = vmatpush2.bf16.msra.mxu0 0
        %808 = vmatprep.subr.bf16.mxu0 0
        %809 = vmatpush2.bf16.msra.mxu0 0
        %810 = vmatprep.subr.bf16.mxu0 0
        %811 = vmatpush2.bf16.msra.mxu0 0
        %812 = vmatprep.subr.bf16.mxu0 0
        %813 = vmatpush2.bf16.msra.mxu0 0
        %814 = vmatprep.subr.bf16.mxu0 0
        %815 = vmatpush2.bf16.msra.mxu0 0
        %816 = vmatprep.mubr.bf16.mxu0 0
        %817 = vmatmul.mubr.bf16.gmra.mxu0 %v782
        %v818 = vpop.f32.mrf.mxu0
        %v819 = vadd.f32 %v766, %v818
        %v820 = vpop.f32.mrf.mxu0
        %v821 = vpop.f32.mrf.mxu0
        %v822 = vadd.f32 %v766, %v821
        %v823 = vpop.f32.mrf.mxu0
        %824 = vdwg.mxu0
        %v825 = vpack.c.bf16 %v822, %v819
        %827 = vrot.lane.b32.xlu0 %v825, 96
        %v828 = vpop.permute.xlu0 %827
        %vm829 = vcmask 31744
        %v831 = vsel %vm829, %v825, 0
        %v834 = vsel %vm829, %v828, 0
        %836 = vmatprep.subr.bf16.mxu0 0
        %837 = vmatpush1.bf16.xpose.msra.mxu0 0
        %838 = vmatprep.subr.bf16.mxu0 0
        %839 = vmatpush1.bf16.xpose.msra.mxu0 0
        %840 = vmatprep.subr.bf16.mxu0 0
        %841 = vmatpush1.bf16.xpose.msra.mxu0 0
        %842 = vmatprep.subr.bf16.mxu0 0
        %843 = vmatpush1.bf16.xpose.msra.mxu0 0
        %844 = vmatprep.subr.bf16.mxu0 0
        %845 = vmatpush1.bf16.xpose.msra.mxu0 0
        %846 = vmatprep.subr.bf16.mxu0 0
        %847 = vmatpush1.bf16.xpose.msra.mxu0 0
        %848 = vmatprep.subr.bf16.mxu0 0
        %849 = vmatpush1.bf16.xpose.msra.mxu0 0
        %850 = vmatprep.subr.bf16.mxu0 0
        %851 = vmatpush1.bf16.xpose.msra.mxu0 %v834
        %852 = vmatprep.subr.bf16.mxu0 0
        %853 = vmatpush2.bf16.xpose.msra.mxu0 0
        %854 = vmatprep.subr.bf16.mxu0 0
        %855 = vmatpush2.bf16.xpose.msra.mxu0 0
        %856 = vmatprep.subr.bf16.mxu0 0
        %857 = vmatpush2.bf16.xpose.msra.mxu0 0
        %858 = vmatprep.subr.bf16.mxu0 0
        %859 = vmatpush2.bf16.xpose.msra.mxu0 0
        %860 = vmatprep.subr.bf16.mxu0 0
        %861 = vmatpush2.bf16.xpose.msra.mxu0 0
        %862 = vmatprep.subr.bf16.mxu0 0
        %863 = vmatpush2.bf16.xpose.msra.mxu0 0
        %864 = vmatprep.subr.bf16.mxu0 0
        %865 = vmatpush2.bf16.xpose.msra.mxu0 0
        %866 = vmatprep.subr.bf16.mxu0 0
        %867 = vmatpush2.bf16.xpose.msra.mxu0 0
        %868 = vmatprep.mubr.bf16.mxu0 0
        %869 = vmatmul.mubr.bf16.gmra.mxu0 %v831
        %v870 = vpop.f32.mrf.mxu0
        %v871 = vadd.f32 0.0, %v870
        %v872 = vpop.f32.mrf.mxu0
        %v873 = vpop.f32.mrf.mxu0
        %v874 = vadd.f32 0.0, %v873
        %v875 = vpop.f32.mrf.mxu0
        %876 = vdwg.mxu0
        %vm877 = vcmask 130048
        %v878 = vsel %vm877, %v871, -inf
        %879 = vmax.xlane.f32.xlu0 %v878
        %v880 = vpop.xlane.xlu0 %879
        %v881 = vsel %vm877, %v874, -inf
        %882 = vmax.xlane.f32.xlu0 %v881
        %v883 = vpop.xlane.xlu0 %882
        %v884 = vsub.f32 %v871, %v880
        %v885 = vsub.f32 %v874, %v883
        %v886 = vmul.f32 %v884, 1.442695
        %v887 = vpow.pop %v886
        %v888 = vmul.f32 %v885, 1.442695
        %v889 = vpow.pop %v888
        %v890 = vsel %vm877, %v887, 0.0
        %891 = vadd.xlane.f32.xlu0 %v890
        %v892 = vpop.xlane.xlu0 %891
        %v893 = vsel %vm877, %v889, 0.0
        %894 = vadd.xlane.f32.xlu0 %v893
        %v895 = vpop.xlane.xlu0 %894
        %v896 = vrcp.pop %v892
        %v897 = vrcp.pop %v895
        %v898 = vmul.f32 %v887, %v896
        %v899 = vmul.f32 %v889, %v897
        %v900 = vpack.c.bf16 %v899, %v898
        %901 = vrot.lane.b32.xlu0 %v825, 64
        %v902 = vpop.permute.xlu0 %901
        %v905 = vsel %vm877, %v900, 0
        %907 = vmatprep.subr.bf16.mxu0 0
        %908 = vmatpush1.bf16.msra.mxu0 0
        %909 = vmatprep.subr.bf16.mxu0 0
        %910 = vmatpush1.bf16.msra.mxu0 0
        %911 = vmatprep.subr.bf16.mxu0 0
        %912 = vmatpush1.bf16.msra.mxu0 0
        %913 = vmatprep.subr.bf16.mxu0 0
        %914 = vmatpush1.bf16.msra.mxu0 0
        %915 = vmatprep.subr.bf16.mxu0 0
        %916 = vmatpush1.bf16.msra.mxu0 0
        %917 = vmatprep.subr.bf16.mxu0 0
        %918 = vmatpush1.bf16.msra.mxu0 0
        %919 = vmatprep.subr.bf16.mxu0 0
        %920 = vmatpush1.bf16.msra.mxu0 0
        %921 = vmatprep.subr.bf16.mxu0 0
        %922 = vmatpush1.bf16.msra.mxu0 %v902
        %923 = vmatprep.subr.bf16.mxu0 0
        %924 = vmatpush2.bf16.msra.mxu0 0
        %925 = vmatprep.subr.bf16.mxu0 0
        %926 = vmatpush2.bf16.msra.mxu0 0
        %927 = vmatprep.subr.bf16.mxu0 0
        %928 = vmatpush2.bf16.msra.mxu0 0
        %929 = vmatprep.subr.bf16.mxu0 0
        %930 = vmatpush2.bf16.msra.mxu0 0
        %931 = vmatprep.subr.bf16.mxu0 0
        %932 = vmatpush2.bf16.msra.mxu0 0
        %933 = vmatprep.subr.bf16.mxu0 0
        %934 = vmatpush2.bf16.msra.mxu0 0
        %935 = vmatprep.subr.bf16.mxu0 0
        %936 = vmatpush2.bf16.msra.mxu0 0
        %937 = vmatprep.subr.bf16.mxu0 0
        %938 = vmatpush2.bf16.msra.mxu0 0
        %939 = vmatprep.mubr.bf16.mxu0 0
        %940 = vmatmul.mubr.bf16.gmra.mxu0 %v905
        %v941 = vpop.f32.mrf.mxu0
        %v942 = vadd.f32 0.0, %v941
        %v943 = vpop.f32.mrf.mxu0
        %v944 = vpop.f32.mrf.mxu0
        %v945 = vadd.f32 0.0, %v944
        %v946 = vpop.f32.mrf.mxu0
        %947 = vdwg.mxu0
        %948 = vrot.lane.b32.xlu0 %v825, 124
        %v949 = vpop.permute.xlu0 %948
        %950 = vrot.lane.b32.xlu0 %v825, 92
        %v951 = vpop.permute.xlu0 %950
        %v953 = vsel %vm829, %v949, 0
        %v956 = vsel %vm829, %v951, 0
        %958 = vmatprep.subr.bf16.mxu0 0
        %959 = vmatpush1.bf16.xpose.msra.mxu0 0
        %960 = vmatprep.subr.bf16.mxu0 0
        %961 = vmatpush1.bf16.xpose.msra.mxu0 0
        %962 = vmatprep.subr.bf16.mxu0 0
        %963 = vmatpush1.bf16.xpose.msra.mxu0 0
        %964 = vmatprep.subr.bf16.mxu0 0
        %965 = vmatpush1.bf16.xpose.msra.mxu0 0
        %966 = vmatprep.subr.bf16.mxu0 0
        %967 = vmatpush1.bf16.xpose.msra.mxu0 0
        %968 = vmatprep.subr.bf16.mxu0 0
        %969 = vmatpush1.bf16.xpose.msra.mxu0 0
        %970 = vmatprep.subr.bf16.mxu0 0
        %971 = vmatpush1.bf16.xpose.msra.mxu0 0
        %972 = vmatprep.subr.bf16.mxu0 0
        %973 = vmatpush1.bf16.xpose.msra.mxu0 %v956
        %974 = vmatprep.subr.bf16.mxu0 0
        %975 = vmatpush2.bf16.xpose.msra.mxu0 0
        %976 = vmatprep.subr.bf16.mxu0 0
        %977 = vmatpush2.bf16.xpose.msra.mxu0 0
        %978 = vmatprep.subr.bf16.mxu0 0
        %979 = vmatpush2.bf16.xpose.msra.mxu0 0
        %980 = vmatprep.subr.bf16.mxu0 0
        %981 = vmatpush2.bf16.xpose.msra.mxu0 0
        %982 = vmatprep.subr.bf16.mxu0 0
        %983 = vmatpush2.bf16.xpose.msra.mxu0 0
        %984 = vmatprep.subr.bf16.mxu0 0
        %985 = vmatpush2.bf16.xpose.msra.mxu0 0
        %986 = vmatprep.subr.bf16.mxu0 0
        %987 = vmatpush2.bf16.xpose.msra.mxu0 0
        %988 = vmatprep.subr.bf16.mxu0 0
        %989 = vmatpush2.bf16.xpose.msra.mxu0 0
        %990 = vmatprep.mubr.bf16.mxu0 0
        %991 = vmatmul.mubr.bf16.gmra.mxu0 %v953
        %v992 = vpop.f32.mrf.mxu0
        %v993 = vadd.f32 0.0, %v992
        %v994 = vpop.f32.mrf.mxu0
        %v995 = vpop.f32.mrf.mxu0
        %v996 = vadd.f32 0.0, %v995
        %v997 = vpop.f32.mrf.mxu0
        %998 = vdwg.mxu0
        %v999 = vsel %vm877, %v993, -inf
        %1000 = vmax.xlane.f32.xlu0 %v999
        %v1001 = vpop.xlane.xlu0 %1000
        %v1002 = vsel %vm877, %v996, -inf
        %1003 = vmax.xlane.f32.xlu0 %v1002
        %v1004 = vpop.xlane.xlu0 %1003
        %v1005 = vsub.f32 %v993, %v1001
        %v1006 = vsub.f32 %v996, %v1004
        %v1007 = vmul.f32 %v1005, 1.442695
        %v1008 = vpow.pop %v1007
        %v1009 = vmul.f32 %v1006, 1.442695
        %v1010 = vpow.pop %v1009
        %v1011 = vsel %vm877, %v1008, 0.0
        %1012 = vadd.xlane.f32.xlu0 %v1011
        %v1013 = vpop.xlane.xlu0 %1012
        %v1014 = vsel %vm877, %v1010, 0.0
        %1015 = vadd.xlane.f32.xlu0 %v1014
        %v1016 = vpop.xlane.xlu0 %1015
        %v1017 = vrcp.pop %v1013
        %v1018 = vrcp.pop %v1016
        %v1019 = vmul.f32 %v1008, %v1017
        %v1020 = vmul.f32 %v1010, %v1018
        %v1021 = vpack.c.bf16 %v1020, %v1019
        %1022 = vrot.lane.b32.xlu0 %v825, 60
        %v1023 = vpop.permute.xlu0 %1022
        %v1026 = vsel %vm877, %v1021, 0
        %1028 = vmatprep.subr.bf16.mxu0 0
        %1029 = vmatpush1.bf16.msra.mxu0 0
        %1030 = vmatprep.subr.bf16.mxu0 0
        %1031 = vmatpush1.bf16.msra.mxu0 0
        %1032 = vmatprep.subr.bf16.mxu0 0
        %1033 = vmatpush1.bf16.msra.mxu0 0
        %1034 = vmatprep.subr.bf16.mxu0 0
        %1035 = vmatpush1.bf16.msra.mxu0 0
        %1036 = vmatprep.subr.bf16.mxu0 0
        %1037 = vmatpush1.bf16.msra.mxu0 0
        %1038 = vmatprep.subr.bf16.mxu0 0
        %1039 = vmatpush1.bf16.msra.mxu0 0
        %1040 = vmatprep.subr.bf16.mxu0 0
        %1041 = vmatpush1.bf16.msra.mxu0 0
        %1042 = vmatprep.subr.bf16.mxu0 0
        %1043 = vmatpush1.bf16.msra.mxu0 %v1023
        %1044 = vmatprep.subr.bf16.mxu0 0
        %1045 = vmatpush2.bf16.msra.mxu0 0
        %1046 = vmatprep.subr.bf16.mxu0 0
        %1047 = vmatpush2.bf16.msra.mxu0 0
        %1048 = vmatprep.subr.bf16.mxu0 0
        %1049 = vmatpush2.bf16.msra.mxu0 0
        %1050 = vmatprep.subr.bf16.mxu0 0
        %1051 = vmatpush2.bf16.msra.mxu0 0
        %1052 = vmatprep.subr.bf16.mxu0 0
        %1053 = vmatpush2.bf16.msra.mxu0 0
        %1054 = vmatprep.subr.bf16.mxu0 0
        %1055 = vmatpush2.bf16.msra.mxu0 0
        %1056 = vmatprep.subr.bf16.mxu0 0
        %1057 = vmatpush2.bf16.msra.mxu0 0
        %1058 = vmatprep.subr.bf16.mxu0 0
        %1059 = vmatpush2.bf16.msra.mxu0 0
        %1060 = vmatprep.mubr.bf16.mxu0 0
        %1061 = vmatmul.mubr.bf16.gmra.mxu0 %v1026
        %v1062 = vpop.f32.mrf.mxu0
        %v1063 = vadd.f32 0.0, %v1062
        %v1064 = vpop.f32.mrf.mxu0
        %v1065 = vpop.f32.mrf.mxu0
        %v1066 = vadd.f32 0.0, %v1065
        %v1067 = vpop.f32.mrf.mxu0
        %1068 = vdwg.mxu0
        %1069 = vrot.lane.b32.xlu0 %v825, 120
        %v1070 = vpop.permute.xlu0 %1069
        %1071 = vrot.lane.b32.xlu0 %v825, 88
        %v1072 = vpop.permute.xlu0 %1071
        %v1074 = vsel %vm829, %v1070, 0
        %v1077 = vsel %vm829, %v1072, 0
        %1079 = vmatprep.subr.bf16.mxu0 0
        %1080 = vmatpush1.bf16.xpose.msra.mxu0 0
        %1081 = vmatprep.subr.bf16.mxu0 0
        %1082 = vmatpush1.bf16.xpose.msra.mxu0 0
        %1083 = vmatprep.subr.bf16.mxu0 0
        %1084 = vmatpush1.bf16.xpose.msra.mxu0 0
        %1085 = vmatprep.subr.bf16.mxu0 0
        %1086 = vmatpush1.bf16.xpose.msra.mxu0 0
        %1087 = vmatprep.subr.bf16.mxu0 0
        %1088 = vmatpush1.bf16.xpose.msra.mxu0 0
        %1089 = vmatprep.subr.bf16.mxu0 0
        %1090 = vmatpush1.bf16.xpose.msra.mxu0 0
        %1091 = vmatprep.subr.bf16.mxu0 0
        %1092 = vmatpush1.bf16.xpose.msra.mxu0 0
        %1093 = vmatprep.subr.bf16.mxu0 0
        %1094 = vmatpush1.bf16.xpose.msra.mxu0 %v1077
        %1095 = vmatprep.subr.bf16.mxu0 0
        %1096 = vmatpush2.bf16.xpose.msra.mxu0 0
        %1097 = vmatprep.subr.bf16.mxu0 0
        %1098 = vmatpush2.bf16.xpose.msra.mxu0 0
        %1099 = vmatprep.subr.bf16.mxu0 0
        %1100 = vmatpush2.bf16.xpose.msra.mxu0 0
        %1101 = vmatprep.subr.bf16.mxu0 0
        %1102 = vmatpush2.bf16.xpose.msra.mxu0 0
        %1103 = vmatprep.subr.bf16.mxu0 0
        %1104 = vmatpush2.bf16.xpose.msra.mxu0 0
        %1105 = vmatprep.subr.bf16.mxu0 0
        %1106 = vmatpush2.bf16.xpose.msra.mxu0 0
        %1107 = vmatprep.subr.bf16.mxu0 0
        %1108 = vmatpush2.bf16.xpose.msra.mxu0 0
        %1109 = vmatprep.subr.bf16.mxu0 0
        %1110 = vmatpush2.bf16.xpose.msra.mxu0 0
        %1111 = vmatprep.mubr.bf16.mxu0 0
        %1112 = vmatmul.mubr.bf16.gmra.mxu0 %v1074
        %v1113 = vpop.f32.mrf.mxu0
        %v1114 = vadd.f32 0.0, %v1113
        %v1115 = vpop.f32.mrf.mxu0
        %v1116 = vpop.f32.mrf.mxu0
        %v1117 = vadd.f32 0.0, %v1116
        %v1118 = vpop.f32.mrf.mxu0
        %1119 = vdwg.mxu0
        %v1120 = vsel %vm877, %v1114, -inf
        %1121 = vmax.xlane.f32.xlu0 %v1120
        %v1122 = vpop.xlane.xlu0 %1121
        %v1123 = vsel %vm877, %v1117, -inf
        %1124 = vmax.xlane.f32.xlu0 %v1123
        %v1125 = vpop.xlane.xlu0 %1124
        %v1126 = vsub.f32 %v1114, %v1122
        %v1127 = vsub.f32 %v1117, %v1125
        %v1128 = vmul.f32 %v1126, 1.442695
        %v1129 = vpow.pop %v1128
        %v1130 = vmul.f32 %v1127, 1.442695
        %v1131 = vpow.pop %v1130
        %v1132 = vsel %vm877, %v1129, 0.0
        %1133 = vadd.xlane.f32.xlu0 %v1132
        %v1134 = vpop.xlane.xlu0 %1133
        %v1135 = vsel %vm877, %v1131, 0.0
        %1136 = vadd.xlane.f32.xlu0 %v1135
        %v1137 = vpop.xlane.xlu0 %1136
        %v1138 = vrcp.pop %v1134
        %v1139 = vrcp.pop %v1137
        %v1140 = vmul.f32 %v1129, %v1138
        %v1141 = vmul.f32 %v1131, %v1139
        %v1142 = vpack.c.bf16 %v1141, %v1140
        %1143 = vrot.lane.b32.xlu0 %v825, 56
        %v1144 = vpop.permute.xlu0 %1143
        %v1147 = vsel %vm877, %v1142, 0
        %1149 = vmatprep.subr.bf16.mxu0 0
        %1150 = vmatpush1.bf16.msra.mxu0 0
        %1151 = vmatprep.subr.bf16.mxu0 0
        %1152 = vmatpush1.bf16.msra.mxu0 0
        %1153 = vmatprep.subr.bf16.mxu0 0
        %1154 = vmatpush1.bf16.msra.mxu0 0
        %1155 = vmatprep.subr.bf16.mxu0 0
        %1156 = vmatpush1.bf16.msra.mxu0 0
        %1157 = vmatprep.subr.bf16.mxu0 0
        %1158 = vmatpush1.bf16.msra.mxu0 0
        %1159 = vmatprep.subr.bf16.mxu0 0
        %1160 = vmatpush1.bf16.msra.mxu0 0
        %1161 = vmatprep.subr.bf16.mxu0 0
        %1162 = vmatpush1.bf16.msra.mxu0 0
        %1163 = vmatprep.subr.bf16.mxu0 0
        %1164 = vmatpush1.bf16.msra.mxu0 %v1144
        %1165 = vmatprep.subr.bf16.mxu0 0
        %1166 = vmatpush2.bf16.msra.mxu0 0
        %1167 = vmatprep.subr.bf16.mxu0 0
        %1168 = vmatpush2.bf16.msra.mxu0 0
        %1169 = vmatprep.subr.bf16.mxu0 0
        %1170 = vmatpush2.bf16.msra.mxu0 0
        %1171 = vmatprep.subr.bf16.mxu0 0
        %1172 = vmatpush2.bf16.msra.mxu0 0
        %1173 = vmatprep.subr.bf16.mxu0 0
        %1174 = vmatpush2.bf16.msra.mxu0 0
        %1175 = vmatprep.subr.bf16.mxu0 0
        %1176 = vmatpush2.bf16.msra.mxu0 0
        %1177 = vmatprep.subr.bf16.mxu0 0
        %1178 = vmatpush2.bf16.msra.mxu0 0
        %1179 = vmatprep.subr.bf16.mxu0 0
        %1180 = vmatpush2.bf16.msra.mxu0 0
        %1181 = vmatprep.mubr.bf16.mxu0 0
        %1182 = vmatmul.mubr.bf16.gmra.mxu0 %v1147
        %v1183 = vpop.f32.mrf.mxu0
        %v1184 = vadd.f32 0.0, %v1183
        %v1185 = vpop.f32.mrf.mxu0
        %v1186 = vpop.f32.mrf.mxu0
        %v1187 = vadd.f32 0.0, %v1186
        %v1188 = vpop.f32.mrf.mxu0
        %1189 = vdwg.mxu0
        %1190 = vrot.lane.b32.xlu0 %v825, 116
        %v1191 = vpop.permute.xlu0 %1190
        %1192 = vrot.lane.b32.xlu0 %v825, 84
        %v1193 = vpop.permute.xlu0 %1192
        %v1195 = vsel %vm829, %v1191, 0
        %v1198 = vsel %vm829, %v1193, 0
        %1200 = vmatprep.subr.bf16.mxu0 0
        %1201 = vmatpush1.bf16.xpose.msra.mxu0 0
        %1202 = vmatprep.subr.bf16.mxu0 0
        %1203 = vmatpush1.bf16.xpose.msra.mxu0 0
        %1204 = vmatprep.subr.bf16.mxu0 0
        %1205 = vmatpush1.bf16.xpose.msra.mxu0 0
        %1206 = vmatprep.subr.bf16.mxu0 0
        %1207 = vmatpush1.bf16.xpose.msra.mxu0 0
        %1208 = vmatprep.subr.bf16.mxu0 0
        %1209 = vmatpush1.bf16.xpose.msra.mxu0 0
        %1210 = vmatprep.subr.bf16.mxu0 0
        %1211 = vmatpush1.bf16.xpose.msra.mxu0 0
        %1212 = vmatprep.subr.bf16.mxu0 0
        %1213 = vmatpush1.bf16.xpose.msra.mxu0 0
        %1214 = vmatprep.subr.bf16.mxu0 0
        %1215 = vmatpush1.bf16.xpose.msra.mxu0 %v1198
        %1216 = vmatprep.subr.bf16.mxu0 0
        %1217 = vmatpush2.bf16.xpose.msra.mxu0 0
        %1218 = vmatprep.subr.bf16.mxu0 0
        %1219 = vmatpush2.bf16.xpose.msra.mxu0 0
        %1220 = vmatprep.subr.bf16.mxu0 0
        %1221 = vmatpush2.bf16.xpose.msra.mxu0 0
        %1222 = vmatprep.subr.bf16.mxu0 0
        %1223 = vmatpush2.bf16.xpose.msra.mxu0 0
        %1224 = vmatprep.subr.bf16.mxu0 0
        %1225 = vmatpush2.bf16.xpose.msra.mxu0 0
        %1226 = vmatprep.subr.bf16.mxu0 0
        %1227 = vmatpush2.bf16.xpose.msra.mxu0 0
        %1228 = vmatprep.subr.bf16.mxu0 0
        %1229 = vmatpush2.bf16.xpose.msra.mxu0 0
        %1230 = vmatprep.subr.bf16.mxu0 0
        %1231 = vmatpush2.bf16.xpose.msra.mxu0 0
        %1232 = vmatprep.mubr.bf16.mxu0 0
        %1233 = vmatmul.mubr.bf16.gmra.mxu0 %v1195
        %v1234 = vpop.f32.mrf.mxu0
        %v1235 = vadd.f32 0.0, %v1234
        %v1236 = vpop.f32.mrf.mxu0
        %v1237 = vpop.f32.mrf.mxu0
        %v1238 = vadd.f32 0.0, %v1237
        %v1239 = vpop.f32.mrf.mxu0
        %1240 = vdwg.mxu0
        %v1241 = vsel %vm877, %v1235, -inf
        %1242 = vmax.xlane.f32.xlu0 %v1241
        %v1243 = vpop.xlane.xlu0 %1242
        %v1244 = vsel %vm877, %v1238, -inf
        %1245 = vmax.xlane.f32.xlu0 %v1244
        %v1246 = vpop.xlane.xlu0 %1245
        %v1247 = vsub.f32 %v1235, %v1243
        %v1248 = vsub.f32 %v1238, %v1246
        %v1249 = vmul.f32 %v1247, 1.442695
        %v1250 = vpow.pop %v1249
        %v1251 = vmul.f32 %v1248, 1.442695
        %v1252 = vpow.pop %v1251
        %v1253 = vsel %vm877, %v1250, 0.0
        %1254 = vadd.xlane.f32.xlu0 %v1253
        %v1255 = vpop.xlane.xlu0 %1254
        %v1256 = vsel %vm877, %v1252, 0.0
        %1257 = vadd.xlane.f32.xlu0 %v1256
        %v1258 = vpop.xlane.xlu0 %1257
        %v1259 = vrcp.pop %v1255
        %v1260 = vrcp.pop %v1258
        %v1261 = vmul.f32 %v1250, %v1259
        %v1262 = vmul.f32 %v1252, %v1260
        %v1263 = vpack.c.bf16 %v1262, %v1261
        %1264 = vrot.lane.b32.xlu0 %v825, 52
        %v1265 = vpop.permute.xlu0 %1264
        %v1268 = vsel %vm877, %v1263, 0
        %1270 = vmatprep.subr.bf16.mxu0 0
        %1271 = vmatpush1.bf16.msra.mxu0 0
        %1272 = vmatprep.subr.bf16.mxu0 0
        %1273 = vmatpush1.bf16.msra.mxu0 0
        %1274 = vmatprep.subr.bf16.mxu0 0
        %1275 = vmatpush1.bf16.msra.mxu0 0
        %1276 = vmatprep.subr.bf16.mxu0 0
        %1277 = vmatpush1.bf16.msra.mxu0 0
        %1278 = vmatprep.subr.bf16.mxu0 0
        %1279 = vmatpush1.bf16.msra.mxu0 0
        %1280 = vmatprep.subr.bf16.mxu0 0
        %1281 = vmatpush1.bf16.msra.mxu0 0
        %1282 = vmatprep.subr.bf16.mxu0 0
        %1283 = vmatpush1.bf16.msra.mxu0 0
        %1284 = vmatprep.subr.bf16.mxu0 0
        %1285 = vmatpush1.bf16.msra.mxu0 %v1265
        %1286 = vmatprep.subr.bf16.mxu0 0
        %1287 = vmatpush2.bf16.msra.mxu0 0
        %1288 = vmatprep.subr.bf16.mxu0 0
        %1289 = vmatpush2.bf16.msra.mxu0 0
        %1290 = vmatprep.subr.bf16.mxu0 0
        %1291 = vmatpush2.bf16.msra.mxu0 0
        %1292 = vmatprep.subr.bf16.mxu0 0
        %1293 = vmatpush2.bf16.msra.mxu0 0
        %1294 = vmatprep.subr.bf16.mxu0 0
        %1295 = vmatpush2.bf16.msra.mxu0 0
        %1296 = vmatprep.subr.bf16.mxu0 0
        %1297 = vmatpush2.bf16.msra.mxu0 0
        %1298 = vmatprep.subr.bf16.mxu0 0
        %1299 = vmatpush2.bf16.msra.mxu0 0
        %1300 = vmatprep.subr.bf16.mxu0 0
        %1301 = vmatpush2.bf16.msra.mxu0 0
        %1302 = vmatprep.mubr.bf16.mxu0 0
        %1303 = vmatmul.mubr.bf16.gmra.mxu0 %v1268
        %v1304 = vpop.f32.mrf.mxu0
        %v1305 = vadd.f32 0.0, %v1304
        %v1306 = vpop.f32.mrf.mxu0
        %v1307 = vpop.f32.mrf.mxu0
        %v1308 = vadd.f32 0.0, %v1307
        %v1309 = vpop.f32.mrf.mxu0
        %1310 = vdwg.mxu0
        %1311 = vrot.lane.b32.xlu0 %v825, 112
        %v1312 = vpop.permute.xlu0 %1311
        %1313 = vrot.lane.b32.xlu0 %v825, 80
        %v1314 = vpop.permute.xlu0 %1313
        %v1316 = vsel %vm829, %v1312, 0
        %v1319 = vsel %vm829, %v1314, 0
        %1321 = vmatprep.subr.bf16.mxu0 0
        %1322 = vmatpush1.bf16.xpose.msra.mxu0 0
        %1323 = vmatprep.subr.bf16.mxu0 0
        %1324 = vmatpush1.bf16.xpose.msra.mxu0 0
        %1325 = vmatprep.subr.bf16.mxu0 0
        %1326 = vmatpush1.bf16.xpose.msra.mxu0 0
        %1327 = vmatprep.subr.bf16.mxu0 0
        %1328 = vmatpush1.bf16.xpose.msra.mxu0 0
        %1329 = vmatprep.subr.bf16.mxu0 0
        %1330 = vmatpush1.bf16.xpose.msra.mxu0 0
        %1331 = vmatprep.subr.bf16.mxu0 0
        %1332 = vmatpush1.bf16.xpose.msra.mxu0 0
        %1333 = vmatprep.subr.bf16.mxu0 0
        %1334 = vmatpush1.bf16.xpose.msra.mxu0 0
        %1335 = vmatprep.subr.bf16.mxu0 0
        %1336 = vmatpush1.bf16.xpose.msra.mxu0 %v1319
        %1337 = vmatprep.subr.bf16.mxu0 0
        %1338 = vmatpush2.bf16.xpose.msra.mxu0 0
        %1339 = vmatprep.subr.bf16.mxu0 0
        %1340 = vmatpush2.bf16.xpose.msra.mxu0 0
        %1341 = vmatprep.subr.bf16.mxu0 0
        %1342 = vmatpush2.bf16.xpose.msra.mxu0 0
        %1343 = vmatprep.subr.bf16.mxu0 0
        %1344 = vmatpush2.bf16.xpose.msra.mxu0 0
        %1345 = vmatprep.subr.bf16.mxu0 0
        %1346 = vmatpush2.bf16.xpose.msra.mxu0 0
        %1347 = vmatprep.subr.bf16.mxu0 0
        %1348 = vmatpush2.bf16.xpose.msra.mxu0 0
        %1349 = vmatprep.subr.bf16.mxu0 0
        %1350 = vmatpush2.bf16.xpose.msra.mxu0 0
        %1351 = vmatprep.subr.bf16.mxu0 0
        %1352 = vmatpush2.bf16.xpose.msra.mxu0 0
        %1353 = vmatprep.mubr.bf16.mxu0 0
        %1354 = vmatmul.mubr.bf16.gmra.mxu0 %v1316
        %v1355 = vpop.f32.mrf.mxu0
        %v1356 = vadd.f32 0.0, %v1355
        %v1357 = vpop.f32.mrf.mxu0
        %v1358 = vpop.f32.mrf.mxu0
        %v1359 = vadd.f32 0.0, %v1358
        %v1360 = vpop.f32.mrf.mxu0
        %1361 = vdwg.mxu0
        %v1362 = vsel %vm877, %v1356, -inf
        %1363 = vmax.xlane.f32.xlu0 %v1362
        %v1364 = vpop.xlane.xlu0 %1363
        %v1365 = vsel %vm877, %v1359, -inf
        %1366 = vmax.xlane.f32.xlu0 %v1365
        %v1367 = vpop.xlane.xlu0 %1366
        %v1368 = vsub.f32 %v1356, %v1364
        %v1369 = vsub.f32 %v1359, %v1367
        %v1370 = vmul.f32 %v1368, 1.442695
        %v1371 = vpow.pop %v1370
        %v1372 = vmul.f32 %v1369, 1.442695
        %v1373 = vpow.pop %v1372
        %v1374 = vsel %vm877, %v1371, 0.0
        %1375 = vadd.xlane.f32.xlu0 %v1374
        %v1376 = vpop.xlane.xlu0 %1375
        %v1377 = vsel %vm877, %v1373, 0.0
        %1378 = vadd.xlane.f32.xlu0 %v1377
        %v1379 = vpop.xlane.xlu0 %1378
        %v1380 = vrcp.pop %v1376
        %v1381 = vrcp.pop %v1379
        %v1382 = vmul.f32 %v1371, %v1380
        %v1383 = vmul.f32 %v1373, %v1381
        %v1384 = vpack.c.bf16 %v1383, %v1382
        %1385 = vrot.lane.b32.xlu0 %v825, 48
        %v1386 = vpop.permute.xlu0 %1385
        %v1389 = vsel %vm877, %v1384, 0
        %1391 = vmatprep.subr.bf16.mxu0 0
        %1392 = vmatpush1.bf16.msra.mxu0 0
        %1393 = vmatprep.subr.bf16.mxu0 0
        %1394 = vmatpush1.bf16.msra.mxu0 0
        %1395 = vmatprep.subr.bf16.mxu0 0
        %1396 = vmatpush1.bf16.msra.mxu0 0
        %1397 = vmatprep.subr.bf16.mxu0 0
        %1398 = vmatpush1.bf16.msra.mxu0 0
        %1399 = vmatprep.subr.bf16.mxu0 0
        %1400 = vmatpush1.bf16.msra.mxu0 0
        %1401 = vmatprep.subr.bf16.mxu0 0
        %1402 = vmatpush1.bf16.msra.mxu0 0
        %1403 = vmatprep.subr.bf16.mxu0 0
        %1404 = vmatpush1.bf16.msra.mxu0 0
        %1405 = vmatprep.subr.bf16.mxu0 0
        %1406 = vmatpush1.bf16.msra.mxu0 %v1386
        %1407 = vmatprep.subr.bf16.mxu0 0
        %1408 = vmatpush2.bf16.msra.mxu0 0
        %1409 = vmatprep.subr.bf16.mxu0 0
        %1410 = vmatpush2.bf16.msra.mxu0 0
        %1411 = vmatprep.subr.bf16.mxu0 0
        %1412 = vmatpush2.bf16.msra.mxu0 0
        %1413 = vmatprep.subr.bf16.mxu0 0
        %1414 = vmatpush2.bf16.msra.mxu0 0
        %1415 = vmatprep.subr.bf16.mxu0 0
        %1416 = vmatpush2.bf16.msra.mxu0 0
        %1417 = vmatprep.subr.bf16.mxu0 0
        %1418 = vmatpush2.bf16.msra.mxu0 0
        %1419 = vmatprep.subr.bf16.mxu0 0
        %1420 = vmatpush2.bf16.msra.mxu0 0
        %1421 = vmatprep.subr.bf16.mxu0 0
        %1422 = vmatpush2.bf16.msra.mxu0 0
        %1423 = vmatprep.mubr.bf16.mxu0 0
        %1424 = vmatmul.mubr.bf16.gmra.mxu0 %v1389
        %v1425 = vpop.f32.mrf.mxu0
        %v1426 = vadd.f32 0.0, %v1425
        %v1427 = vpop.f32.mrf.mxu0
        %v1428 = vpop.f32.mrf.mxu0
        %v1429 = vadd.f32 0.0, %v1428
        %v1430 = vpop.f32.mrf.mxu0
        %1431 = vdwg.mxu0
        %1432 = vrot.lane.b32.xlu0 %v825, 108
        %v1433 = vpop.permute.xlu0 %1432
        %1434 = vrot.lane.b32.xlu0 %v825, 76
        %v1435 = vpop.permute.xlu0 %1434
        %v1437 = vsel %vm829, %v1433, 0
        %v1440 = vsel %vm829, %v1435, 0
        %1442 = vmatprep.subr.bf16.mxu0 0
        %1443 = vmatpush1.bf16.xpose.msra.mxu0 0
        %1444 = vmatprep.subr.bf16.mxu0 0
        %1445 = vmatpush1.bf16.xpose.msra.mxu0 0
        %1446 = vmatprep.subr.bf16.mxu0 0
        %1447 = vmatpush1.bf16.xpose.msra.mxu0 0
        %1448 = vmatprep.subr.bf16.mxu0 0
        %1449 = vmatpush1.bf16.xpose.msra.mxu0 0
        %1450 = vmatprep.subr.bf16.mxu0 0
        %1451 = vmatpush1.bf16.xpose.msra.mxu0 0
        %1452 = vmatprep.subr.bf16.mxu0 0
        %1453 = vmatpush1.bf16.xpose.msra.mxu0 0
        %1454 = vmatprep.subr.bf16.mxu0 0
        %1455 = vmatpush1.bf16.xpose.msra.mxu0 0
        %1456 = vmatprep.subr.bf16.mxu0 0
        %1457 = vmatpush1.bf16.xpose.msra.mxu0 %v1440
        %1458 = vmatprep.subr.bf16.mxu0 0
        %1459 = vmatpush2.bf16.xpose.msra.mxu0 0
        %1460 = vmatprep.subr.bf16.mxu0 0
        %1461 = vmatpush2.bf16.xpose.msra.mxu0 0
        %1462 = vmatprep.subr.bf16.mxu0 0
        %1463 = vmatpush2.bf16.xpose.msra.mxu0 0
        %1464 = vmatprep.subr.bf16.mxu0 0
        %1465 = vmatpush2.bf16.xpose.msra.mxu0 0
        %1466 = vmatprep.subr.bf16.mxu0 0
        %1467 = vmatpush2.bf16.xpose.msra.mxu0 0
        %1468 = vmatprep.subr.bf16.mxu0 0
        %1469 = vmatpush2.bf16.xpose.msra.mxu0 0
        %1470 = vmatprep.subr.bf16.mxu0 0
        %1471 = vmatpush2.bf16.xpose.msra.mxu0 0
        %1472 = vmatprep.subr.bf16.mxu0 0
        %1473 = vmatpush2.bf16.xpose.msra.mxu0 0
        %1474 = vmatprep.mubr.bf16.mxu0 0
        %1475 = vmatmul.mubr.bf16.gmra.mxu0 %v1437
        %v1476 = vpop.f32.mrf.mxu0
        %v1477 = vadd.f32 0.0, %v1476
        %v1478 = vpop.f32.mrf.mxu0
        %v1479 = vpop.f32.mrf.mxu0
        %v1480 = vadd.f32 0.0, %v1479
        %v1481 = vpop.f32.mrf.mxu0
        %1482 = vdwg.mxu0
        %v1483 = vsel %vm877, %v1477, -inf
        %1484 = vmax.xlane.f32.xlu0 %v1483
        %v1485 = vpop.xlane.xlu0 %1484
        %v1486 = vsel %vm877, %v1480, -inf
        %1487 = vmax.xlane.f32.xlu0 %v1486
        %v1488 = vpop.xlane.xlu0 %1487
        %v1489 = vsub.f32 %v1477, %v1485
        %v1490 = vsub.f32 %v1480, %v1488
        %v1491 = vmul.f32 %v1489, 1.442695
        %v1492 = vpow.pop %v1491
        %v1493 = vmul.f32 %v1490, 1.442695
        %v1494 = vpow.pop %v1493
        %v1495 = vsel %vm877, %v1492, 0.0
        %1496 = vadd.xlane.f32.xlu0 %v1495
        %v1497 = vpop.xlane.xlu0 %1496
        %v1498 = vsel %vm877, %v1494, 0.0
        %1499 = vadd.xlane.f32.xlu0 %v1498
        %v1500 = vpop.xlane.xlu0 %1499
        %v1501 = vrcp.pop %v1497
        %v1502 = vrcp.pop %v1500
        %v1503 = vmul.f32 %v1492, %v1501
        %v1504 = vmul.f32 %v1494, %v1502
        %v1505 = vpack.c.bf16 %v1504, %v1503
        %1506 = vrot.lane.b32.xlu0 %v825, 44
        %v1507 = vpop.permute.xlu0 %1506
        %v1510 = vsel %vm877, %v1505, 0
        %1512 = vmatprep.subr.bf16.mxu0 0
        %1513 = vmatpush1.bf16.msra.mxu0 0
        %1514 = vmatprep.subr.bf16.mxu0 0
        %1515 = vmatpush1.bf16.msra.mxu0 0
        %1516 = vmatprep.subr.bf16.mxu0 0
        %1517 = vmatpush1.bf16.msra.mxu0 0
        %1518 = vmatprep.subr.bf16.mxu0 0
        %1519 = vmatpush1.bf16.msra.mxu0 0
        %1520 = vmatprep.subr.bf16.mxu0 0
        %1521 = vmatpush1.bf16.msra.mxu0 0
        %1522 = vmatprep.subr.bf16.mxu0 0
        %1523 = vmatpush1.bf16.msra.mxu0 0
        %1524 = vmatprep.subr.bf16.mxu0 0
        %1525 = vmatpush1.bf16.msra.mxu0 0
        %1526 = vmatprep.subr.bf16.mxu0 0
        %1527 = vmatpush1.bf16.msra.mxu0 %v1507
        %1528 = vmatprep.subr.bf16.mxu0 0
        %1529 = vmatpush2.bf16.msra.mxu0 0
        %1530 = vmatprep.subr.bf16.mxu0 0
        %1531 = vmatpush2.bf16.msra.mxu0 0
        %1532 = vmatprep.subr.bf16.mxu0 0
        %1533 = vmatpush2.bf16.msra.mxu0 0
        %1534 = vmatprep.subr.bf16.mxu0 0
        %1535 = vmatpush2.bf16.msra.mxu0 0
        %1536 = vmatprep.subr.bf16.mxu0 0
        %1537 = vmatpush2.bf16.msra.mxu0 0
        %1538 = vmatprep.subr.bf16.mxu0 0
        %1539 = vmatpush2.bf16.msra.mxu0 0
        %1540 = vmatprep.subr.bf16.mxu0 0
        %1541 = vmatpush2.bf16.msra.mxu0 0
        %1542 = vmatprep.subr.bf16.mxu0 0
        %1543 = vmatpush2.bf16.msra.mxu0 0
        %1544 = vmatprep.mubr.bf16.mxu0 0
        %1545 = vmatmul.mubr.bf16.gmra.mxu0 %v1510
        %v1546 = vpop.f32.mrf.mxu0
        %v1547 = vadd.f32 0.0, %v1546
        %v1548 = vpop.f32.mrf.mxu0
        %v1549 = vpop.f32.mrf.mxu0
        %v1550 = vadd.f32 0.0, %v1549
        %v1551 = vpop.f32.mrf.mxu0
        %1552 = vdwg.mxu0
        %1553 = vrot.lane.b32.xlu0 %v825, 104
        %v1554 = vpop.permute.xlu0 %1553
        %1555 = vrot.lane.b32.xlu0 %v825, 72
        %v1556 = vpop.permute.xlu0 %1555
        %v1558 = vsel %vm829, %v1554, 0
        %v1561 = vsel %vm829, %v1556, 0
        %1563 = vmatprep.subr.bf16.mxu0 0
        %1564 = vmatpush1.bf16.xpose.msra.mxu0 0
        %1565 = vmatprep.subr.bf16.mxu0 0
        %1566 = vmatpush1.bf16.xpose.msra.mxu0 0
        %1567 = vmatprep.subr.bf16.mxu0 0
        %1568 = vmatpush1.bf16.xpose.msra.mxu0 0
        %1569 = vmatprep.subr.bf16.mxu0 0
        %1570 = vmatpush1.bf16.xpose.msra.mxu0 0
        %1571 = vmatprep.subr.bf16.mxu0 0
        %1572 = vmatpush1.bf16.xpose.msra.mxu0 0
        %1573 = vmatprep.subr.bf16.mxu0 0
        %1574 = vmatpush1.bf16.xpose.msra.mxu0 0
        %1575 = vmatprep.subr.bf16.mxu0 0
        %1576 = vmatpush1.bf16.xpose.msra.mxu0 0
        %1577 = vmatprep.subr.bf16.mxu0 0
        %1578 = vmatpush1.bf16.xpose.msra.mxu0 %v1561
        %1579 = vmatprep.subr.bf16.mxu0 0
        %1580 = vmatpush2.bf16.xpose.msra.mxu0 0
        %1581 = vmatprep.subr.bf16.mxu0 0
        %1582 = vmatpush2.bf16.xpose.msra.mxu0 0
        %1583 = vmatprep.subr.bf16.mxu0 0
        %1584 = vmatpush2.bf16.xpose.msra.mxu0 0
        %1585 = vmatprep.subr.bf16.mxu0 0
        %1586 = vmatpush2.bf16.xpose.msra.mxu0 0
        %1587 = vmatprep.subr.bf16.mxu0 0
        %1588 = vmatpush2.bf16.xpose.msra.mxu0 0
        %1589 = vmatprep.subr.bf16.mxu0 0
        %1590 = vmatpush2.bf16.xpose.msra.mxu0 0
        %1591 = vmatprep.subr.bf16.mxu0 0
        %1592 = vmatpush2.bf16.xpose.msra.mxu0 0
        %1593 = vmatprep.subr.bf16.mxu0 0
        %1594 = vmatpush2.bf16.xpose.msra.mxu0 0
        %1595 = vmatprep.mubr.bf16.mxu0 0
        %1596 = vmatmul.mubr.bf16.gmra.mxu0 %v1558
        %v1597 = vpop.f32.mrf.mxu0
        %v1598 = vadd.f32 0.0, %v1597
        %v1599 = vpop.f32.mrf.mxu0
        %v1600 = vpop.f32.mrf.mxu0
        %v1601 = vadd.f32 0.0, %v1600
        %v1602 = vpop.f32.mrf.mxu0
        %1603 = vdwg.mxu0
        %v1604 = vsel %vm877, %v1598, -inf
        %1605 = vmax.xlane.f32.xlu0 %v1604
        %v1606 = vpop.xlane.xlu0 %1605
        %v1607 = vsel %vm877, %v1601, -inf
        %1608 = vmax.xlane.f32.xlu0 %v1607
        %v1609 = vpop.xlane.xlu0 %1608
        %v1610 = vsub.f32 %v1598, %v1606
        %v1611 = vsub.f32 %v1601, %v1609
        %v1612 = vmul.f32 %v1610, 1.442695
        %v1613 = vpow.pop %v1612
        %v1614 = vmul.f32 %v1611, 1.442695
        %v1615 = vpow.pop %v1614
        %v1616 = vsel %vm877, %v1613, 0.0
        %1617 = vadd.xlane.f32.xlu0 %v1616
        %v1618 = vpop.xlane.xlu0 %1617
        %v1619 = vsel %vm877, %v1615, 0.0
        %1620 = vadd.xlane.f32.xlu0 %v1619
        %v1621 = vpop.xlane.xlu0 %1620
        %v1622 = vrcp.pop %v1618
        %v1623 = vrcp.pop %v1621
        %v1624 = vmul.f32 %v1613, %v1622
        %v1625 = vmul.f32 %v1615, %v1623
        %v1626 = vpack.c.bf16 %v1625, %v1624
        %1627 = vrot.lane.b32.xlu0 %v825, 40
        %v1628 = vpop.permute.xlu0 %1627
        %v1631 = vsel %vm877, %v1626, 0
        %1633 = vmatprep.subr.bf16.mxu0 0
        %1634 = vmatpush1.bf16.msra.mxu0 0
        %1635 = vmatprep.subr.bf16.mxu0 0
        %1636 = vmatpush1.bf16.msra.mxu0 0
        %1637 = vmatprep.subr.bf16.mxu0 0
        %1638 = vmatpush1.bf16.msra.mxu0 0
        %1639 = vmatprep.subr.bf16.mxu0 0
        %1640 = vmatpush1.bf16.msra.mxu0 0
        %1641 = vmatprep.subr.bf16.mxu0 0
        %1642 = vmatpush1.bf16.msra.mxu0 0
        %1643 = vmatprep.subr.bf16.mxu0 0
        %1644 = vmatpush1.bf16.msra.mxu0 0
        %1645 = vmatprep.subr.bf16.mxu0 0
        %1646 = vmatpush1.bf16.msra.mxu0 0
        %1647 = vmatprep.subr.bf16.mxu0 0
        %1648 = vmatpush1.bf16.msra.mxu0 %v1628
        %1649 = vmatprep.subr.bf16.mxu0 0
        %1650 = vmatpush2.bf16.msra.mxu0 0
        %1651 = vmatprep.subr.bf16.mxu0 0
        %1652 = vmatpush2.bf16.msra.mxu0 0
        %1653 = vmatprep.subr.bf16.mxu0 0
        %1654 = vmatpush2.bf16.msra.mxu0 0
        %1655 = vmatprep.subr.bf16.mxu0 0
        %1656 = vmatpush2.bf16.msra.mxu0 0
        %1657 = vmatprep.subr.bf16.mxu0 0
        %1658 = vmatpush2.bf16.msra.mxu0 0
        %1659 = vmatprep.subr.bf16.mxu0 0
        %1660 = vmatpush2.bf16.msra.mxu0 0
        %1661 = vmatprep.subr.bf16.mxu0 0
        %1662 = vmatpush2.bf16.msra.mxu0 0
        %1663 = vmatprep.subr.bf16.mxu0 0
        %1664 = vmatpush2.bf16.msra.mxu0 0
        %1665 = vmatprep.mubr.bf16.mxu0 0
        %1666 = vmatmul.mubr.bf16.gmra.mxu0 %v1631
        %v1667 = vpop.f32.mrf.mxu0
        %v1668 = vadd.f32 0.0, %v1667
        %v1669 = vpop.f32.mrf.mxu0
        %v1670 = vpop.f32.mrf.mxu0
        %v1671 = vadd.f32 0.0, %v1670
        %v1672 = vpop.f32.mrf.mxu0
        %1673 = vdwg.mxu0
        %1674 = vrot.lane.b32.xlu0 %v825, 100
        %v1675 = vpop.permute.xlu0 %1674
        %1676 = vrot.lane.b32.xlu0 %v825, 68
        %v1677 = vpop.permute.xlu0 %1676
        %v1679 = vsel %vm829, %v1675, 0
        %v1682 = vsel %vm829, %v1677, 0
        %1684 = vmatprep.subr.bf16.mxu0 0
        %1685 = vmatpush1.bf16.xpose.msra.mxu0 0
        %1686 = vmatprep.subr.bf16.mxu0 0
        %1687 = vmatpush1.bf16.xpose.msra.mxu0 0
        %1688 = vmatprep.subr.bf16.mxu0 0
        %1689 = vmatpush1.bf16.xpose.msra.mxu0 0
        %1690 = vmatprep.subr.bf16.mxu0 0
        %1691 = vmatpush1.bf16.xpose.msra.mxu0 0
        %1692 = vmatprep.subr.bf16.mxu0 0
        %1693 = vmatpush1.bf16.xpose.msra.mxu0 0
        %1694 = vmatprep.subr.bf16.mxu0 0
        %1695 = vmatpush1.bf16.xpose.msra.mxu0 0
        %1696 = vmatprep.subr.bf16.mxu0 0
        %1697 = vmatpush1.bf16.xpose.msra.mxu0 0
        %1698 = vmatprep.subr.bf16.mxu0 0
        %1699 = vmatpush1.bf16.xpose.msra.mxu0 %v1682
        %1700 = vmatprep.subr.bf16.mxu0 0
        %1701 = vmatpush2.bf16.xpose.msra.mxu0 0
        %1702 = vmatprep.subr.bf16.mxu0 0
        %1703 = vmatpush2.bf16.xpose.msra.mxu0 0
        %1704 = vmatprep.subr.bf16.mxu0 0
        %1705 = vmatpush2.bf16.xpose.msra.mxu0 0
        %1706 = vmatprep.subr.bf16.mxu0 0
        %1707 = vmatpush2.bf16.xpose.msra.mxu0 0
        %1708 = vmatprep.subr.bf16.mxu0 0
        %1709 = vmatpush2.bf16.xpose.msra.mxu0 0
        %1710 = vmatprep.subr.bf16.mxu0 0
        %1711 = vmatpush2.bf16.xpose.msra.mxu0 0
        %1712 = vmatprep.subr.bf16.mxu0 0
        %1713 = vmatpush2.bf16.xpose.msra.mxu0 0
        %1714 = vmatprep.subr.bf16.mxu0 0
        %1715 = vmatpush2.bf16.xpose.msra.mxu0 0
        %1716 = vmatprep.mubr.bf16.mxu0 0
        %1717 = vmatmul.mubr.bf16.gmra.mxu0 %v1679
        %v1718 = vpop.f32.mrf.mxu0
        %v1719 = vadd.f32 0.0, %v1718
        %v1720 = vpop.f32.mrf.mxu0
        %v1721 = vpop.f32.mrf.mxu0
        %v1722 = vadd.f32 0.0, %v1721
        %v1723 = vpop.f32.mrf.mxu0
        %1724 = vdwg.mxu0
        %v1725 = vsel %vm877, %v1719, -inf
        %1726 = vmax.xlane.f32.xlu0 %v1725
        %v1727 = vpop.xlane.xlu0 %1726
        %v1728 = vsel %vm877, %v1722, -inf
        %1729 = vmax.xlane.f32.xlu0 %v1728
        %v1730 = vpop.xlane.xlu0 %1729
        %v1731 = vsub.f32 %v1719, %v1727
        %v1732 = vsub.f32 %v1722, %v1730
        %v1733 = vmul.f32 %v1731, 1.442695
        %v1734 = vpow.pop %v1733
        %v1735 = vmul.f32 %v1732, 1.442695
        %v1736 = vpow.pop %v1735
        %v1737 = vsel %vm877, %v1734, 0.0
        %1738 = vadd.xlane.f32.xlu0 %v1737
        %v1739 = vpop.xlane.xlu0 %1738
        %v1740 = vsel %vm877, %v1736, 0.0
        %1741 = vadd.xlane.f32.xlu0 %v1740
        %v1742 = vpop.xlane.xlu0 %1741
        %v1743 = vrcp.pop %v1739
        %v1744 = vrcp.pop %v1742
        %v1745 = vmul.f32 %v1734, %v1743
        %v1746 = vmul.f32 %v1736, %v1744
        %v1747 = vpack.c.bf16 %v1746, %v1745
        %1748 = vrot.lane.b32.xlu0 %v825, 36
        %v1749 = vpop.permute.xlu0 %1748
        %v1752 = vsel %vm877, %v1747, 0
        %1754 = vmatprep.subr.bf16.mxu0 0
        %1755 = vmatpush1.bf16.msra.mxu0 0
        %1756 = vmatprep.subr.bf16.mxu0 0
        %1757 = vmatpush1.bf16.msra.mxu0 0
        %1758 = vmatprep.subr.bf16.mxu0 0
        %1759 = vmatpush1.bf16.msra.mxu0 0
        %1760 = vmatprep.subr.bf16.mxu0 0
        %1761 = vmatpush1.bf16.msra.mxu0 0
        %1762 = vmatprep.subr.bf16.mxu0 0
        %1763 = vmatpush1.bf16.msra.mxu0 0
        %1764 = vmatprep.subr.bf16.mxu0 0
        %1765 = vmatpush1.bf16.msra.mxu0 0
        %1766 = vmatprep.subr.bf16.mxu0 0
        %1767 = vmatpush1.bf16.msra.mxu0 0
        %1768 = vmatprep.subr.bf16.mxu0 0
        %1769 = vmatpush1.bf16.msra.mxu0 %v1749
        %1770 = vmatprep.subr.bf16.mxu0 0
        %1771 = vmatpush2.bf16.msra.mxu0 0
        %1772 = vmatprep.subr.bf16.mxu0 0
        %1773 = vmatpush2.bf16.msra.mxu0 0
        %1774 = vmatprep.subr.bf16.mxu0 0
        %1775 = vmatpush2.bf16.msra.mxu0 0
        %1776 = vmatprep.subr.bf16.mxu0 0
        %1777 = vmatpush2.bf16.msra.mxu0 0
        %1778 = vmatprep.subr.bf16.mxu0 0
        %1779 = vmatpush2.bf16.msra.mxu0 0
        %1780 = vmatprep.subr.bf16.mxu0 0
        %1781 = vmatpush2.bf16.msra.mxu0 0
        %1782 = vmatprep.subr.bf16.mxu0 0
        %1783 = vmatpush2.bf16.msra.mxu0 0
        %1784 = vmatprep.subr.bf16.mxu0 0
        %1785 = vmatpush2.bf16.msra.mxu0 0
        %1786 = vmatprep.mubr.bf16.mxu0 0
        %1787 = vmatmul.mubr.bf16.gmra.mxu0 %v1752
        %v1788 = vpop.f32.mrf.mxu0
        %v1789 = vadd.f32 0.0, %v1788
        %v1790 = vpop.f32.mrf.mxu0
        %v1791 = vpop.f32.mrf.mxu0
        %v1792 = vadd.f32 0.0, %v1791
        %v1793 = vpop.f32.mrf.mxu0
        %1794 = vdwg.mxu0
        %1797 = vrot.lane.b32.xlu0 %v1063, 4
        %v1798 = vpop.permute.xlu0 %1797
        %1799 = vrot.lane.b32.xlu0 %v1066, 4
        %v1800 = vpop.permute.xlu0 %1799
        %1805 = vrot.lane.b32.xlu0 %v1184, 8
        %v1806 = vpop.permute.xlu0 %1805
        %1807 = vrot.lane.b32.xlu0 %v1187, 8
        %v1808 = vpop.permute.xlu0 %1807
        %1813 = vrot.lane.b32.xlu0 %v1305, 12
        %v1814 = vpop.permute.xlu0 %1813
        %1815 = vrot.lane.b32.xlu0 %v1308, 12
        %v1816 = vpop.permute.xlu0 %1815
        %1821 = vrot.lane.b32.xlu0 %v1426, 16
        %v1822 = vpop.permute.xlu0 %1821
        %1823 = vrot.lane.b32.xlu0 %v1429, 16
        %v1824 = vpop.permute.xlu0 %1823
        %1829 = vrot.lane.b32.xlu0 %v1547, 20
        %v1830 = vpop.permute.xlu0 %1829
        %1831 = vrot.lane.b32.xlu0 %v1550, 20
        %v1832 = vpop.permute.xlu0 %1831
        %1837 = vrot.lane.b32.xlu0 %v1668, 24
        %v1838 = vpop.permute.xlu0 %1837
        %1839 = vrot.lane.b32.xlu0 %v1671, 24
        %v1840 = vpop.permute.xlu0 %1839
        %1845 = vrot.lane.b32.xlu0 %v1789, 28
        %v1846 = vpop.permute.xlu0 %1845
        %1847 = vrot.lane.b32.xlu0 %v1792, 28
        %v1848 = vpop.permute.xlu0 %1847
        %v1851 = vsel %vm829, %v942, %v1798
        %v1852 = vsel %vm829, %v945, %v1800
        %vm1853 = vcmask 64512
        %v1854 = vsel %vm1853, %v1851, %v1806
        %v1855 = vsel %vm1853, %v1852, %v1808
        %vm1856 = vcmask 97280
        %v1857 = vsel %vm1856, %v1854, %v1814
        %v1858 = vsel %vm1856, %v1855, %v1816
        %v1859 = vsel %vm877, %v1857, %v1822
        %v1860 = vsel %vm877, %v1858, %v1824
        %vm1861 = vcmask 162816
        %v1862 = vsel %vm1861, %v1859, %v1830
        %v1863 = vsel %vm1861, %v1860, %v1832
        %vm1864 = vcmask 195584
        %v1865 = vsel %vm1864, %v1862, %v1838
        %v1866 = vsel %vm1864, %v1863, %v1840
        %vm1867 = vcmask 228352
        %v1868 = vsel %vm1867, %v1865, %v1846
        %v1869 = vsel %vm1867, %v1866, %v1848
        %v1870 = vpack.c.bf16 %v1869, %v1868
        %v1872 = vlaneseq
        %v1873 = vshrl.u32 %v1872, 7
        %v1874 = vsub.s32 0, %v1873
        %v1875 = vrot.slane %v760, %v1874
        %v1881 = vunpack.c.l.b16 %v756
        %v1882 = vunpack.c.l.b16 %v757
        %v1883 = vunpack.c.l.b16 %v758
        %v1884 = vunpack.c.l.b16 %v759
        %v1885 = vpack.c.b16 %v1882, %v1881
        %v1886 = vpack.c.b16 %v1884, %v1883
        %v1890 = vsel %vm780, %v1870, 0
        %1892 = vmatprep.subr.bf16.mxu0 0
        %1893 = vmatpush1.bf16.msra.mxu0 0
        %1894 = vmatprep.subr.bf16.mxu0 0
        %1895 = vmatpush1.bf16.msra.mxu0 0
        %1896 = vmatprep.subr.bf16.mxu0 0
        %1897 = vmatpush1.bf16.msra.mxu0 0
        %1898 = vmatprep.subr.bf16.mxu0 0
        %1899 = vmatpush1.bf16.msra.mxu0 0
        %1900 = vmatprep.subr.bf16.mxu0 0
        %1901 = vmatpush1.bf16.msra.mxu0 0
        %1902 = vmatprep.subr.bf16.mxu0 0
        %1903 = vmatpush1.bf16.msra.mxu0 0
        %1904 = vmatprep.subr.bf16.mxu0 0
        %1905 = vmatpush1.bf16.msra.mxu0 %v1886
        %1906 = vmatprep.subr.bf16.mxu0 0
        %1907 = vmatpush1.bf16.msra.mxu0 %v1885
        %1908 = vmatprep.subr.bf16.mxu0 0
        %1909 = vmatpush2.bf16.msra.mxu0 0
        %1910 = vmatprep.subr.bf16.mxu0 0
        %1911 = vmatpush2.bf16.msra.mxu0 0
        %1912 = vmatprep.subr.bf16.mxu0 0
        %1913 = vmatpush2.bf16.msra.mxu0 0
        %1914 = vmatprep.subr.bf16.mxu0 0
        %1915 = vmatpush2.bf16.msra.mxu0 0
        %1916 = vmatprep.subr.bf16.mxu0 0
        %1917 = vmatpush2.bf16.msra.mxu0 0
        %1918 = vmatprep.subr.bf16.mxu0 0
        %1919 = vmatpush2.bf16.msra.mxu0 0
        %1920 = vmatprep.subr.bf16.mxu0 0
        %1921 = vmatpush2.bf16.msra.mxu0 0
        %1922 = vmatprep.subr.bf16.mxu0 0
        %1923 = vmatpush2.bf16.msra.mxu0 0
        %1924 = vmatprep.mubr.bf16.mxu0 0
        %1925 = vmatmul.mubr.bf16.gmra.mxu0 %v1890
        %v1926 = vpop.f32.mrf.mxu0
        %v1927 = vadd.f32 %v1875, %v1926
        %v1928 = vpop.f32.mrf.mxu0
        %v1929 = vpop.f32.mrf.mxu0
        %v1930 = vadd.f32 %v1875, %v1929
        %v1931 = vpop.f32.mrf.mxu0
        %1932 = vdwg.mxu0
        %v1933 = vadd.f32 %v748, %v1927
        %v1934 = vadd.f32 %v749, %v1930
        %v1935 = vld [vmem:[%s14] sm:$0x1]
        %v1936 = vld [vmem:[%s15] sm:$0x1]
        %v1937 = vsel %vm780, %v1933, 0.0
        %1938 = vadd.xlane.f32.xlu0 %v1937
        %v1939 = vpop.xlane.xlu0 %1938
        %v1940 = vsel %vm780, %v1934, 0.0
        %1941 = vadd.xlane.f32.xlu0 %v1940
        %v1942 = vpop.xlane.xlu0 %1941
        %v1943 = vrcp.pop 32.0
        %v1944 = vmul.f32 %v1939, %v1943
        %v1945 = vmul.f32 %v1942, %v1943
        %v1946 = vsub.f32 %v1933, %v1944
        %v1947 = vsub.f32 %v1934, %v1945
        %v1948 = vmul.f32 %v1946, %v1946
        %v1949 = vmul.f32 %v1947, %v1947
        %v1950 = vsel %vm780, %v1948, 0.0
        %1951 = vadd.xlane.f32.xlu0 %v1950
        %v1952 = vpop.xlane.xlu0 %1951
        %v1953 = vsel %vm780, %v1949, 0.0
        %1954 = vadd.xlane.f32.xlu0 %v1953
        %v1955 = vpop.xlane.xlu0 %1954
        %v1956 = vmul.f32 %v1952, %v1943
        %v1957 = vmul.f32 %v1955, %v1943
        %v1958 = vadd.f32 %v1956, 1e-05
        %v1959 = vadd.f32 %v1957, 1e-05
        %v1960 = vrsqrt.pop %v1958
        %v1961 = vrsqrt.pop %v1959
        %v1962 = vmul.f32 %v1946, %v1960
        %v1963 = vmul.f32 %v1947, %v1961
        %v1965 = vlaneseq
        %v1966 = vshrl.u32 %v1965, 7
        %v1967 = vsub.s32 0, %v1966
        %v1968 = vrot.slane %v1935, %v1967
        %v1970 = vmul.f32 %v1962, %v1968
        %v1971 = vmul.f32 %v1963, %v1968
        %v1973 = vlaneseq
        %v1974 = vshrl.u32 %v1973, 7
        %v1975 = vsub.s32 0, %v1974
        %v1976 = vrot.slane %v1936, %v1975
        %v1978 = vadd.f32 %v1970, %v1976
        %v1979 = vadd.f32 %v1971, %v1976
        %v1980 = vld [vmem:[%s6] sm:$0xf]
        %v1981 = vld [vmem:[%s6 + $0x4] sm:$0xf]
        %v1982 = vld [vmem:[%s6 + $0x8] sm:$0xf]
        %v1983 = vld [vmem:[%s6 + $0xc] sm:$0xf]
        %v1984 = vpack.c.bf16 %v1979, %v1978
        %v1985 = vld [vmem:[#allocation7] sm:$0x1]
        %v1987 = vlaneseq
        %v1988 = vshrl.u32 %v1987, 7
        %v1989 = vsub.s32 0, %v1988
        %v1990 = vrot.slane %v1985, %v1989
        %v1996 = vunpack.c.l.b16 %v1980
        %v1997 = vunpack.c.l.b16 %v1981
        %v1998 = vunpack.c.l.b16 %v1982
        %v1999 = vunpack.c.l.b16 %v1983
        %v2000 = vpack.c.b16 %v1997, %v1996
        %v2001 = vpack.c.b16 %v1999, %v1998
        %v2005 = vsel %vm780, %v1984, 0
        %2007 = vmatprep.subr.bf16.mxu0 0
        %2008 = vmatpush1.bf16.msra.mxu0 0
        %2009 = vmatprep.subr.bf16.mxu0 0
        %2010 = vmatpush1.bf16.msra.mxu0 0
        %2011 = vmatprep.subr.bf16.mxu0 0
        %2012 = vmatpush1.bf16.msra.mxu0 0
        %2013 = vmatprep.subr.bf16.mxu0 0
        %2014 = vmatpush1.bf16.msra.mxu0 0
        %2015 = vmatprep.subr.bf16.mxu0 0
        %2016 = vmatpush1.bf16.msra.mxu0 0
        %2017 = vmatprep.subr.bf16.mxu0 0
        %2018 = vmatpush1.bf16.msra.mxu0 0
        %2019 = vmatprep.subr.bf16.mxu0 0
        %2020 = vmatpush1.bf16.msra.mxu0 %v2001
        %2021 = vmatprep.subr.bf16.mxu0 0
        %2022 = vmatpush1.bf16.msra.mxu0 %v2000
        %2023 = vmatprep.subr.bf16.mxu0 0
        %2024 = vmatpush2.bf16.msra.mxu0 0
        %2025 = vmatprep.subr.bf16.mxu0 0
        %2026 = vmatpush2.bf16.msra.mxu0 0
        %2027 = vmatprep.subr.bf16.mxu0 0
        %2028 = vmatpush2.bf16.msra.mxu0 0
        %2029 = vmatprep.subr.bf16.mxu0 0
        %2030 = vmatpush2.bf16.msra.mxu0 0
        %2031 = vmatprep.subr.bf16.mxu0 0
        %2032 = vmatpush2.bf16.msra.mxu0 0
        %2033 = vmatprep.subr.bf16.mxu0 0
        %2034 = vmatpush2.bf16.msra.mxu0 0
        %2035 = vmatprep.subr.bf16.mxu0 0
        %2036 = vmatpush2.bf16.msra.mxu0 0
        %2037 = vmatprep.subr.bf16.mxu0 0
        %2038 = vmatpush2.bf16.msra.mxu0 0
        %2039 = vmatprep.mubr.bf16.mxu0 0
        %2040 = vmatmul.mubr.bf16.gmra.mxu0 %v2005
        %v2041 = vpop.f32.mrf.mxu0
        %v2042 = vadd.f32 %v1990, %v2041
        %v2043 = vpop.f32.mrf.mxu0
        %v2044 = vpop.f32.mrf.mxu0
        %v2045 = vadd.f32 %v1990, %v2044
        %v2046 = vpop.f32.mrf.mxu0
        %2047 = vdwg.mxu0
        %v2048 = vmax.f32 %v2042, 0.0
        %v2049 = vmax.f32 %v2045, 0.0
        %v2050 = vld [vmem:[%s8] sm:$0xf]
        %v2051 = vld [vmem:[%s8 + $0x4] sm:$0xf]
        %v2052 = vld [vmem:[%s8 + $0x8] sm:$0xf]
        %v2053 = vld [vmem:[%s8 + $0xc] sm:$0xf]
        %v2054 = vld [vmem:[%s8 + $0x10] sm:$0xf]
        %v2055 = vld [vmem:[%s8 + $0x14] sm:$0xf]
        %v2056 = vld [vmem:[%s8 + $0x18] sm:$0xf]
        %v2057 = vld [vmem:[%s8 + $0x1c] sm:$0xf]
        %v2058 = vld [vmem:[%s8 + $0x20] sm:$0xf]
        %v2059 = vld [vmem:[%s8 + $0x24] sm:$0xf]
        %v2060 = vld [vmem:[%s8 + $0x28] sm:$0xf]
        %v2061 = vld [vmem:[%s8 + $0x2c] sm:$0xf]
        %v2062 = vld [vmem:[%s8 + $0x30] sm:$0xf]
        %v2063 = vld [vmem:[%s8 + $0x34] sm:$0xf]
        %v2064 = vld [vmem:[%s8 + $0x38] sm:$0xf]
        %v2065 = vld [vmem:[%s8 + $0x3c] sm:$0xf]
        %v2066 = vpack.c.bf16 %v2049, %v2048
        %v2067 = vld [vmem:[#allocation8] sm:$0x1]
        %v2069 = vlaneseq
        %v2070 = vshrl.u32 %v2069, 7
        %v2071 = vsub.s32 0, %v2070
        %v2072 = vrot.slane %v2067, %v2071
        %v2090 = vunpack.c.l.b16 %v2050
        %v2091 = vunpack.c.l.b16 %v2051
        %v2092 = vunpack.c.l.b16 %v2052
        %v2093 = vunpack.c.l.b16 %v2053
        %v2094 = vunpack.c.l.b16 %v2054
        %v2095 = vunpack.c.l.b16 %v2055
        %v2096 = vunpack.c.l.b16 %v2056
        %v2097 = vunpack.c.l.b16 %v2057
        %v2098 = vunpack.c.l.b16 %v2058
        %v2099 = vunpack.c.l.b16 %v2059
        %v2100 = vunpack.c.l.b16 %v2060
        %v2101 = vunpack.c.l.b16 %v2061
        %v2102 = vunpack.c.l.b16 %v2062
        %v2103 = vunpack.c.l.b16 %v2063
        %v2104 = vunpack.c.l.b16 %v2064
        %v2105 = vunpack.c.l.b16 %v2065
        %v2106 = vpack.c.b16 %v2091, %v2090
        %v2107 = vpack.c.b16 %v2093, %v2092
        %v2108 = vpack.c.b16 %v2095, %v2094
        %v2109 = vpack.c.b16 %v2097, %v2096
        %v2110 = vpack.c.b16 %v2099, %v2098
        %v2111 = vpack.c.b16 %v2101, %v2100
        %v2112 = vpack.c.b16 %v2103, %v2102
        %v2113 = vpack.c.b16 %v2105, %v2104
        %2122 = vmatprep.subr.bf16.mxu0 0
        %2123 = vmatpush1.bf16.msra.mxu0 %v2113
        %2124 = vmatprep.subr.bf16.mxu0 0
        %2125 = vmatpush1.bf16.msra.mxu0 %v2112
        %2126 = vmatprep.subr.bf16.mxu0 0
        %2127 = vmatpush1.bf16.msra.mxu0 %v2111
        %2128 = vmatprep.subr.bf16.mxu0 0
        %2129 = vmatpush1.bf16.msra.mxu0 %v2110
        %2130 = vmatprep.subr.bf16.mxu0 0
        %2131 = vmatpush1.bf16.msra.mxu0 %v2109
        %2132 = vmatprep.subr.bf16.mxu0 0
        %2133 = vmatpush1.bf16.msra.mxu0 %v2108
        %2134 = vmatprep.subr.bf16.mxu0 0
        %2135 = vmatpush1.bf16.msra.mxu0 %v2107
        %2136 = vmatprep.subr.bf16.mxu0 0
        %2137 = vmatpush1.bf16.msra.mxu0 %v2106
        %2138 = vmatprep.subr.bf16.mxu0 0
        %2139 = vmatpush2.bf16.msra.mxu0 0
        %2140 = vmatprep.subr.bf16.mxu0 0
        %2141 = vmatpush2.bf16.msra.mxu0 0
        %2142 = vmatprep.subr.bf16.mxu0 0
        %2143 = vmatpush2.bf16.msra.mxu0 0
        %2144 = vmatprep.subr.bf16.mxu0 0
        %2145 = vmatpush2.bf16.msra.mxu0 0
        %2146 = vmatprep.subr.bf16.mxu0 0
        %2147 = vmatpush2.bf16.msra.mxu0 0
        %2148 = vmatprep.subr.bf16.mxu0 0
        %2149 = vmatpush2.bf16.msra.mxu0 0
        %2150 = vmatprep.subr.bf16.mxu0 0
        %2151 = vmatpush2.bf16.msra.mxu0 0
        %2152 = vmatprep.subr.bf16.mxu0 0
        %2153 = vmatpush2.bf16.msra.mxu0 0
        %2154 = vmatprep.mubr.bf16.mxu0 0
        %2155 = vmatmul.mubr.bf16.gmra.mxu0 %v2066
        %v2156 = vpop.f32.mrf.mxu0
        %v2157 = vadd.f32 %v2072, %v2156
        %v2158 = vpop.f32.mrf.mxu0
        %v2159 = vpop.f32.mrf.mxu0
        %v2160 = vadd.f32 %v2072, %v2159
        %v2161 = vpop.f32.mrf.mxu0
        %2162 = vdwg.mxu0
        %v2163 = vadd.f32 %v1978, %v2157
        %v2164 = vadd.f32 %v1979, %v2160
        %s2165 = scalar_lea.vmem %s14, 1
        %v2166 = vld [vmem:[%s2165] sm:$0x1]
        %s2167 = scalar_lea.vmem %s15, 1
        %v2168 = vld [vmem:[%s2167] sm:$0x1]
        %v2169 = vsel %vm780, %v2163, 0.0
        %2170 = vadd.xlane.f32.xlu0 %v2169
        %v2171 = vpop.xlane.xlu0 %2170
        %v2172 = vsel %vm780, %v2164, 0.0
        %2173 = vadd.xlane.f32.xlu0 %v2172
        %v2174 = vpop.xlane.xlu0 %2173
        %v2175 = vmul.f32 %v2171, %v1943
        %v2176 = vmul.f32 %v2174, %v1943
        %v2177 = vsub.f32 %v2163, %v2175
        %v2178 = vsub.f32 %v2164, %v2176
        %v2179 = vmul.f32 %v2177, %v2177
        %v2180 = vmul.f32 %v2178, %v2178
        %v2181 = vsel %vm780, %v2179, 0.0
        %2182 = vadd.xlane.f32.xlu0 %v2181
        %v2183 = vpop.xlane.xlu0 %2182
        %v2184 = vsel %vm780, %v2180, 0.0
        %2185 = vadd.xlane.f32.xlu0 %v2184
        %v2186 = vpop.xlane.xlu0 %2185
        %v2187 = vmul.f32 %v2183, %v1943
        %v2188 = vmul.f32 %v2186, %v1943
        %v2189 = vadd.f32 %v2187, 1e-05
        %v2190 = vadd.f32 %v2188, 1e-05
        %v2191 = vrsqrt.pop %v2189
        %v2192 = vrsqrt.pop %v2190
        %v2193 = vmul.f32 %v2177, %v2191
        %v2194 = vmul.f32 %v2178, %v2192
        %v2196 = vlaneseq
        %v2197 = vshrl.u32 %v2196, 7
        %v2198 = vsub.s32 0, %v2197
        %v2199 = vrot.slane %v2166, %v2198
        %v2201 = vmul.f32 %v2193, %v2199
        %v2202 = vmul.f32 %v2194, %v2199
        %v2204 = vlaneseq
        %v2205 = vshrl.u32 %v2204, 7
        %v2206 = vsub.s32 0, %v2205
        %v2207 = vrot.slane %v2168, %v2206
        %v2209 = vadd.f32 %v2201, %v2207
        %v2210 = vadd.f32 %v2202, %v2207
        %v2211 = vld [vmem:[%s10] sm:$0xf]
        %v2212 = vld [vmem:[%s10 + $0x4] sm:$0xf]
        %v2213 = vld [vmem:[%s10 + $0x8] sm:$0xf]
        %v2214 = vld [vmem:[%s10 + $0xc] sm:$0xf]
        %v2215 = vld [vmem:[#allocation10] sm:$0x1]
        %v2216 = vld [vmem:[%s12] sm:$0xf]
        %v2217 = vld [vmem:[%s12 + $0x4] sm:$0xf]
        %v2218 = vld [vmem:[%s12 + $0x8] sm:$0xf]
        %v2219 = vld [vmem:[%s12 + $0xc] sm:$0xf]
        %v2220 = vld [vmem:[#allocation11] sm:$0x1]
        %v2221 = vpack.c.bf16 %v750, %v750
        %v2223 = vlaneseq
        %v2224 = vshrl.u32 %v2223, 7
        %v2225 = vsub.s32 0, %v2224
        %v2226 = vrot.slane %v2215, %v2225
        %v2232 = vunpack.c.l.b16 %v2211
        %v2233 = vunpack.c.l.b16 %v2212
        %v2234 = vunpack.c.l.b16 %v2213
        %v2235 = vunpack.c.l.b16 %v2214
        %v2236 = vpack.c.b16 %v2233, %v2232
        %v2237 = vpack.c.b16 %v2235, %v2234
        %v2241 = vsel %vm780, %v2221, 0
        %2243 = vmatprep.subr.bf16.mxu0 0
        %2244 = vmatpush1.bf16.msra.mxu0 0
        %2245 = vmatprep.subr.bf16.mxu0 0
        %2246 = vmatpush1.bf16.msra.mxu0 0
        %2247 = vmatprep.subr.bf16.mxu0 0
        %2248 = vmatpush1.bf16.msra.mxu0 0
        %2249 = vmatprep.subr.bf16.mxu0 0
        %2250 = vmatpush1.bf16.msra.mxu0 0
        %2251 = vmatprep.subr.bf16.mxu0 0
        %2252 = vmatpush1.bf16.msra.mxu0 0
        %2253 = vmatprep.subr.bf16.mxu0 0
        %2254 = vmatpush1.bf16.msra.mxu0 0
        %2255 = vmatprep.subr.bf16.mxu0 0
        %2256 = vmatpush1.bf16.msra.mxu0 %v2237
        %2257 = vmatprep.subr.bf16.mxu0 0
        %2258 = vmatpush1.bf16.msra.mxu0 %v2236
        %2259 = vmatprep.subr.bf16.mxu0 0
        %2260 = vmatpush2.bf16.msra.mxu0 0
        %2261 = vmatprep.subr.bf16.mxu0 0
        %2262 = vmatpush2.bf16.msra.mxu0 0
        %2263 = vmatprep.subr.bf16.mxu0 0
        %2264 = vmatpush2.bf16.msra.mxu0 0
        %2265 = vmatprep.subr.bf16.mxu0 0
        %2266 = vmatpush2.bf16.msra.mxu0 0
        %2267 = vmatprep.subr.bf16.mxu0 0
        %2268 = vmatpush2.bf16.msra.mxu0 0
        %2269 = vmatprep.subr.bf16.mxu0 0
        %2270 = vmatpush2.bf16.msra.mxu0 0
        %2271 = vmatprep.subr.bf16.mxu0 0
        %2272 = vmatpush2.bf16.msra.mxu0 0
        %2273 = vmatprep.subr.bf16.mxu0 0
        %2274 = vmatpush2.bf16.msra.mxu0 0
        %2275 = vmatprep.mubr.bf16.mxu0 0
        %2276 = vmatmul.mubr.bf16.gmra.mxu0 %v2241
        %v2277 = vpop.f32.mrf.mxu0
        %v2278 = vadd.f32 %v2226, %v2277
        %v2279 = vpop.f32.mrf.mxu0
        %v2280 = vpop.f32.mrf.mxu0
        %v2281 = vpop.f32.mrf.mxu0
        %2282 = vdwg.mxu0
        %v2283 = vpack.c.bf16 %v2210, %v2209
        %2284 = vrot.lane.b32.xlu0 %v2236, 96
        %v2285 = vpop.permute.xlu0 %2284
        %2286 = vrot.lane.b32.xlu0 %v2237, 96
        %v2287 = vpop.permute.xlu0 %2286
        %2290 = vrot.lane.b32.xlu0 %v2226, 96
        %v2291 = vpop.permute.xlu0 %2290
        %v2294 = vsel %vm780, %v2283, 0
        %2296 = vmatprep.subr.bf16.mxu0 0
        %2297 = vmatpush1.bf16.msra.mxu0 0
        %2298 = vmatprep.subr.bf16.mxu0 0
        %2299 = vmatpush1.bf16.msra.mxu0 0
        %2300 = vmatprep.subr.bf16.mxu0 0
        %2301 = vmatpush1.bf16.msra.mxu0 0
        %2302 = vmatprep.subr.bf16.mxu0 0
        %2303 = vmatpush1.bf16.msra.mxu0 0
        %2304 = vmatprep.subr.bf16.mxu0 0
        %2305 = vmatpush1.bf16.msra.mxu0 0
        %2306 = vmatprep.subr.bf16.mxu0 0
        %2307 = vmatpush1.bf16.msra.mxu0 0
        %2308 = vmatprep.subr.bf16.mxu0 0
        %2309 = vmatpush1.bf16.msra.mxu0 %v2287
        %2310 = vmatprep.subr.bf16.mxu0 0
        %2311 = vmatpush1.bf16.msra.mxu0 %v2285
        %2312 = vmatprep.subr.bf16.mxu0 0
        %2313 = vmatpush2.bf16.msra.mxu0 0
        %2314 = vmatprep.subr.bf16.mxu0 0
        %2315 = vmatpush2.bf16.msra.mxu0 0
        %2316 = vmatprep.subr.bf16.mxu0 0
        %2317 = vmatpush2.bf16.msra.mxu0 0
        %2318 = vmatprep.subr.bf16.mxu0 0
        %2319 = vmatpush2.bf16.msra.mxu0 0
        %2320 = vmatprep.subr.bf16.mxu0 0
        %2321 = vmatpush2.bf16.msra.mxu0 0
        %2322 = vmatprep.subr.bf16.mxu0 0
        %2323 = vmatpush2.bf16.msra.mxu0 0
        %2324 = vmatprep.subr.bf16.mxu0 0
        %2325 = vmatpush2.bf16.msra.mxu0 0
        %2326 = vmatprep.subr.bf16.mxu0 0
        %2327 = vmatpush2.bf16.msra.mxu0 0
        %2328 = vmatprep.mubr.bf16.mxu0 0
        %2329 = vmatmul.mubr.bf16.gmra.mxu0 %v2294
        %v2330 = vpop.f32.mrf.mxu0
        %v2331 = vadd.f32 %v2291, %v2330
        %v2332 = vpop.f32.mrf.mxu0
        %v2333 = vpop.f32.mrf.mxu0
        %v2334 = vadd.f32 %v2291, %v2333
        %v2335 = vpop.f32.mrf.mxu0
        %2336 = vdwg.mxu0
        %v2337 = vpack.c.bf16 %v2278, %v2278
        %v2338 = vpack.c.bf16 %v2334, %v2331
        %v2340 = vsel %vm829, %v2337, 0
        %v2343 = vsel %vm829, %v2338, 0
        %2345 = vmatprep.subr.bf16.mxu0 0
        %2346 = vmatpush1.bf16.xpose.msra.mxu0 0
        %2347 = vmatprep.subr.bf16.mxu0 0
        %2348 = vmatpush1.bf16.xpose.msra.mxu0 0
        %2349 = vmatprep.subr.bf16.mxu0 0
        %2350 = vmatpush1.bf16.xpose.msra.mxu0 0
        %2351 = vmatprep.subr.bf16.mxu0 0
        %2352 = vmatpush1.bf16.xpose.msra.mxu0 0
        %2353 = vmatprep.subr.bf16.mxu0 0
        %2354 = vmatpush1.bf16.xpose.msra.mxu0 0
        %2355 = vmatprep.subr.bf16.mxu0 0
        %2356 = vmatpush1.bf16.xpose.msra.mxu0 0
        %2357 = vmatprep.subr.bf16.mxu0 0
        %2358 = vmatpush1.bf16.xpose.msra.mxu0 0
        %2359 = vmatprep.subr.bf16.mxu0 0
        %2360 = vmatpush1.bf16.xpose.msra.mxu0 %v2343
        %2361 = vmatprep.subr.bf16.mxu0 0
        %2362 = vmatpush2.bf16.xpose.msra.mxu0 0
        %2363 = vmatprep.subr.bf16.mxu0 0
        %2364 = vmatpush2.bf16.xpose.msra.mxu0 0
        %2365 = vmatprep.subr.bf16.mxu0 0
        %2366 = vmatpush2.bf16.xpose.msra.mxu0 0
        %2367 = vmatprep.subr.bf16.mxu0 0
        %2368 = vmatpush2.bf16.xpose.msra.mxu0 0
        %2369 = vmatprep.subr.bf16.mxu0 0
        %2370 = vmatpush2.bf16.xpose.msra.mxu0 0
        %2371 = vmatprep.subr.bf16.mxu0 0
        %2372 = vmatpush2.bf16.xpose.msra.mxu0 0
        %2373 = vmatprep.subr.bf16.mxu0 0
        %2374 = vmatpush2.bf16.xpose.msra.mxu0 0
        %2375 = vmatprep.subr.bf16.mxu0 0
        %2376 = vmatpush2.bf16.xpose.msra.mxu0 0
        %2377 = vmatprep.mubr.bf16.mxu0 0
        %2378 = vmatmul.mubr.bf16.gmra.mxu0 %v2340
        %v2379 = vpop.f32.mrf.mxu0
        %v2380 = vadd.f32 0.0, %v2379
        %v2381 = vpop.f32.mrf.mxu0
        %v2382 = vpop.f32.mrf.mxu0
        %v2383 = vpop.f32.mrf.mxu0
        %2384 = vdwg.mxu0
        %v2385 = vsel %vm877, %v2380, -inf
        %2386 = vmax.xlane.f32.xlu0 %v2385
        %v2387 = vpop.xlane.xlu0 %2386
        %v2388 = vsub.f32 %v2380, %v2387
        %v2389 = vmul.f32 %v2388, 1.442695
        %v2390 = vpow.pop %v2389
        %v2391 = vsel %vm877, %v2390, 0.0
        %2392 = vadd.xlane.f32.xlu0 %v2391
        %v2393 = vpop.xlane.xlu0 %2392
        %v2394 = vrcp.pop %v2393
        %v2395 = vmul.f32 %v2390, %v2394
        %v2396 = vpack.c.bf16 %v2395, %v2395
        %2398 = vrot.lane.b32.xlu0 %v2338, 96
        %v2399 = vpop.permute.xlu0 %2398
        %v2402 = vsel %vm877, %v2396, 0
        %2404 = vmatprep.subr.bf16.mxu0 0
        %2405 = vmatpush1.bf16.msra.mxu0 0
        %2406 = vmatprep.subr.bf16.mxu0 0
        %2407 = vmatpush1.bf16.msra.mxu0 0
        %2408 = vmatprep.subr.bf16.mxu0 0
        %2409 = vmatpush1.bf16.msra.mxu0 0
        %2410 = vmatprep.subr.bf16.mxu0 0
        %2411 = vmatpush1.bf16.msra.mxu0 0
        %2412 = vmatprep.subr.bf16.mxu0 0
        %2413 = vmatpush1.bf16.msra.mxu0 0
        %2414 = vmatprep.subr.bf16.mxu0 0
        %2415 = vmatpush1.bf16.msra.mxu0 0
        %2416 = vmatprep.subr.bf16.mxu0 0
        %2417 = vmatpush1.bf16.msra.mxu0 0
        %2418 = vmatprep.subr.bf16.mxu0 0
        %2419 = vmatpush1.bf16.msra.mxu0 %v2399
        %2420 = vmatprep.subr.bf16.mxu0 0
        %2421 = vmatpush2.bf16.msra.mxu0 0
        %2422 = vmatprep.subr.bf16.mxu0 0
        %2423 = vmatpush2.bf16.msra.mxu0 0
        %2424 = vmatprep.subr.bf16.mxu0 0
        %2425 = vmatpush2.bf16.msra.mxu0 0
        %2426 = vmatprep.subr.bf16.mxu0 0
        %2427 = vmatpush2.bf16.msra.mxu0 0
        %2428 = vmatprep.subr.bf16.mxu0 0
        %2429 = vmatpush2.bf16.msra.mxu0 0
        %2430 = vmatprep.subr.bf16.mxu0 0
        %2431 = vmatpush2.bf16.msra.mxu0 0
        %2432 = vmatprep.subr.bf16.mxu0 0
        %2433 = vmatpush2.bf16.msra.mxu0 0
        %2434 = vmatprep.subr.bf16.mxu0 0
        %2435 = vmatpush2.bf16.msra.mxu0 0
        %2436 = vmatprep.mubr.bf16.mxu0 0
        %2437 = vmatmul.mubr.bf16.gmra.mxu0 %v2402
        %v2438 = vpop.f32.mrf.mxu0
        %v2439 = vadd.f32 0.0, %v2438
        %v2440 = vpop.f32.mrf.mxu0
        %v2441 = vpop.f32.mrf.mxu0
        %v2442 = vpop.f32.mrf.mxu0
        %2443 = vdwg.mxu0
        %v2444 = vadd.f32 %v2395, 0.0
        %2446 = vrot.lane.b32.xlu0 %v2337, 124
        %v2447 = vpop.permute.xlu0 %2446
        %2448 = vrot.lane.b32.xlu0 %v2338, 124
        %v2449 = vpop.permute.xlu0 %2448
        %v2451 = vsel %vm829, %v2447, 0
        %v2454 = vsel %vm829, %v2449, 0
        %2456 = vmatprep.subr.bf16.mxu0 0
        %2457 = vmatpush1.bf16.xpose.msra.mxu0 0
        %2458 = vmatprep.subr.bf16.mxu0 0
        %2459 = vmatpush1.bf16.xpose.msra.mxu0 0
        %2460 = vmatprep.subr.bf16.mxu0 0
        %2461 = vmatpush1.bf16.xpose.msra.mxu0 0
        %2462 = vmatprep.subr.bf16.mxu0 0
        %2463 = vmatpush1.bf16.xpose.msra.mxu0 0
        %2464 = vmatprep.subr.bf16.mxu0 0
        %2465 = vmatpush1.bf16.xpose.msra.mxu0 0
        %2466 = vmatprep.subr.bf16.mxu0 0
        %2467 = vmatpush1.bf16.xpose.msra.mxu0 0
        %2468 = vmatprep.subr.bf16.mxu0 0
        %2469 = vmatpush1.bf16.xpose.msra.mxu0 0
        %2470 = vmatprep.subr.bf16.mxu0 0
        %2471 = vmatpush1.bf16.xpose.msra.mxu0 %v2454
        %2472 = vmatprep.subr.bf16.mxu0 0
        %2473 = vmatpush2.bf16.xpose.msra.mxu0 0
        %2474 = vmatprep.subr.bf16.mxu0 0
        %2475 = vmatpush2.bf16.xpose.msra.mxu0 0
        %2476 = vmatprep.subr.bf16.mxu0 0
        %2477 = vmatpush2.bf16.xpose.msra.mxu0 0
        %2478 = vmatprep.subr.bf16.mxu0 0
        %2479 = vmatpush2.bf16.xpose.msra.mxu0 0
        %2480 = vmatprep.subr.bf16.mxu0 0
        %2481 = vmatpush2.bf16.xpose.msra.mxu0 0
        %2482 = vmatprep.subr.bf16.mxu0 0
        %2483 = vmatpush2.bf16.xpose.msra.mxu0 0
        %2484 = vmatprep.subr.bf16.mxu0 0
        %2485 = vmatpush2.bf16.xpose.msra.mxu0 0
        %2486 = vmatprep.subr.bf16.mxu0 0
        %2487 = vmatpush2.bf16.xpose.msra.mxu0 0
        %2488 = vmatprep.mubr.bf16.mxu0 0
        %2489 = vmatmul.mubr.bf16.gmra.mxu0 %v2451
        %v2490 = vpop.f32.mrf.mxu0
        %v2491 = vadd.f32 0.0, %v2490
        %v2492 = vpop.f32.mrf.mxu0
        %v2493 = vpop.f32.mrf.mxu0
        %v2494 = vpop.f32.mrf.mxu0
        %2495 = vdwg.mxu0
        %v2496 = vsel %vm877, %v2491, -inf
        %2497 = vmax.xlane.f32.xlu0 %v2496
        %v2498 = vpop.xlane.xlu0 %2497
        %v2499 = vsub.f32 %v2491, %v2498
        %v2500 = vmul.f32 %v2499, 1.442695
        %v2501 = vpow.pop %v2500
        %v2502 = vsel %vm877, %v2501, 0.0
        %2503 = vadd.xlane.f32.xlu0 %v2502
        %v2504 = vpop.xlane.xlu0 %2503
        %v2505 = vrcp.pop %v2504
        %v2506 = vmul.f32 %v2501, %v2505
        %v2507 = vpack.c.bf16 %v2506, %v2506
        %2508 = vrot.lane.b32.xlu0 %v2338, 92
        %v2509 = vpop.permute.xlu0 %2508
        %v2512 = vsel %vm877, %v2507, 0
        %2514 = vmatprep.subr.bf16.mxu0 0
        %2515 = vmatpush1.bf16.msra.mxu0 0
        %2516 = vmatprep.subr.bf16.mxu0 0
        %2517 = vmatpush1.bf16.msra.mxu0 0
        %2518 = vmatprep.subr.bf16.mxu0 0
        %2519 = vmatpush1.bf16.msra.mxu0 0
        %2520 = vmatprep.subr.bf16.mxu0 0
        %2521 = vmatpush1.bf16.msra.mxu0 0
        %2522 = vmatprep.subr.bf16.mxu0 0
        %2523 = vmatpush1.bf16.msra.mxu0 0
        %2524 = vmatprep.subr.bf16.mxu0 0
        %2525 = vmatpush1.bf16.msra.mxu0 0
        %2526 = vmatprep.subr.bf16.mxu0 0
        %2527 = vmatpush1.bf16.msra.mxu0 0
        %2528 = vmatprep.subr.bf16.mxu0 0
        %2529 = vmatpush1.bf16.msra.mxu0 %v2509
        %2530 = vmatprep.subr.bf16.mxu0 0
        %2531 = vmatpush2.bf16.msra.mxu0 0
        %2532 = vmatprep.subr.bf16.mxu0 0
        %2533 = vmatpush2.bf16.msra.mxu0 0
        %2534 = vmatprep.subr.bf16.mxu0 0
        %2535 = vmatpush2.bf16.msra.mxu0 0
        %2536 = vmatprep.subr.bf16.mxu0 0
        %2537 = vmatpush2.bf16.msra.mxu0 0
        %2538 = vmatprep.subr.bf16.mxu0 0
        %2539 = vmatpush2.bf16.msra.mxu0 0
        %2540 = vmatprep.subr.bf16.mxu0 0
        %2541 = vmatpush2.bf16.msra.mxu0 0
        %2542 = vmatprep.subr.bf16.mxu0 0
        %2543 = vmatpush2.bf16.msra.mxu0 0
        %2544 = vmatprep.subr.bf16.mxu0 0
        %2545 = vmatpush2.bf16.msra.mxu0 0
        %2546 = vmatprep.mubr.bf16.mxu0 0
        %2547 = vmatmul.mubr.bf16.gmra.mxu0 %v2512
        %v2548 = vpop.f32.mrf.mxu0
        %v2549 = vadd.f32 0.0, %v2548
        %v2550 = vpop.f32.mrf.mxu0
        %v2551 = vpop.f32.mrf.mxu0
        %v2552 = vpop.f32.mrf.mxu0
        %2553 = vdwg.mxu0
        %v2554 = vadd.f32 %v2444, %v2506
        %2555 = vrot.lane.b32.xlu0 %v2337, 120
        %v2556 = vpop.permute.xlu0 %2555
        %2557 = vrot.lane.b32.xlu0 %v2338, 120
        %v2558 = vpop.permute.xlu0 %2557
        %v2560 = vsel %vm829, %v2556, 0
        %v2563 = vsel %vm829, %v2558, 0
        %2565 = vmatprep.subr.bf16.mxu0 0
        %2566 = vmatpush1.bf16.xpose.msra.mxu0 0
        %2567 = vmatprep.subr.bf16.mxu0 0
        %2568 = vmatpush1.bf16.xpose.msra.mxu0 0
        %2569 = vmatprep.subr.bf16.mxu0 0
        %2570 = vmatpush1.bf16.xpose.msra.mxu0 0
        %2571 = vmatprep.subr.bf16.mxu0 0
        %2572 = vmatpush1.bf16.xpose.msra.mxu0 0
        %2573 = vmatprep.subr.bf16.mxu0 0
        %2574 = vmatpush1.bf16.xpose.msra.mxu0 0
        %2575 = vmatprep.subr.bf16.mxu0 0
        %2576 = vmatpush1.bf16.xpose.msra.mxu0 0
        %2577 = vmatprep.subr.bf16.mxu0 0
        %2578 = vmatpush1.bf16.xpose.msra.mxu0 0
        %2579 = vmatprep.subr.bf16.mxu0 0
        %2580 = vmatpush1.bf16.xpose.msra.mxu0 %v2563
        %2581 = vmatprep.subr.bf16.mxu0 0
        %2582 = vmatpush2.bf16.xpose.msra.mxu0 0
        %2583 = vmatprep.subr.bf16.mxu0 0
        %2584 = vmatpush2.bf16.xpose.msra.mxu0 0
        %2585 = vmatprep.subr.bf16.mxu0 0
        %2586 = vmatpush2.bf16.xpose.msra.mxu0 0
        %2587 = vmatprep.subr.bf16.mxu0 0
        %2588 = vmatpush2.bf16.xpose.msra.mxu0 0
        %2589 = vmatprep.subr.bf16.mxu0 0
        %2590 = vmatpush2.bf16.xpose.msra.mxu0 0
        %2591 = vmatprep.subr.bf16.mxu0 0
        %2592 = vmatpush2.bf16.xpose.msra.mxu0 0
        %2593 = vmatprep.subr.bf16.mxu0 0
        %2594 = vmatpush2.bf16.xpose.msra.mxu0 0
        %2595 = vmatprep.subr.bf16.mxu0 0
        %2596 = vmatpush2.bf16.xpose.msra.mxu0 0
        %2597 = vmatprep.mubr.bf16.mxu0 0
        %2598 = vmatmul.mubr.bf16.gmra.mxu0 %v2560
        %v2599 = vpop.f32.mrf.mxu0
        %v2600 = vadd.f32 0.0, %v2599
        %v2601 = vpop.f32.mrf.mxu0
        %v2602 = vpop.f32.mrf.mxu0
        %v2603 = vpop.f32.mrf.mxu0
        %2604 = vdwg.mxu0
        %v2605 = vsel %vm877, %v2600, -inf
        %2606 = vmax.xlane.f32.xlu0 %v2605
        %v2607 = vpop.xlane.xlu0 %2606
        %v2608 = vsub.f32 %v2600, %v2607
        %v2609 = vmul.f32 %v2608, 1.442695
        %v2610 = vpow.pop %v2609
        %v2611 = vsel %vm877, %v2610, 0.0
        %2612 = vadd.xlane.f32.xlu0 %v2611
        %v2613 = vpop.xlane.xlu0 %2612
        %v2614 = vrcp.pop %v2613
        %v2615 = vmul.f32 %v2610, %v2614
        %v2616 = vpack.c.bf16 %v2615, %v2615
        %2617 = vrot.lane.b32.xlu0 %v2338, 88
        %v2618 = vpop.permute.xlu0 %2617
        %v2621 = vsel %vm877, %v2616, 0
        %2623 = vmatprep.subr.bf16.mxu0 0
        %2624 = vmatpush1.bf16.msra.mxu0 0
        %2625 = vmatprep.subr.bf16.mxu0 0
        %2626 = vmatpush1.bf16.msra.mxu0 0
        %2627 = vmatprep.subr.bf16.mxu0 0
        %2628 = vmatpush1.bf16.msra.mxu0 0
        %2629 = vmatprep.subr.bf16.mxu0 0
        %2630 = vmatpush1.bf16.msra.mxu0 0
        %2631 = vmatprep.subr.bf16.mxu0 0
        %2632 = vmatpush1.bf16.msra.mxu0 0
        %2633 = vmatprep.subr.bf16.mxu0 0
        %2634 = vmatpush1.bf16.msra.mxu0 0
        %2635 = vmatprep.subr.bf16.mxu0 0
        %2636 = vmatpush1.bf16.msra.mxu0 0
        %2637 = vmatprep.subr.bf16.mxu0 0
        %2638 = vmatpush1.bf16.msra.mxu0 %v2618
        %2639 = vmatprep.subr.bf16.mxu0 0
        %2640 = vmatpush2.bf16.msra.mxu0 0
        %2641 = vmatprep.subr.bf16.mxu0 0
        %2642 = vmatpush2.bf16.msra.mxu0 0
        %2643 = vmatprep.subr.bf16.mxu0 0
        %2644 = vmatpush2.bf16.msra.mxu0 0
        %2645 = vmatprep.subr.bf16.mxu0 0
        %2646 = vmatpush2.bf16.msra.mxu0 0
        %2647 = vmatprep.subr.bf16.mxu0 0
        %2648 = vmatpush2.bf16.msra.mxu0 0
        %2649 = vmatprep.subr.bf16.mxu0 0
        %2650 = vmatpush2.bf16.msra.mxu0 0
        %2651 = vmatprep.subr.bf16.mxu0 0
        %2652 = vmatpush2.bf16.msra.mxu0 0
        %2653 = vmatprep.subr.bf16.mxu0 0
        %2654 = vmatpush2.bf16.msra.mxu0 0
        %2655 = vmatprep.mubr.bf16.mxu0 0
        %2656 = vmatmul.mubr.bf16.gmra.mxu0 %v2621
        %v2657 = vpop.f32.mrf.mxu0
        %v2658 = vadd.f32 0.0, %v2657
        %v2659 = vpop.f32.mrf.mxu0
        %v2660 = vpop.f32.mrf.mxu0
        %v2661 = vpop.f32.mrf.mxu0
        %2662 = vdwg.mxu0
        %v2663 = vadd.f32 %v2554, %v2615
        %2664 = vrot.lane.b32.xlu0 %v2337, 116
        %v2665 = vpop.permute.xlu0 %2664
        %2666 = vrot.lane.b32.xlu0 %v2338, 116
        %v2667 = vpop.permute.xlu0 %2666
        %v2669 = vsel %vm829, %v2665, 0
        %v2672 = vsel %vm829, %v2667, 0
        %2674 = vmatprep.subr.bf16.mxu0 0
        %2675 = vmatpush1.bf16.xpose.msra.mxu0 0
        %2676 = vmatprep.subr.bf16.mxu0 0
        %2677 = vmatpush1.bf16.xpose.msra.mxu0 0
        %2678 = vmatprep.subr.bf16.mxu0 0
        %2679 = vmatpush1.bf16.xpose.msra.mxu0 0
        %2680 = vmatprep.subr.bf16.mxu0 0
        %2681 = vmatpush1.bf16.xpose.msra.mxu0 0
        %2682 = vmatprep.subr.bf16.mxu0 0
        %2683 = vmatpush1.bf16.xpose.msra.mxu0 0
        %2684 = vmatprep.subr.bf16.mxu0 0
        %2685 = vmatpush1.bf16.xpose.msra.mxu0 0
        %2686 = vmatprep.subr.bf16.mxu0 0
        %2687 = vmatpush1.bf16.xpose.msra.mxu0 0
        %2688 = vmatprep.subr.bf16.mxu0 0
        %2689 = vmatpush1.bf16.xpose.msra.mxu0 %v2672
        %2690 = vmatprep.subr.bf16.mxu0 0
        %2691 = vmatpush2.bf16.xpose.msra.mxu0 0
        %2692 = vmatprep.subr.bf16.mxu0 0
        %2693 = vmatpush2.bf16.xpose.msra.mxu0 0
        %2694 = vmatprep.subr.bf16.mxu0 0
        %2695 = vmatpush2.bf16.xpose.msra.mxu0 0
        %2696 = vmatprep.subr.bf16.mxu0 0
        %2697 = vmatpush2.bf16.xpose.msra.mxu0 0
        %2698 = vmatprep.subr.bf16.mxu0 0
        %2699 = vmatpush2.bf16.xpose.msra.mxu0 0
        %2700 = vmatprep.subr.bf16.mxu0 0
        %2701 = vmatpush2.bf16.xpose.msra.mxu0 0
        %2702 = vmatprep.subr.bf16.mxu0 0
        %2703 = vmatpush2.bf16.xpose.msra.mxu0 0
        %2704 = vmatprep.subr.bf16.mxu0 0
        %2705 = vmatpush2.bf16.xpose.msra.mxu0 0
        %2706 = vmatprep.mubr.bf16.mxu0 0
        %2707 = vmatmul.mubr.bf16.gmra.mxu0 %v2669
        %v2708 = vpop.f32.mrf.mxu0
        %v2709 = vadd.f32 0.0, %v2708
        %v2710 = vpop.f32.mrf.mxu0
        %v2711 = vpop.f32.mrf.mxu0
        %v2712 = vpop.f32.mrf.mxu0
        %2713 = vdwg.mxu0
        %v2714 = vsel %vm877, %v2709, -inf
        %2715 = vmax.xlane.f32.xlu0 %v2714
        %v2716 = vpop.xlane.xlu0 %2715
        %v2717 = vsub.f32 %v2709, %v2716
        %v2718 = vmul.f32 %v2717, 1.442695
        %v2719 = vpow.pop %v2718
        %v2720 = vsel %vm877, %v2719, 0.0
        %2721 = vadd.xlane.f32.xlu0 %v2720
        %v2722 = vpop.xlane.xlu0 %2721
        %v2723 = vrcp.pop %v2722
        %v2724 = vmul.f32 %v2719, %v2723
        %v2725 = vpack.c.bf16 %v2724, %v2724
        %2726 = vrot.lane.b32.xlu0 %v2338, 84
        %v2727 = vpop.permute.xlu0 %2726
        %v2730 = vsel %vm877, %v2725, 0
        %2732 = vmatprep.subr.bf16.mxu0 0
        %2733 = vmatpush1.bf16.msra.mxu0 0
        %2734 = vmatprep.subr.bf16.mxu0 0
        %2735 = vmatpush1.bf16.msra.mxu0 0
        %2736 = vmatprep.subr.bf16.mxu0 0
        %2737 = vmatpush1.bf16.msra.mxu0 0
        %2738 = vmatprep.subr.bf16.mxu0 0
        %2739 = vmatpush1.bf16.msra.mxu0 0
        %2740 = vmatprep.subr.bf16.mxu0 0
        %2741 = vmatpush1.bf16.msra.mxu0 0
        %2742 = vmatprep.subr.bf16.mxu0 0
        %2743 = vmatpush1.bf16.msra.mxu0 0
        %2744 = vmatprep.subr.bf16.mxu0 0
        %2745 = vmatpush1.bf16.msra.mxu0 0
        %2746 = vmatprep.subr.bf16.mxu0 0
        %2747 = vmatpush1.bf16.msra.mxu0 %v2727
        %2748 = vmatprep.subr.bf16.mxu0 0
        %2749 = vmatpush2.bf16.msra.mxu0 0
        %2750 = vmatprep.subr.bf16.mxu0 0
        %2751 = vmatpush2.bf16.msra.mxu0 0
        %2752 = vmatprep.subr.bf16.mxu0 0
        %2753 = vmatpush2.bf16.msra.mxu0 0
        %2754 = vmatprep.subr.bf16.mxu0 0
        %2755 = vmatpush2.bf16.msra.mxu0 0
        %2756 = vmatprep.subr.bf16.mxu0 0
        %2757 = vmatpush2.bf16.msra.mxu0 0
        %2758 = vmatprep.subr.bf16.mxu0 0
        %2759 = vmatpush2.bf16.msra.mxu0 0
        %2760 = vmatprep.subr.bf16.mxu0 0
        %2761 = vmatpush2.bf16.msra.mxu0 0
        %2762 = vmatprep.subr.bf16.mxu0 0
        %2763 = vmatpush2.bf16.msra.mxu0 0
        %2764 = vmatprep.mubr.bf16.mxu0 0
        %2765 = vmatmul.mubr.bf16.gmra.mxu0 %v2730
        %v2766 = vpop.f32.mrf.mxu0
        %v2767 = vadd.f32 0.0, %v2766
        %v2768 = vpop.f32.mrf.mxu0
        %v2769 = vpop.f32.mrf.mxu0
        %v2770 = vpop.f32.mrf.mxu0
        %2771 = vdwg.mxu0
        %v2772 = vadd.f32 %v2663, %v2724
        %2773 = vrot.lane.b32.xlu0 %v2337, 112
        %v2774 = vpop.permute.xlu0 %2773
        %2775 = vrot.lane.b32.xlu0 %v2338, 112
        %v2776 = vpop.permute.xlu0 %2775
        %v2778 = vsel %vm829, %v2774, 0
        %v2781 = vsel %vm829, %v2776, 0
        %2783 = vmatprep.subr.bf16.mxu0 0
        %2784 = vmatpush1.bf16.xpose.msra.mxu0 0
        %2785 = vmatprep.subr.bf16.mxu0 0
        %2786 = vmatpush1.bf16.xpose.msra.mxu0 0
        %2787 = vmatprep.subr.bf16.mxu0 0
        %2788 = vmatpush1.bf16.xpose.msra.mxu0 0
        %2789 = vmatprep.subr.bf16.mxu0 0
        %2790 = vmatpush1.bf16.xpose.msra.mxu0 0
        %2791 = vmatprep.subr.bf16.mxu0 0
        %2792 = vmatpush1.bf16.xpose.msra.mxu0 0
        %2793 = vmatprep.subr.bf16.mxu0 0
        %2794 = vmatpush1.bf16.xpose.msra.mxu0 0
        %2795 = vmatprep.subr.bf16.mxu0 0
        %2796 = vmatpush1.bf16.xpose.msra.mxu0 0
        %2797 = vmatprep.subr.bf16.mxu0 0
        %2798 = vmatpush1.bf16.xpose.msra.mxu0 %v2781
        %2799 = vmatprep.subr.bf16.mxu0 0
        %2800 = vmatpush2.bf16.xpose.msra.mxu0 0
        %2801 = vmatprep.subr.bf16.mxu0 0
        %2802 = vmatpush2.bf16.xpose.msra.mxu0 0
        %2803 = vmatprep.subr.bf16.mxu0 0
        %2804 = vmatpush2.bf16.xpose.msra.mxu0 0
        %2805 = vmatprep.subr.bf16.mxu0 0
        %2806 = vmatpush2.bf16.xpose.msra.mxu0 0
        %2807 = vmatprep.subr.bf16.mxu0 0
        %2808 = vmatpush2.bf16.xpose.msra.mxu0 0
        %2809 = vmatprep.subr.bf16.mxu0 0
        %2810 = vmatpush2.bf16.xpose.msra.mxu0 0
        %2811 = vmatprep.subr.bf16.mxu0 0
        %2812 = vmatpush2.bf16.xpose.msra.mxu0 0
        %2813 = vmatprep.subr.bf16.mxu0 0
        %2814 = vmatpush2.bf16.xpose.msra.mxu0 0
        %2815 = vmatprep.mubr.bf16.mxu0 0
        %2816 = vmatmul.mubr.bf16.gmra.mxu0 %v2778
        %v2817 = vpop.f32.mrf.mxu0
        %v2818 = vadd.f32 0.0, %v2817
        %v2819 = vpop.f32.mrf.mxu0
        %v2820 = vpop.f32.mrf.mxu0
        %v2821 = vpop.f32.mrf.mxu0
        %2822 = vdwg.mxu0
        %v2823 = vsel %vm877, %v2818, -inf
        %2824 = vmax.xlane.f32.xlu0 %v2823
        %v2825 = vpop.xlane.xlu0 %2824
        %v2826 = vsub.f32 %v2818, %v2825
        %v2827 = vmul.f32 %v2826, 1.442695
        %v2828 = vpow.pop %v2827
        %v2829 = vsel %vm877, %v2828, 0.0
        %2830 = vadd.xlane.f32.xlu0 %v2829
        %v2831 = vpop.xlane.xlu0 %2830
        %v2832 = vrcp.pop %v2831
        %v2833 = vmul.f32 %v2828, %v2832
        %v2834 = vpack.c.bf16 %v2833, %v2833
        %2835 = vrot.lane.b32.xlu0 %v2338, 80
        %v2836 = vpop.permute.xlu0 %2835
        %v2839 = vsel %vm877, %v2834, 0
        %2841 = vmatprep.subr.bf16.mxu0 0
        %2842 = vmatpush1.bf16.msra.mxu0 0
        %2843 = vmatprep.subr.bf16.mxu0 0
        %2844 = vmatpush1.bf16.msra.mxu0 0
        %2845 = vmatprep.subr.bf16.mxu0 0
        %2846 = vmatpush1.bf16.msra.mxu0 0
        %2847 = vmatprep.subr.bf16.mxu0 0
        %2848 = vmatpush1.bf16.msra.mxu0 0
        %2849 = vmatprep.subr.bf16.mxu0 0
        %2850 = vmatpush1.bf16.msra.mxu0 0
        %2851 = vmatprep.subr.bf16.mxu0 0
        %2852 = vmatpush1.bf16.msra.mxu0 0
        %2853 = vmatprep.subr.bf16.mxu0 0
        %2854 = vmatpush1.bf16.msra.mxu0 0
        %2855 = vmatprep.subr.bf16.mxu0 0
        %2856 = vmatpush1.bf16.msra.mxu0 %v2836
        %2857 = vmatprep.subr.bf16.mxu0 0
        %2858 = vmatpush2.bf16.msra.mxu0 0
        %2859 = vmatprep.subr.bf16.mxu0 0
        %2860 = vmatpush2.bf16.msra.mxu0 0
        %2861 = vmatprep.subr.bf16.mxu0 0
        %2862 = vmatpush2.bf16.msra.mxu0 0
        %2863 = vmatprep.subr.bf16.mxu0 0
        %2864 = vmatpush2.bf16.msra.mxu0 0
        %2865 = vmatprep.subr.bf16.mxu0 0
        %2866 = vmatpush2.bf16.msra.mxu0 0
        %2867 = vmatprep.subr.bf16.mxu0 0
        %2868 = vmatpush2.bf16.msra.mxu0 0
        %2869 = vmatprep.subr.bf16.mxu0 0
        %2870 = vmatpush2.bf16.msra.mxu0 0
        %2871 = vmatprep.subr.bf16.mxu0 0
        %2872 = vmatpush2.bf16.msra.mxu0 0
        %2873 = vmatprep.mubr.bf16.mxu0 0
        %2874 = vmatmul.mubr.bf16.gmra.mxu0 %v2839
        %v2875 = vpop.f32.mrf.mxu0
        %v2876 = vadd.f32 0.0, %v2875
        %v2877 = vpop.f32.mrf.mxu0
        %v2878 = vpop.f32.mrf.mxu0
        %v2879 = vpop.f32.mrf.mxu0
        %2880 = vdwg.mxu0
        %v2881 = vadd.f32 %v2772, %v2833
        %2882 = vrot.lane.b32.xlu0 %v2337, 108
        %v2883 = vpop.permute.xlu0 %2882
        %2884 = vrot.lane.b32.xlu0 %v2338, 108
        %v2885 = vpop.permute.xlu0 %2884
        %v2887 = vsel %vm829, %v2883, 0
        %v2890 = vsel %vm829, %v2885, 0
        %2892 = vmatprep.subr.bf16.mxu0 0
        %2893 = vmatpush1.bf16.xpose.msra.mxu0 0
        %2894 = vmatprep.subr.bf16.mxu0 0
        %2895 = vmatpush1.bf16.xpose.msra.mxu0 0
        %2896 = vmatprep.subr.bf16.mxu0 0
        %2897 = vmatpush1.bf16.xpose.msra.mxu0 0
        %2898 = vmatprep.subr.bf16.mxu0 0
        %2899 = vmatpush1.bf16.xpose.msra.mxu0 0
        %2900 = vmatprep.subr.bf16.mxu0 0
        %2901 = vmatpush1.bf16.xpose.msra.mxu0 0
        %2902 = vmatprep.subr.bf16.mxu0 0
        %2903 = vmatpush1.bf16.xpose.msra.mxu0 0
        %2904 = vmatprep.subr.bf16.mxu0 0
        %2905 = vmatpush1.bf16.xpose.msra.mxu0 0
        %2906 = vmatprep.subr.bf16.mxu0 0
        %2907 = vmatpush1.bf16.xpose.msra.mxu0 %v2890
        %2908 = vmatprep.subr.bf16.mxu0 0
        %2909 = vmatpush2.bf16.xpose.msra.mxu0 0
        %2910 = vmatprep.subr.bf16.mxu0 0
        %2911 = vmatpush2.bf16.xpose.msra.mxu0 0
        %2912 = vmatprep.subr.bf16.mxu0 0
        %2913 = vmatpush2.bf16.xpose.msra.mxu0 0
        %2914 = vmatprep.subr.bf16.mxu0 0
        %2915 = vmatpush2.bf16.xpose.msra.mxu0 0
        %2916 = vmatprep.subr.bf16.mxu0 0
        %2917 = vmatpush2.bf16.xpose.msra.mxu0 0
        %2918 = vmatprep.subr.bf16.mxu0 0
        %2919 = vmatpush2.bf16.xpose.msra.mxu0 0
        %2920 = vmatprep.subr.bf16.mxu0 0
        %2921 = vmatpush2.bf16.xpose.msra.mxu0 0
        %2922 = vmatprep.subr.bf16.mxu0 0
        %2923 = vmatpush2.bf16.xpose.msra.mxu0 0
        %2924 = vmatprep.mubr.bf16.mxu0 0
        %2925 = vmatmul.mubr.bf16.gmra.mxu0 %v2887
        %v2926 = vpop.f32.mrf.mxu0
        %v2927 = vadd.f32 0.0, %v2926
        %v2928 = vpop.f32.mrf.mxu0
        %v2929 = vpop.f32.mrf.mxu0
        %v2930 = vpop.f32.mrf.mxu0
        %2931 = vdwg.mxu0
        %v2932 = vsel %vm877, %v2927, -inf
        %2933 = vmax.xlane.f32.xlu0 %v2932
        %v2934 = vpop.xlane.xlu0 %2933
        %v2935 = vsub.f32 %v2927, %v2934
        %v2936 = vmul.f32 %v2935, 1.442695
        %v2937 = vpow.pop %v2936
        %v2938 = vsel %vm877, %v2937, 0.0
        %2939 = vadd.xlane.f32.xlu0 %v2938
        %v2940 = vpop.xlane.xlu0 %2939
        %v2941 = vrcp.pop %v2940
        %v2942 = vmul.f32 %v2937, %v2941
        %v2943 = vpack.c.bf16 %v2942, %v2942
        %2944 = vrot.lane.b32.xlu0 %v2338, 76
        %v2945 = vpop.permute.xlu0 %2944
        %v2948 = vsel %vm877, %v2943, 0
        %2950 = vmatprep.subr.bf16.mxu0 0
        %2951 = vmatpush1.bf16.msra.mxu0 0
        %2952 = vmatprep.subr.bf16.mxu0 0
        %2953 = vmatpush1.bf16.msra.mxu0 0
        %2954 = vmatprep.subr.bf16.mxu0 0
        %2955 = vmatpush1.bf16.msra.mxu0 0
        %2956 = vmatprep.subr.bf16.mxu0 0
        %2957 = vmatpush1.bf16.msra.mxu0 0
        %2958 = vmatprep.subr.bf16.mxu0 0
        %2959 = vmatpush1.bf16.msra.mxu0 0
        %2960 = vmatprep.subr.bf16.mxu0 0
        %2961 = vmatpush1.bf16.msra.mxu0 0
        %2962 = vmatprep.subr.bf16.mxu0 0
        %2963 = vmatpush1.bf16.msra.mxu0 0
        %2964 = vmatprep.subr.bf16.mxu0 0
        %2965 = vmatpush1.bf16.msra.mxu0 %v2945
        %2966 = vmatprep.subr.bf16.mxu0 0
        %2967 = vmatpush2.bf16.msra.mxu0 0
        %2968 = vmatprep.subr.bf16.mxu0 0
        %2969 = vmatpush2.bf16.msra.mxu0 0
        %2970 = vmatprep.subr.bf16.mxu0 0
        %2971 = vmatpush2.bf16.msra.mxu0 0
        %2972 = vmatprep.subr.bf16.mxu0 0
        %2973 = vmatpush2.bf16.msra.mxu0 0
        %2974 = vmatprep.subr.bf16.mxu0 0
        %2975 = vmatpush2.bf16.msra.mxu0 0
        %2976 = vmatprep.subr.bf16.mxu0 0
        %2977 = vmatpush2.bf16.msra.mxu0 0
        %2978 = vmatprep.subr.bf16.mxu0 0
        %2979 = vmatpush2.bf16.msra.mxu0 0
        %2980 = vmatprep.subr.bf16.mxu0 0
        %2981 = vmatpush2.bf16.msra.mxu0 0
        %2982 = vmatprep.mubr.bf16.mxu0 0
        %2983 = vmatmul.mubr.bf16.gmra.mxu0 %v2948
        %v2984 = vpop.f32.mrf.mxu0
        %v2985 = vadd.f32 0.0, %v2984
        %v2986 = vpop.f32.mrf.mxu0
        %v2987 = vpop.f32.mrf.mxu0
        %v2988 = vpop.f32.mrf.mxu0
        %2989 = vdwg.mxu0
        %v2990 = vadd.f32 %v2881, %v2942
        %2991 = vrot.lane.b32.xlu0 %v2337, 104
        %v2992 = vpop.permute.xlu0 %2991
        %2993 = vrot.lane.b32.xlu0 %v2338, 104
        %v2994 = vpop.permute.xlu0 %2993
        %v2996 = vsel %vm829, %v2992, 0
        %v2999 = vsel %vm829, %v2994, 0
        %3001 = vmatprep.subr.bf16.mxu0 0
        %3002 = vmatpush1.bf16.xpose.msra.mxu0 0
        %3003 = vmatprep.subr.bf16.mxu0 0
        %3004 = vmatpush1.bf16.xpose.msra.mxu0 0
        %3005 = vmatprep.subr.bf16.mxu0 0
        %3006 = vmatpush1.bf16.xpose.msra.mxu0 0
        %3007 = vmatprep.subr.bf16.mxu0 0
        %3008 = vmatpush1.bf16.xpose.msra.mxu0 0
        %3009 = vmatprep.subr.bf16.mxu0 0
        %3010 = vmatpush1.bf16.xpose.msra.mxu0 0
        %3011 = vmatprep.subr.bf16.mxu0 0
        %3012 = vmatpush1.bf16.xpose.msra.mxu0 0
        %3013 = vmatprep.subr.bf16.mxu0 0
        %3014 = vmatpush1.bf16.xpose.msra.mxu0 0
        %3015 = vmatprep.subr.bf16.mxu0 0
        %3016 = vmatpush1.bf16.xpose.msra.mxu0 %v2999
        %3017 = vmatprep.subr.bf16.mxu0 0
        %3018 = vmatpush2.bf16.xpose.msra.mxu0 0
        %3019 = vmatprep.subr.bf16.mxu0 0
        %3020 = vmatpush2.bf16.xpose.msra.mxu0 0
        %3021 = vmatprep.subr.bf16.mxu0 0
        %3022 = vmatpush2.bf16.xpose.msra.mxu0 0
        %3023 = vmatprep.subr.bf16.mxu0 0
        %3024 = vmatpush2.bf16.xpose.msra.mxu0 0
        %3025 = vmatprep.subr.bf16.mxu0 0
        %3026 = vmatpush2.bf16.xpose.msra.mxu0 0
        %3027 = vmatprep.subr.bf16.mxu0 0
        %3028 = vmatpush2.bf16.xpose.msra.mxu0 0
        %3029 = vmatprep.subr.bf16.mxu0 0
        %3030 = vmatpush2.bf16.xpose.msra.mxu0 0
        %3031 = vmatprep.subr.bf16.mxu0 0
        %3032 = vmatpush2.bf16.xpose.msra.mxu0 0
        %3033 = vmatprep.mubr.bf16.mxu0 0
        %3034 = vmatmul.mubr.bf16.gmra.mxu0 %v2996
        %v3035 = vpop.f32.mrf.mxu0
        %v3036 = vadd.f32 0.0, %v3035
        %v3037 = vpop.f32.mrf.mxu0
        %v3038 = vpop.f32.mrf.mxu0
        %v3039 = vpop.f32.mrf.mxu0
        %3040 = vdwg.mxu0
        %v3041 = vsel %vm877, %v3036, -inf
        %3042 = vmax.xlane.f32.xlu0 %v3041
        %v3043 = vpop.xlane.xlu0 %3042
        %v3044 = vsub.f32 %v3036, %v3043
        %v3045 = vmul.f32 %v3044, 1.442695
        %v3046 = vpow.pop %v3045
        %v3047 = vsel %vm877, %v3046, 0.0
        %3048 = vadd.xlane.f32.xlu0 %v3047
        %v3049 = vpop.xlane.xlu0 %3048
        %v3050 = vrcp.pop %v3049
        %v3051 = vmul.f32 %v3046, %v3050
        %v3052 = vpack.c.bf16 %v3051, %v3051
        %3053 = vrot.lane.b32.xlu0 %v2338, 72
        %v3054 = vpop.permute.xlu0 %3053
        %v3057 = vsel %vm877, %v3052, 0
        %3059 = vmatprep.subr.bf16.mxu0 0
        %3060 = vmatpush1.bf16.msra.mxu0 0
        %3061 = vmatprep.subr.bf16.mxu0 0
        %3062 = vmatpush1.bf16.msra.mxu0 0
        %3063 = vmatprep.subr.bf16.mxu0 0
        %3064 = vmatpush1.bf16.msra.mxu0 0
        %3065 = vmatprep.subr.bf16.mxu0 0
        %3066 = vmatpush1.bf16.msra.mxu0 0
        %3067 = vmatprep.subr.bf16.mxu0 0
        %3068 = vmatpush1.bf16.msra.mxu0 0
        %3069 = vmatprep.subr.bf16.mxu0 0
        %3070 = vmatpush1.bf16.msra.mxu0 0
        %3071 = vmatprep.subr.bf16.mxu0 0
        %3072 = vmatpush1.bf16.msra.mxu0 0
        %3073 = vmatprep.subr.bf16.mxu0 0
        %3074 = vmatpush1.bf16.msra.mxu0 %v3054
        %3075 = vmatprep.subr.bf16.mxu0 0
        %3076 = vmatpush2.bf16.msra.mxu0 0
        %3077 = vmatprep.subr.bf16.mxu0 0
        %3078 = vmatpush2.bf16.msra.mxu0 0
        %3079 = vmatprep.subr.bf16.mxu0 0
        %3080 = vmatpush2.bf16.msra.mxu0 0
        %3081 = vmatprep.subr.bf16.mxu0 0
        %3082 = vmatpush2.bf16.msra.mxu0 0
        %3083 = vmatprep.subr.bf16.mxu0 0
        %3084 = vmatpush2.bf16.msra.mxu0 0
        %3085 = vmatprep.subr.bf16.mxu0 0
        %3086 = vmatpush2.bf16.msra.mxu0 0
        %3087 = vmatprep.subr.bf16.mxu0 0
        %3088 = vmatpush2.bf16.msra.mxu0 0
        %3089 = vmatprep.subr.bf16.mxu0 0
        %3090 = vmatpush2.bf16.msra.mxu0 0
        %3091 = vmatprep.mubr.bf16.mxu0 0
        %3092 = vmatmul.mubr.bf16.gmra.mxu0 %v3057
        %v3093 = vpop.f32.mrf.mxu0
        %v3094 = vadd.f32 0.0, %v3093
        %v3095 = vpop.f32.mrf.mxu0
        %v3096 = vpop.f32.mrf.mxu0
        %v3097 = vpop.f32.mrf.mxu0
        %3098 = vdwg.mxu0
        %v3099 = vadd.f32 %v2990, %v3051
        %3100 = vrot.lane.b32.xlu0 %v2337, 100
        %v3101 = vpop.permute.xlu0 %3100
        %3102 = vrot.lane.b32.xlu0 %v2338, 100
        %v3103 = vpop.permute.xlu0 %3102
        %v3105 = vsel %vm829, %v3101, 0
        %v3108 = vsel %vm829, %v3103, 0
        %3110 = vmatprep.subr.bf16.mxu0 0
        %3111 = vmatpush1.bf16.xpose.msra.mxu0 0
        %3112 = vmatprep.subr.bf16.mxu0 0
        %3113 = vmatpush1.bf16.xpose.msra.mxu0 0
        %3114 = vmatprep.subr.bf16.mxu0 0
        %3115 = vmatpush1.bf16.xpose.msra.mxu0 0
        %3116 = vmatprep.subr.bf16.mxu0 0
        %3117 = vmatpush1.bf16.xpose.msra.mxu0 0
        %3118 = vmatprep.subr.bf16.mxu0 0
        %3119 = vmatpush1.bf16.xpose.msra.mxu0 0
        %3120 = vmatprep.subr.bf16.mxu0 0
        %3121 = vmatpush1.bf16.xpose.msra.mxu0 0
        %3122 = vmatprep.subr.bf16.mxu0 0
        %3123 = vmatpush1.bf16.xpose.msra.mxu0 0
        %3124 = vmatprep.subr.bf16.mxu0 0
        %3125 = vmatpush1.bf16.xpose.msra.mxu0 %v3108
        %3126 = vmatprep.subr.bf16.mxu0 0
        %3127 = vmatpush2.bf16.xpose.msra.mxu0 0
        %3128 = vmatprep.subr.bf16.mxu0 0
        %3129 = vmatpush2.bf16.xpose.msra.mxu0 0
        %3130 = vmatprep.subr.bf16.mxu0 0
        %3131 = vmatpush2.bf16.xpose.msra.mxu0 0
        %3132 = vmatprep.subr.bf16.mxu0 0
        %3133 = vmatpush2.bf16.xpose.msra.mxu0 0
        %3134 = vmatprep.subr.bf16.mxu0 0
        %3135 = vmatpush2.bf16.xpose.msra.mxu0 0
        %3136 = vmatprep.subr.bf16.mxu0 0
        %3137 = vmatpush2.bf16.xpose.msra.mxu0 0
        %3138 = vmatprep.subr.bf16.mxu0 0
        %3139 = vmatpush2.bf16.xpose.msra.mxu0 0
        %3140 = vmatprep.subr.bf16.mxu0 0
        %3141 = vmatpush2.bf16.xpose.msra.mxu0 0
        %3142 = vmatprep.mubr.bf16.mxu0 0
        %3143 = vmatmul.mubr.bf16.gmra.mxu0 %v3105
        %v3144 = vpop.f32.mrf.mxu0
        %v3145 = vadd.f32 0.0, %v3144
        %v3146 = vpop.f32.mrf.mxu0
        %v3147 = vpop.f32.mrf.mxu0
        %v3148 = vpop.f32.mrf.mxu0
        %3149 = vdwg.mxu0
        %v3150 = vsel %vm877, %v3145, -inf
        %3151 = vmax.xlane.f32.xlu0 %v3150
        %v3152 = vpop.xlane.xlu0 %3151
        %v3153 = vsub.f32 %v3145, %v3152
        %v3154 = vmul.f32 %v3153, 1.442695
        %v3155 = vpow.pop %v3154
        %v3156 = vsel %vm877, %v3155, 0.0
        %3157 = vadd.xlane.f32.xlu0 %v3156
        %v3158 = vpop.xlane.xlu0 %3157
        %v3159 = vrcp.pop %v3158
        %v3160 = vmul.f32 %v3155, %v3159
        %v3161 = vpack.c.bf16 %v3160, %v3160
        %3162 = vrot.lane.b32.xlu0 %v2338, 68
        %v3163 = vpop.permute.xlu0 %3162
        %v3166 = vsel %vm877, %v3161, 0
        %3168 = vmatprep.subr.bf16.mxu0 0
        %3169 = vmatpush1.bf16.msra.mxu0 0
        %3170 = vmatprep.subr.bf16.mxu0 0
        %3171 = vmatpush1.bf16.msra.mxu0 0
        %3172 = vmatprep.subr.bf16.mxu0 0
        %3173 = vmatpush1.bf16.msra.mxu0 0
        %3174 = vmatprep.subr.bf16.mxu0 0
        %3175 = vmatpush1.bf16.msra.mxu0 0
        %3176 = vmatprep.subr.bf16.mxu0 0
        %3177 = vmatpush1.bf16.msra.mxu0 0
        %3178 = vmatprep.subr.bf16.mxu0 0
        %3179 = vmatpush1.bf16.msra.mxu0 0
        %3180 = vmatprep.subr.bf16.mxu0 0
        %3181 = vmatpush1.bf16.msra.mxu0 0
        %3182 = vmatprep.subr.bf16.mxu0 0
        %3183 = vmatpush1.bf16.msra.mxu0 %v3163
        %3184 = vmatprep.subr.bf16.mxu0 0
        %3185 = vmatpush2.bf16.msra.mxu0 0
        %3186 = vmatprep.subr.bf16.mxu0 0
        %3187 = vmatpush2.bf16.msra.mxu0 0
        %3188 = vmatprep.subr.bf16.mxu0 0
        %3189 = vmatpush2.bf16.msra.mxu0 0
        %3190 = vmatprep.subr.bf16.mxu0 0
        %3191 = vmatpush2.bf16.msra.mxu0 0
        %3192 = vmatprep.subr.bf16.mxu0 0
        %3193 = vmatpush2.bf16.msra.mxu0 0
        %3194 = vmatprep.subr.bf16.mxu0 0
        %3195 = vmatpush2.bf16.msra.mxu0 0
        %3196 = vmatprep.subr.bf16.mxu0 0
        %3197 = vmatpush2.bf16.msra.mxu0 0
        %3198 = vmatprep.subr.bf16.mxu0 0
        %3199 = vmatpush2.bf16.msra.mxu0 0
        %3200 = vmatprep.mubr.bf16.mxu0 0
        %3201 = vmatmul.mubr.bf16.gmra.mxu0 %v3166
        %v3202 = vpop.f32.mrf.mxu0
        %v3203 = vadd.f32 0.0, %v3202
        %v3204 = vpop.f32.mrf.mxu0
        %v3205 = vpop.f32.mrf.mxu0
        %v3206 = vpop.f32.mrf.mxu0
        %3207 = vdwg.mxu0
        %v3208 = vadd.f32 %v3099, %v3160
        %3210 = vrot.lane.b32.xlu0 %v2549, 4
        %v3211 = vpop.permute.xlu0 %3210
        %3214 = vrot.lane.b32.xlu0 %v2658, 8
        %v3215 = vpop.permute.xlu0 %3214
        %3218 = vrot.lane.b32.xlu0 %v2767, 12
        %v3219 = vpop.permute.xlu0 %3218
        %3222 = vrot.lane.b32.xlu0 %v2876, 16
        %v3223 = vpop.permute.xlu0 %3222
        %3226 = vrot.lane.b32.xlu0 %v2985, 20
        %v3227 = vpop.permute.xlu0 %3226
        %3230 = vrot.lane.b32.xlu0 %v3094, 24
        %v3231 = vpop.permute.xlu0 %3230
        %3234 = vrot.lane.b32.xlu0 %v3203, 28
        %v3235 = vpop.permute.xlu0 %3234
        %v3237 = vsel %vm829, %v2439, %v3211
        %v3238 = vsel %vm1853, %v3237, %v3215
        %v3239 = vsel %vm1856, %v3238, %v3219
        %v3240 = vsel %vm877, %v3239, %v3223
        %v3241 = vsel %vm1861, %v3240, %v3227
        %v3242 = vsel %vm1864, %v3241, %v3231
        %v3243 = vsel %vm1867, %v3242, %v3235
        %v3244 = vpack.c.bf16 %v3243, %v3243
        %v3246 = vlaneseq
        %v3247 = vshrl.u32 %v3246, 7
        %v3248 = vsub.s32 0, %v3247
        %v3249 = vrot.slane %v2220, %v3248
        %v3255 = vunpack.c.l.b16 %v2216
        %v3256 = vunpack.c.l.b16 %v2217
        %v3257 = vunpack.c.l.b16 %v2218
        %v3258 = vunpack.c.l.b16 %v2219
        %v3259 = vpack.c.b16 %v3256, %v3255
        %v3260 = vpack.c.b16 %v3258, %v3257
        %v3264 = vsel %vm780, %v3244, 0
        %3266 = vmatprep.subr.bf16.mxu0 0
        %3267 = vmatpush1.bf16.msra.mxu0 0
        %3268 = vmatprep.subr.bf16.mxu0 0
        %3269 = vmatpush1.bf16.msra.mxu0 0
        %3270 = vmatprep.subr.bf16.mxu0 0
        %3271 = vmatpush1.bf16.msra.mxu0 0
        %3272 = vmatprep.subr.bf16.mxu0 0
        %3273 = vmatpush1.bf16.msra.mxu0 0
        %3274 = vmatprep.subr.bf16.mxu0 0
        %3275 = vmatpush1.bf16.msra.mxu0 0
        %3276 = vmatprep.subr.bf16.mxu0 0
        %3277 = vmatpush1.bf16.msra.mxu0 0
        %3278 = vmatprep.subr.bf16.mxu0 0
        %3279 = vmatpush1.bf16.msra.mxu0 %v3260
        %3280 = vmatprep.subr.bf16.mxu0 0
        %3281 = vmatpush1.bf16.msra.mxu0 %v3259
        %3282 = vmatprep.subr.bf16.mxu0 0
        %3283 = vmatpush2.bf16.msra.mxu0 0
        %3284 = vmatprep.subr.bf16.mxu0 0
        %3285 = vmatpush2.bf16.msra.mxu0 0
        %3286 = vmatprep.subr.bf16.mxu0 0
        %3287 = vmatpush2.bf16.msra.mxu0 0
        %3288 = vmatprep.subr.bf16.mxu0 0
        %3289 = vmatpush2.bf16.msra.mxu0 0
        %3290 = vmatprep.subr.bf16.mxu0 0
        %3291 = vmatpush2.bf16.msra.mxu0 0
        %3292 = vmatprep.subr.bf16.mxu0 0
        %3293 = vmatpush2.bf16.msra.mxu0 0
        %3294 = vmatprep.subr.bf16.mxu0 0
        %3295 = vmatpush2.bf16.msra.mxu0 0
        %3296 = vmatprep.subr.bf16.mxu0 0
        %3297 = vmatpush2.bf16.msra.mxu0 0
        %3298 = vmatprep.mubr.bf16.mxu0 0
        %3299 = vmatmul.mubr.bf16.gmra.mxu0 %v3264
        %v3300 = vpop.f32.mrf.mxu0
        %v3301 = vadd.f32 %v3249, %v3300
        %v3302 = vpop.f32.mrf.mxu0
        %v3303 = vpop.f32.mrf.mxu0
        %v3304 = vpop.f32.mrf.mxu0
        %3305 = vdwg.mxu0
        %v3306 = vmul.f32 %v3208, 0.125
        %v3307 = vld [vmem:[#allocation13] sm:$0x1]
        %v3308 = vld [vmem:[#allocation14] sm:$0x1]
        %v3309 = vsel %vm780, %v3301, 0.0
        %3310 = vadd.xlane.f32.xlu0 %v3309
        %v3311 = vpop.xlane.xlu0 %3310
        %v3312 = vmul.f32 %v3311, %v1943
        %v3313 = vsub.f32 %v3301, %v3312
        %v3314 = vmul.f32 %v3313, %v3313
        %v3315 = vsel %vm780, %v3314, 0.0
        %3316 = vadd.xlane.f32.xlu0 %v3315
        %v3317 = vpop.xlane.xlu0 %3316
        %v3318 = vmul.f32 %v3317, %v1943
        %v3319 = vadd.f32 %v3318, 1e-05
        %v3320 = vrsqrt.pop %v3319
        %v3321 = vmul.f32 %v3313, %v3320
        %v3323 = vlaneseq
        %v3324 = vshrl.u32 %v3323, 7
        %v3325 = vsub.s32 0, %v3324
        %v3326 = vrot.slane %v3307, %v3325
        %v3328 = vmul.f32 %v3321, %v3326
        %v3330 = vlaneseq
        %v3331 = vshrl.u32 %v3330, 7
        %v3332 = vsub.s32 0, %v3331
        %v3333 = vrot.slane %v3308, %v3332
        %v3335 = vadd.f32 %v3328, %v3333
        %3336 = vst.msk [vmem:[%s727] sm:$0xff] %vm780, %v2209
        %3337 = vst.msk [vmem:[%s727 + $0x8] sm:$0xff] %vm780, %v2210
        %3338 = vst.msk [vmem:[%s734] sm:$0xff] %vm780, %v3335
        %3339 = vst.msk [vmem:[%s741] sm:$0xff] %vm877, %v3306
        %s3340 = sand.u32 %s434, 1
        %s3341 = scalar_lea.sflag [#allocation4], %s3340
        %s3342 = sand.u32 %s434, 1
        %s3343 = smul.addr %s3342, 16
        %s3344 = scalar_lea.vmem [#allocation16], %s3343
        %s3345 = sand.u32 %s43, 1
        %s3346 = scalar_lea.sflag [#allocation18], %s3345
        %s3347 = sand.u32 %s460, 1
        %s3348 = smul.addr %s3347, 8
        %s3349 = scalar_lea.vmem [#allocation17], %s3348
        %s3350 = sand.u32 %s43, 1
        %s3351 = scalar_lea.sflag [#allocation18], %s3350
        %s3352 = sand.u32 %s486, 1
        %s3353 = smul.addr %s3352, 8
        %s3354 = scalar_lea.vmem [#allocation19], %s3353
        // Predicated region
        $region125: #{boq_block_forward.3} parent=91 // pred_check
          %p3355 = pneg %p444
        $region126: #{boq_block_forward.3} parent=91 // pred_check_branch
          %3357 = sbr.rel (%p3355) target = $region128
        $region127: #{boq_block_forward.3} parent=91 // pred_region
          %s3359 = ssub.s32 256, 256
          %3360 = vsyncadd %s3341, %s3359
          %s3361 = smul.addr %s43, 2
          %s3362 = smul.addr %s3361, 128
          %s3363 = scalar_lea.hbm %s18, %s3362
          %s3364 = sshll.u32 %s3344, 4
          %s3365 = int_to_ptr.vmem [resolvable:$true] %s3364
          %3370 = dma.vmem_to_hbm [thread:$0]  %s3365, 256, %s3363, %s3341, 128, 128, 8
        $region128: #{boq_block_forward.3} parent=91 // pred_fallthru
          _
        // Predicated region
        $region129: #{boq_block_forward.3} parent=91 // pred_check
          %p3371 = pneg %p470
        $region130: #{boq_block_forward.3} parent=91 // pred_check_branch
          %3373 = sbr.rel (%p3371) target = $region132
        $region131: #{boq_block_forward.3} parent=91 // pred_region
          %s3375 = ssub.s32 128, 128
          %3376 = vsyncadd %s3346, %s3375
          %s3377 = smul.addr %s43, 128
          %s3378 = scalar_lea.hbm %s19, %s3377
          %s3380 = sshll.u32 %s3349, 4
          %s3381 = int_to_ptr.vmem [resolvable:$true] %s3380
          %3383 = dma.vmem_to_hbm [thread:$0]  %s3381, 128, %s3378, %s3346
        $region132: #{boq_block_forward.3} parent=91 // pred_fallthru
          _
        // Predicated region
        $region133: #{boq_block_forward.3} parent=91 // pred_check
          %p3384 = pneg %p496
        $region134: #{boq_block_forward.3} parent=91 // pred_check_branch
          %3386 = sbr.rel (%p3384) target = $region136
        $region135: #{boq_block_forward.3} parent=91 // pred_region
          %s3388 = ssub.s32 128, 128
          %3389 = vsyncadd %s3351, %s3388
          %s3390 = smul.addr %s43, 128
          %s3391 = scalar_lea.hbm %s20, %s3390
          %s3393 = sshll.u32 %s3354, 4
          %s3394 = int_to_ptr.vmem [resolvable:$true] %s3393
          %3396 = dma.vmem_to_hbm [thread:$0]  %s3394, 128, %s3391, %s3351
        $region136: #{boq_block_forward.3} parent=91 // pred_fallthru
          _
      $region92: #{boq_block_forward.3} parent=5 // pred_fallthru
        _
      %p3397 = scmp.le.s32.totalorder 2, %s38
      // Predicated region
      $region137: #{boq_block_forward.3} parent=5 // pred_check
        %p3398 = pneg %p3397
      $region138: #{boq_block_forward.3} parent=5 // pred_check_branch
        %3400 = sbr.rel (%p3398) target = $region140
      $region139: #{boq_block_forward.3} parent=5 // pred_region
        %s3401 = ssub.s32 %s38, 2
        // Predicated region
        $region141: #{boq_block_forward.3} parent=139 // pred_check
          %p3402 = pneg %p450
        $region142: #{boq_block_forward.3} parent=139 // pred_check_branch
          %3404 = sbr.rel (%p3402) target = $region144
        $region143: #{boq_block_forward.3} parent=139 // pred_region
          %s3405 = sand.u32 %s435, 1
          %s3406 = scalar_lea.sflag [#allocation4], %s3405
          %s3407 = sand.u32 %s435, 1
          %s3408 = smul.addr %s3407, 16
          %s3409 = scalar_lea.vmem [#allocation16], %s3408
          %3410 = dma.done %s3406, 256
        $region144: #{boq_block_forward.3} parent=139 // pred_fallthru
          _
        // Predicated region
        $region145: #{boq_block_forward.3} parent=139 // pred_check
          %p3411 = pneg %p476
        $region146: #{boq_block_forward.3} parent=139 // pred_check_branch
          %3413 = sbr.rel (%p3411) target = $region148
        $region147: #{boq_block_forward.3} parent=139 // pred_region
          %s3414 = sand.u32 %s44, 1
          %s3415 = scalar_lea.sflag [#allocation18], %s3414
          %s3416 = sand.u32 %s461, 1
          %s3417 = smul.addr %s3416, 8
          %s3418 = scalar_lea.vmem [#allocation17], %s3417
          %3419 = dma.done %s3415, 128
        $region148: #{boq_block_forward.3} parent=139 // pred_fallthru
          _
        // Predicated region
        $region149: #{boq_block_forward.3} parent=139 // pred_check
          %p3420 = pneg %p502
        $region150: #{boq_block_forward.3} parent=139 // pred_check_branch
          %3422 = sbr.rel (%p3420) target = $region152
        $region151: #{boq_block_forward.3} parent=139 // pred_region
          %s3423 = sand.u32 %s44, 1
          %s3424 = scalar_lea.sflag [#allocation18], %s3423
          %s3425 = sand.u32 %s487, 1
          %s3426 = smul.addr %s3425, 8
          %s3427 = scalar_lea.vmem [#allocation19], %s3426
          %3428 = dma.done %s3424, 128
        $region152: #{boq_block_forward.3} parent=139 // pred_fallthru
          _
      $region140: #{boq_block_forward.3} parent=5 // pred_fallthru
        _
    $region6: #{boq_block_forward.3} parent=1 // loop_footer
      %s42 = sadd.s32 1, %s38
    $region7: #{boq_block_forward.3} parent=1 // loop_footer_branch
      %37 = sbr.rel target = $region3
    $region8: #{boq_block_forward.3} parent=1 // loop_exit
      _
    %3429 = vsyncpa [#allocation3], 1
    %s3430 = scalar_lea.sflag [#allocation3], 1
    %3431 = vsyncpa %s3430, 1
    %3432 = vsyncpa [#allocation6], 1
    %3433 = vsyncpa [#allocation9], 1
    %3434 = vsyncpa [#allocation12], 1
    %3435 = vsyncpa [#allocation15], 1
    %3436 = vsyncpa [#allocation4], 1
    %s3437 = scalar_lea.sflag [#allocation4], 1
    %3438 = vsyncpa %s3437, 1
    %3439 = vsyncpa [#allocation18], 1
    %s3440 = scalar_lea.sflag [#allocation18], 1
    %3441 = vsyncpa %s3440, 1

</llo_original>
